<compile_context>
chip_gen: v7x
topology: tpu7x:2x2x1
jax: 0.10.0
libtpu: 0.0.40
codegen_flags: <defaults>
</compile_context>

<pallas_src>
import functools

import jax
import jax.numpy as jnp
from jax.experimental import pallas as pl
from jax.experimental.pallas import tpu as pltpu

_BN_EPS = 1e-5


def _round_up(x, m):
    return (x + m - 1) // m * m


# --------------------------------------------------------------------------
# Kernels
# --------------------------------------------------------------------------
def _masked_rows(vals, n_valid, tile_n):
    """Zero rows whose global index >= n_valid (ragged last tile). NaN-safe
    (jnp.where selects, so garbage in the out-of-bounds region cannot leak)."""
    row = (pl.program_id(0) * tile_n
           + jax.lax.broadcasted_iota(jnp.int32, (vals.shape[0], 1), 0))
    return jnp.where(row < n_valid, vals, 0.0)


def _l1_kernel(x_ref, w_ref, y_ref, sum_ref, ssq_ref, *, n_valid, tile_n, ragged):
    """Layer 1: y = x @ W1 (bf16 MXU, f32 acc); accumulate per-feature sum /
    sum-of-squares across the (arbitrary) N grid axis; write y back as bf16.

    The Linear bias is intentionally omitted: training-mode BatchNorm subtracts
    the batch mean, so the bias cancels exactly."""
    @pl.when(pl.program_id(0) == 0)
    def _init():
        sum_ref[...] = jnp.zeros_like(sum_ref)
        ssq_ref[...] = jnp.zeros_like(ssq_ref)

    x = x_ref[...]
    if ragged:  # static: mask only emitted when N % tile_n != 0
        x = _masked_rows(x, n_valid, tile_n)      # -> zero y rows, clean stats
    y = jnp.dot(x.astype(jnp.bfloat16), w_ref[...],
                preferred_element_type=jnp.float32)
    sum_ref[...] += jnp.sum(y, axis=0, keepdims=True)
    ssq_ref[...] += jnp.sum(y * y, axis=0, keepdims=True)
    y_ref[...] = y.astype(y_ref.dtype)            # bf16 store (halves HBM traffic)


def _mid_kernel(yprev_ref, s_ref, t_ref, w_ref, ynext_ref, sum_ref, ssq_ref,
                *, n_valid, tile_n, ragged):
    """h = relu(y_prev*scale + shift) (folded BN, f32); y_next = h @ W (bf16 MXU);
    accumulate batch stats of y_next; store y_next as bf16."""
    @pl.when(pl.program_id(0) == 0)
    def _init():
        sum_ref[...] = jnp.zeros_like(sum_ref)
        ssq_ref[...] = jnp.zeros_like(ssq_ref)

    h = jnp.maximum(yprev_ref[...].astype(jnp.float32) * s_ref[...] + t_ref[...],
                    0.0)
    if ragged:
        h = _masked_rows(h, n_valid, tile_n)      # padded rows must not pollute stats
    y = jnp.dot(h.astype(jnp.bfloat16), w_ref[...],
                preferred_element_type=jnp.float32)
    sum_ref[...] += jnp.sum(y, axis=0, keepdims=True)
    ssq_ref[...] += jnp.sum(y * y, axis=0, keepdims=True)
    ynext_ref[...] = y.astype(ynext_ref.dtype)


def _stats_only_kernel(yprev_ref, s_ref, t_ref, w_ref, sum_ref, ssq_ref,
                       *, n_valid, tile_n, ragged):
    """Layer-3 statistics pass: identical to _mid_kernel but with NO activation
    write-back (the final kernel recomputes h2 @ W3 instead of reading y3)."""
    @pl.when(pl.program_id(0) == 0)
    def _init():
        sum_ref[...] = jnp.zeros_like(sum_ref)
        ssq_ref[...] = jnp.zeros_like(ssq_ref)

    h = jnp.maximum(yprev_ref[...].astype(jnp.float32) * s_ref[...] + t_ref[...],
                    0.0)
    if ragged:
        h = _masked_rows(h, n_valid, tile_n)
    y = jnp.dot(h.astype(jnp.bfloat16), w_ref[...],
                preferred_element_type=jnp.float32)
    sum_ref[...] += jnp.sum(y, axis=0, keepdims=True)
    ssq_ref[...] += jnp.sum(y * y, axis=0, keepdims=True)


def _final_kernel(y2_ref, s2_ref, t2_ref, w3_ref, s3_ref, t3_ref, o_ref):
    """out = relu(BN3(h2 @ W3)) with h2 = relu(BN2(y2)).  Pure per-row work, so
    the grid axis is 'parallel' (megacore-shardable).  Out-of-range rows of a
    ragged last tile are simply dropped by the partial output write."""
    h2 = jnp.maximum(y2_ref[...].astype(jnp.float32) * s2_ref[...] + t2_ref[...],
                     0.0)
    y3 = jnp.dot(h2.astype(jnp.bfloat16), w3_ref[...],
                 preferred_element_type=jnp.float32)
    o_ref[...] = jnp.maximum(y3 * s3_ref[...] + t3_ref[...], 0.0)


# --------------------------------------------------------------------------
# Wrapper
# --------------------------------------------------------------------------
def _fold_bn(ysum, ysumsq, gamma, beta, n_valid):
    """Fold batch sums into one FMA: scale = g*rsqrt(var+eps), shift = b - mean*scale.
    NOTE: single-pass variance (E[y^2]-mean^2); fine for activation-scale data,
    revisit (shifted sums) for extreme N or large mean/std ratios."""
    mean = ysum / n_valid
    var = jnp.maximum(ysumsq / n_valid - mean * mean, 0.0)   # biased (train) var
    scale = gamma.reshape(1, -1) * jax.lax.rsqrt(var + _BN_EPS)
    shift = beta.reshape(1, -1) - mean * scale
    return scale, shift


@functools.partial(jax.jit, static_argnames=("tile_n",))
def innernet_forward(x, params, *, tile_n=8192):
    """x: [N, 2*n_node_features] float32. Returns [N, layer_width] float32."""
    n, in1 = x.shape
    h_w = params["w1"].shape[1]

    tile_n = _round_up(max(8, min(tile_n, _round_up(n, 8))), 8)
    grid = (pl.cdiv(n, tile_n),)
    ragged = (n % tile_n) != 0

    w1 = params["w1"].astype(jnp.bfloat16)   # tiny; VMEM-resident via const index_map
    w2 = params["w2"].astype(jnp.bfloat16)
    w3 = params["w3"].astype(jnp.bfloat16)

    def row_spec(feat):
        return pl.BlockSpec((tile_n, feat), lambda i: (i, 0))

    def const_spec(shape):
        return pl.BlockSpec(shape, lambda i: (0, 0))

    stats_specs = (const_spec((1, h_w)), const_spec((1, h_w)))
    stats_shapes = (jax.ShapeDtypeStruct((1, h_w), jnp.float32),
                    jax.ShapeDtypeStruct((1, h_w), jnp.float32))
    act_shape = jax.ShapeDtypeStruct((n, h_w), jnp.bfloat16)

    arbitrary = pltpu.CompilerParams(dimension_semantics=("arbitrary",))
    parallel = pltpu.CompilerParams(dimension_semantics=("parallel",))
    static = dict(n_valid=n, tile_n=tile_n, ragged=ragged)

    # ---- pass 1: y1 = x @ W1 (bf16 out) + batch stats of y1 -----------------
    y1, s1, ss1 = pl.pallas_call(
        functools.partial(_l1_kernel, **static),
        grid=grid,
        in_specs=[row_spec(in1), const_spec((in1, h_w))],
        out_specs=(row_spec(h_w),) + stats_specs,
        out_shape=(act_shape,) + stats_shapes,
        compiler_params=arbitrary,
        cost_estimate=pl.CostEstimate(
            flops=2 * n * in1 * h_w + 4 * n * h_w, transcendentals=0,
            bytes_accessed=n * in1 * 4 + in1 * h_w * 2 + n * h_w * 2 + 2 * h_w * 4),
    )(x, w1)
    scale1, shift1 = _fold_bn(s1, ss1, params["g1"], params["bt1"], n)

    # ---- pass 2: h1 = relu(BN1(y1)); y2 = h1 @ W2 (bf16 out) + stats --------
    y2, s2, ss2 = pl.pallas_call(
        functools.partial(_mid_kernel, **static),
        grid=grid,
        in_specs=[row_spec(h_w), const_spec((1, h_w)), const_spec((1, h_w)),
                  const_spec((h_w, h_w))],
        out_specs=(row_spec(h_w),) + stats_specs,
        out_shape=(act_shape,) + stats_shapes,
        compiler_params=arbitrary,
        cost_estimate=pl.CostEstimate(
            flops=2 * n * h_w * h_w + 8 * n * h_w, transcendentals=0,
            bytes_accessed=2 * n * h_w * 2 + h_w * h_w * 2 + 6 * h_w * 4),
    )(y1, scale1, shift1, w2)
    scale2, shift2 = _fold_bn(s2, ss2, params["g2"], params["bt2"], n)

    # ---- pass 3: stats of y3 = relu(BN2(y2)) @ W3, NO y3 write-back ---------
    s3, ss3 = pl.pallas_call(
        functools.partial(_stats_only_kernel, **static),
        grid=grid,
        in_specs=[row_spec(h_w), const_spec((1, h_w)), const_spec((1, h_w)),
                  const_spec((h_w, h_w))],
        out_specs=stats_specs,
        out_shape=stats_shapes,
        compiler_params=arbitrary,
        cost_estimate=pl.CostEstimate(
            flops=2 * n * h_w * h_w + 8 * n * h_w, transcendentals=0,
            bytes_accessed=n * h_w * 2 + h_w * h_w * 2 + 6 * h_w * 4),
    )(y2, scale2, shift2, w3)
    scale3, shift3 = _fold_bn(s3, ss3, params["g3"], params["bt3"], n)

    # ---- pass 4: out = relu(BN3(relu(BN2(y2)) @ W3))  (megacore-parallel) ---
    out = pl.pallas_call(
        _final_kernel,
        grid=grid,
        in_specs=[row_spec(h_w), const_spec((1, h_w)), const_spec((1, h_w)),
                  const_spec((h_w, h_w)), const_spec((1, h_w)), const_spec((1, h_w))],
        out_specs=row_spec(h_w),
        out_shape=jax.ShapeDtypeStruct((n, h_w), jnp.float32),
        compiler_params=parallel,
        cost_estimate=pl.CostEstimate(
            flops=2 * n * h_w * h_w + 8 * n * h_w, transcendentals=0,
            bytes_accessed=n * h_w * 2 + n * h_w * 4 + h_w * h_w * 2 + 4 * h_w * 4),
    )(y2, scale2, shift2, w3, scale3, shift3)

    return out


# --------------------------------------------------------------------------
# Synthetic parameters + references
# --------------------------------------------------------------------------
def make_params(key, n_node_features, layer_width):
    """PyTorch-equivalent shapes; Linear weights stored pre-transposed [in, out]."""
    params = {}
    in_sizes = [2 * n_node_features, layer_width, layer_width]
    for i, insize in enumerate(in_sizes, start=1):
        key, k_w, k_b = jax.random.split(key, 3)
        bound = 1.0 / jnp.sqrt(insize)
        params[f"w{i}"] = jax.random.uniform(
            k_w, (insize, layer_width), jnp.float32, -bound, bound)
        params[f"b{i}"] = jax.random.uniform(      # used by f32 ref only (cancels in BN)
            k_b, (layer_width,), jnp.float32, -bound, bound)
        params[f"g{i}"] = 1.0 + 0.005 * jnp.arange(layer_width, dtype=jnp.float32)
        params[f"bt{i}"] = 0.05 * jnp.ones((layer_width,), jnp.float32)
    return params


def innernet_ref(x, params):
    """PyTorch-faithful f32: 3x [Linear(+bias) -> BatchNorm1d(train) -> ReLU]."""
    h = x
    for i in (1, 2, 3):
        y = jnp.dot(h, params[f"w{i}"]) + params[f"b{i}"]
        mean = jnp.mean(y, axis=0, keepdims=True)
        var = jnp.mean((y - mean) ** 2, axis=0, keepdims=True)
        y = (y - mean) / jnp.sqrt(var + _BN_EPS)
        y = y * params[f"g{i}"] + params[f"bt{i}"]
        h = jnp.maximum(y, 0.0)
    return h


def innernet_matched_ref(x, params):
    """Mirror of the kernel numerics: bf16 matmul operands (no bias), stats from
    the f32 matmul result, bf16-quantized intermediate activations, BN folded
    into one f32 FMA with single-pass variance."""
    h = x
    for i in (1, 2, 3):
        y = jnp.dot(h.astype(jnp.bfloat16), params[f"w{i}"].astype(jnp.bfloat16),
                    preferred_element_type=jnp.float32)
        mean = jnp.mean(y, axis=0, keepdims=True)
        var = jnp.maximum(jnp.mean(y * y, axis=0, keepdims=True) - mean * mean, 0.0)
        scale = params[f"g{i}"].reshape(1, -1) * jax.lax.rsqrt(var + _BN_EPS)
        shift = params[f"bt{i}"].reshape(1, -1) - mean * scale
        if i < 3:
            y = y.astype(jnp.bfloat16).astype(jnp.float32)   # bf16 HBM round trip
        h = jnp.maximum(y * scale + shift, 0.0)
    return h


if __name__ == "__main__":
    # EdgeConvNet defaults: first EdgeConv wraps InnerNet(16, 64)
    #   -> Linear in = 2*16 = 32, layer_width = 64.
    n_node_features = 16
    layer_width = 64
    n_edges = 1000            # NOT a multiple of the tile -> exercises ragged masking

    key = jax.random.PRNGKey(0)
    key, k_x = jax.random.split(key)
    x = jax.random.normal(k_x, (n_edges, 2 * n_node_features), dtype=jnp.float32)
    params = make_params(key, n_node_features, layer_width)

    out = innernet_forward(x, params, tile_n=256)    # 4 row tiles -> exercises the grid
    out = jax.block_until_ready(out)
    assert out.shape == (n_edges, layer_width)

    # Matched-precision reference: tight check of the tiled two-pass BN,
    # bias-cancellation, bf16 intermediates, ragged masking, and fused final pass.
    ref_m = innernet_matched_ref(x, params)
    err_m = float(jnp.max(jnp.abs(out - ref_m)))
    assert jnp.allclose(out, ref_m, atol=2e-3, rtol=2e-3), f"matched-ref err {err_m}"

    # Full-f32 PyTorch-faithful reference: loose check bounding bf16 error.
    ref_f32 = innernet_ref(x, params)
    err_f32 = float(jnp.max(jnp.abs(out - ref_f32)))
    assert jnp.allclose(out, ref_f32, atol=2e-1, rtol=2e-1), f"f32-ref err {err_f32}"

    print("KERNEL_OK")
</pallas_src>

<mosaic_0001>
module attributes {stable_mosaic.version = 11 : i64} {
  func.func @_l1_kernel(%arg0: i32, %arg1: memref<256x32xf32, #tpu.memory_space<vmem>>, %arg2: memref<32x64xbf16, #tpu.memory_space<vmem>>, %arg3: memref<256x64xbf16, #tpu.memory_space<vmem>>, %arg4: memref<1x64xf32, #tpu.memory_space<vmem>>, %arg5: memref<1x64xf32, #tpu.memory_space<vmem>>) attributes {dimension_semantics = [#tpu.dimension_semantics<arbitrary>], iteration_bounds = array<i64: 4>, scalar_prefetch = 0 : i64, scratch_operands = 0 : i64, tpu.core_type = #tpu.core_type<tc>, window_params = [{transform_indices = @transform_0, window_bounds = array<i64: 256, 32>}, {pipeline_mode = #tpu.pipeline_mode<synchronous>, transform_indices = @transform_1, window_bounds = array<i64: 32, 64>}, {transform_indices = @transform_2, window_bounds = array<i64: 256, 64>}, {pipeline_mode = #tpu.pipeline_mode<synchronous>, transform_indices = @transform_3, window_bounds = array<i64: 1, 64>}, {pipeline_mode = #tpu.pipeline_mode<synchronous>, transform_indices = @transform_4, window_bounds = array<i64: 1, 64>}]} {
    %c0_i32 = arith.constant 0 : i32
    %0 = arith.cmpi eq, %arg0, %c0_i32 : i32
    %1 = arith.extui %0 : i1 to i32
    %c0_i32_0 = arith.constant 0 : i32
    %2 = arith.cmpi ne, %1, %c0_i32_0 : i32
    scf.if %2 {
      %cst_17 = arith.constant 0.000000e+00 : f32
      %30 = vector.broadcast %cst_17 : f32 to vector<1x64xf32>
      %c0_18 = arith.constant 0 : index
      %c0_19 = arith.constant 0 : index
      %31 = vector.load %arg4[%c0_18, %c0_19] : memref<1x64xf32, #tpu.memory_space<vmem>>, vector<1x64xf32>
      tpu.vector_store %arg4[%c0_18, %c0_19], %30 {strides = array<i32>} : memref<1x64xf32, #tpu.memory_space<vmem>>, vector<1x64xf32>,
      %cst_20 = arith.constant 0.000000e+00 : f32
      %32 = vector.broadcast %cst_20 : f32 to vector<1x64xf32>
      %c0_21 = arith.constant 0 : index
      %c0_22 = arith.constant 0 : index
      %33 = vector.load %arg5[%c0_21, %c0_22] : memref<1x64xf32, #tpu.memory_space<vmem>>, vector<1x64xf32>
      tpu.vector_store %arg5[%c0_21, %c0_22], %32 {strides = array<i32>} : memref<1x64xf32, #tpu.memory_space<vmem>>, vector<1x64xf32>,
    } else {
    }
    %c0 = arith.constant 0 : index
    %c0_1 = arith.constant 0 : index
    %3 = vector.load %arg1[%c0, %c0_1] : memref<256x32xf32, #tpu.memory_space<vmem>>, vector<256x32xf32>
    %c256_i32 = arith.constant 256 : i32
    %4 = arith.muli %arg0, %c256_i32 : i32
    %5 = tpu.iota {dimensions = array<i32: 0>} : vector<256x1xi32>
    %6 = vector.broadcast %4 : i32 to vector<256x1xi32>
    %7 = arith.addi %6, %5 : vector<256x1xi32>
    %c1000_i32 = arith.constant 1000 : i32
    %8 = vector.broadcast %c1000_i32 : i32 to vector<256x1xi32>
    %9 = arith.cmpi slt, %7, %8 : vector<256x1xi32>
    %cst = arith.constant 0.000000e+00 : f32
    %10 = vector.shape_cast %9 : vector<256x1xi1> to vector<256x1xi1>
    %11 = vector.broadcast %10 : vector<256x1xi1> to vector<256x32xi1>
    %12 = vector.broadcast %cst : f32 to vector<256x32xf32>
    %13 = arith.select %11, %3, %12 : vector<256x32xi1>, vector<256x32xf32>
    %14 = arith.truncf %13 : vector<256x32xf32> to vector<256x32xbf16>
    %c0_2 = arith.constant 0 : index
    %c0_3 = arith.constant 0 : index
    %15 = vector.load %arg2[%c0_2, %c0_3] : memref<32x64xbf16, #tpu.memory_space<vmem>>, vector<32x64xbf16>
    %cst_4 = arith.constant dense<0.000000e+00> : vector<256x64xf32>
    %16 = tpu.matmul %14, %15, %cst_4 {dimension_numbers = #tpu.dot_dimension_numbers<[1], [0], [0], [1], [0, 0, 1, 1], [], []>} : vector<256x32xbf16>, vector<32x64xbf16>, vector<256x64xf32> -> vector<256x64xf32>
    %c0_5 = arith.constant 0 : index
    %c0_6 = arith.constant 0 : index
    %17 = vector.load %arg4[%c0_5, %c0_6] : memref<1x64xf32, #tpu.memory_space<vmem>>, vector<1x64xf32>
    %cst_7 = arith.constant dense<0.000000e+00> : vector<64xf32>
    %18 = vector.multi_reduction <add>, %16, %cst_7 [0] : vector<256x64xf32> to vector<64xf32>
    %19 = vector.shape_cast %18 : vector<64xf32> to vector<1x64xf32>
    %20 = arith.addf %17, %19 : vector<1x64xf32>
    %c0_8 = arith.constant 0 : index
    %c0_9 = arith.constant 0 : index
    %21 = vector.load %arg4[%c0_8, %c0_9] : memref<1x64xf32, #tpu.memory_space<vmem>>, vector<1x64xf32>
    tpu.vector_store %arg4[%c0_8, %c0_9], %20 {strides = array<i32>} : memref<1x64xf32, #tpu.memory_space<vmem>>, vector<1x64xf32>,
    %c0_10 = arith.constant 0 : index
    %c0_11 = arith.constant 0 : index
    %22 = vector.load %arg5[%c0_10, %c0_11] : memref<1x64xf32, #tpu.memory_space<vmem>>, vector<1x64xf32>
    %23 = arith.mulf %16, %16 : vector<256x64xf32>
    %cst_12 = arith.constant dense<0.000000e+00> : vector<64xf32>
    %24 = vector.multi_reduction <add>, %23, %cst_12 [0] : vector<256x64xf32> to vector<64xf32>
    %25 = vector.shape_cast %24 : vector<64xf32> to vector<1x64xf32>
    %26 = arith.addf %22, %25 : vector<1x64xf32>
    %c0_13 = arith.constant 0 : index
    %c0_14 = arith.constant 0 : index
    %27 = vector.load %arg5[%c0_13, %c0_14] : memref<1x64xf32, #tpu.memory_space<vmem>>, vector<1x64xf32>
    tpu.vector_store %arg5[%c0_13, %c0_14], %26 {strides = array<i32>} : memref<1x64xf32, #tpu.memory_space<vmem>>, vector<1x64xf32>,
    %28 = arith.truncf %16 : vector<256x64xf32> to vector<256x64xbf16>
    %c0_15 = arith.constant 0 : index
    %c0_16 = arith.constant 0 : index
    %29 = vector.load %arg3[%c0_15, %c0_16] : memref<256x64xbf16, #tpu.memory_space<vmem>>, vector<256x64xbf16>
    tpu.vector_store %arg3[%c0_15, %c0_16], %28 {strides = array<i32>} : memref<256x64xbf16, #tpu.memory_space<vmem>>, vector<256x64xbf16>,
    return
  }
  func.func @transform_0(%arg0: i32) -> (i32, i32) {
    %c0_i32 = arith.constant 0 : i32
    %c0_i32_0 = arith.constant 0 : i32
    return %arg0, %c0_i32 : i32, i32
  }
  func.func @transform_1(%arg0: i32) -> (i32, i32) {
    %c0_i32 = arith.constant 0 : i32
    %c0_i32_0 = arith.constant 0 : i32
    %c0_i32_1 = arith.constant 0 : i32
    return %c0_i32, %c0_i32_0 : i32, i32
  }
  func.func @transform_2(%arg0: i32) -> (i32, i32) {
    %c0_i32 = arith.constant 0 : i32
    %c0_i32_0 = arith.constant 0 : i32
    return %arg0, %c0_i32 : i32, i32
  }
  func.func @transform_3(%arg0: i32) -> (i32, i32) {
    %c0_i32 = arith.constant 0 : i32
    %c0_i32_0 = arith.constant 0 : i32
    %c0_i32_1 = arith.constant 0 : i32
    return %c0_i32, %c0_i32_0 : i32, i32
  }
  func.func @transform_4(%arg0: i32) -> (i32, i32) {
    %c0_i32 = arith.constant 0 : i32
    %c0_i32_0 = arith.constant 0 : i32
    %c0_i32_1 = arith.constant 0 : i32
    return %c0_i32, %c0_i32_0 : i32, i32
  }
}

module attributes {stable_mosaic.version = 11 : i64} {
  func.func @_final_kernel(%arg0: i32, %arg1: memref<256x64xbf16, #tpu.memory_space<vmem>>, %arg2: memref<1x64xf32, #tpu.memory_space<vmem>>, %arg3: memref<1x64xf32, #tpu.memory_space<vmem>>, %arg4: memref<64x64xbf16, #tpu.memory_space<vmem>>, %arg5: memref<1x64xf32, #tpu.memory_space<vmem>>, %arg6: memref<1x64xf32, #tpu.memory_space<vmem>>, %arg7: memref<256x64xf32, #tpu.memory_space<vmem>>) attributes {dimension_semantics = [#tpu.dimension_semantics<parallel>], iteration_bounds = array<i64: 4>, scalar_prefetch = 0 : i64, scratch_operands = 0 : i64, tpu.core_type = #tpu.core_type<tc>, window_params = [{transform_indices = @transform_0, window_bounds = array<i64: 256, 64>}, {pipeline_mode = #tpu.pipeline_mode<synchronous>, transform_indices = @transform_1, window_bounds = array<i64: 1, 64>}, {pipeline_mode = #tpu.pipeline_mode<synchronous>, transform_indices = @transform_2, window_bounds = array<i64: 1, 64>}, {pipeline_mode = #tpu.pipeline_mode<synchronous>, transform_indices = @transform_3, window_bounds = array<i64: 64, 64>}, {pipeline_mode = #tpu.pipeline_mode<synchronous>, transform_indices = @transform_4, window_bounds = array<i64: 1, 64>}, {pipeline_mode = #tpu.pipeline_mode<synchronous>, transform_indices = @transform_5, window_bounds = array<i64: 1, 64>}, {transform_indices = @transform_6, window_bounds = array<i64: 256, 64>}]} {
    %c0 = arith.constant 0 : index
    %c0_0 = arith.constant 0 : index
    %0 = vector.load %arg1[%c0, %c0_0] : memref<256x64xbf16, #tpu.memory_space<vmem>>, vector<256x64xbf16>
    %1 = arith.extf %0 : vector<256x64xbf16> to vector<256x64xf32>
    %c0_1 = arith.constant 0 : index
    %c0_2 = arith.constant 0 : index
    %2 = vector.load %arg2[%c0_1, %c0_2] : memref<1x64xf32, #tpu.memory_space<vmem>>, vector<1x64xf32>
    %3 = vector.broadcast %2 : vector<1x64xf32> to vector<256x64xf32>
    %4 = arith.mulf %1, %3 : vector<256x64xf32>
    %c0_3 = arith.constant 0 : index
    %c0_4 = arith.constant 0 : index
    %5 = vector.load %arg3[%c0_3, %c0_4] : memref<1x64xf32, #tpu.memory_space<vmem>>, vector<1x64xf32>
    %6 = vector.broadcast %5 : vector<1x64xf32> to vector<256x64xf32>
    %7 = arith.addf %4, %6 : vector<256x64xf32>
    %cst = arith.constant 0.000000e+00 : f32
    %8 = vector.broadcast %cst : f32 to vector<256x64xf32>
    %9 = arith.maximumf %7, %8 : vector<256x64xf32>
    %10 = arith.truncf %9 : vector<256x64xf32> to vector<256x64xbf16>
    %c0_5 = arith.constant 0 : index
    %c0_6 = arith.constant 0 : index
    %11 = vector.load %arg4[%c0_5, %c0_6] : memref<64x64xbf16, #tpu.memory_space<vmem>>, vector<64x64xbf16>
    %cst_7 = arith.constant dense<0.000000e+00> : vector<256x64xf32>
    %12 = tpu.matmul %10, %11, %cst_7 {dimension_numbers = #tpu.dot_dimension_numbers<[1], [0], [0], [1], [0, 0, 1, 1], [], []>} : vector<256x64xbf16>, vector<64x64xbf16>, vector<256x64xf32> -> vector<256x64xf32>
    %c0_8 = arith.constant 0 : index
    %c0_9 = arith.constant 0 : index
    %13 = vector.load %arg5[%c0_8, %c0_9] : memref<1x64xf32, #tpu.memory_space<vmem>>, vector<1x64xf32>
    %14 = vector.broadcast %13 : vector<1x64xf32> to vector<256x64xf32>
    %15 = arith.mulf %12, %14 : vector<256x64xf32>
    %c0_10 = arith.constant 0 : index
    %c0_11 = arith.constant 0 : index
    %16 = vector.load %arg6[%c0_10, %c0_11] : memref<1x64xf32, #tpu.memory_space<vmem>>, vector<1x64xf32>
    %17 = vector.broadcast %16 : vector<1x64xf32> to vector<256x64xf32>
    %18 = arith.addf %15, %17 : vector<256x64xf32>
    %cst_12 = arith.constant 0.000000e+00 : f32
    %19 = vector.broadcast %cst_12 : f32 to vector<256x64xf32>
    %20 = arith.maximumf %18, %19 : vector<256x64xf32>
    %c0_13 = arith.constant 0 : index
    %c0_14 = arith.constant 0 : index
    %21 = vector.load %arg7[%c0_13, %c0_14] : memref<256x64xf32, #tpu.memory_space<vmem>>, vector<256x64xf32>
    tpu.vector_store %arg7[%c0_13, %c0_14], %20 {strides = array<i32>} : memref<256x64xf32, #tpu.memory_space<vmem>>, vector<256x64xf32>,
    return
  }
  func.func @transform_0(%arg0: i32) -> (i32, i32) {
    %c0_i32 = arith.constant 0 : i32
    %c0_i32_0 = arith.constant 0 : i32
    return %arg0, %c0_i32 : i32, i32
  }
  func.func @transform_1(%arg0: i32) -> (i32, i32) {
    %c0_i32 = arith.constant 0 : i32
    %c0_i32_0 = arith.constant 0 : i32
    %c0_i32_1 = arith.constant 0 : i32
    return %c0_i32, %c0_i32_0 : i32, i32
  }
  func.func @transform_2(%arg0: i32) -> (i32, i32) {
    %c0_i32 = arith.constant 0 : i32
    %c0_i32_0 = arith.constant 0 : i32
    %c0_i32_1 = arith.constant 0 : i32
    return %c0_i32, %c0_i32_0 : i32, i32
  }
  func.func @transform_3(%arg0: i32) -> (i32, i32) {
    %c0_i32 = arith.constant 0 : i32
    %c0_i32_0 = arith.constant 0 : i32
    %c0_i32_1 = arith.constant 0 : i32
    return %c0_i32, %c0_i32_0 : i32, i32
  }
  func.func @transform_4(%arg0: i32) -> (i32, i32) {
    %c0_i32 = arith.constant 0 : i32
    %c0_i32_0 = arith.constant 0 : i32
    %c0_i32_1 = arith.constant 0 : i32
    return %c0_i32, %c0_i32_0 : i32, i32
  }
  func.func @transform_5(%arg0: i32) -> (i32, i32) {
    %c0_i32 = arith.constant 0 : i32
    %c0_i32_0 = arith.constant 0 : i32
    %c0_i32_1 = arith.constant 0 : i32
    return %c0_i32, %c0_i32_0 : i32, i32
  }
  func.func @transform_6(%arg0: i32) -> (i32, i32) {
    %c0_i32 = arith.constant 0 : i32
    %c0_i32_0 = arith.constant 0 : i32
    return %arg0, %c0_i32 : i32, i32
  }
}

module attributes {stable_mosaic.version = 11 : i64} {
  func.func @_mid_kernel(%arg0: i32, %arg1: memref<256x64xbf16, #tpu.memory_space<vmem>>, %arg2: memref<1x64xf32, #tpu.memory_space<vmem>>, %arg3: memref<1x64xf32, #tpu.memory_space<vmem>>, %arg4: memref<64x64xbf16, #tpu.memory_space<vmem>>, %arg5: memref<256x64xbf16, #tpu.memory_space<vmem>>, %arg6: memref<1x64xf32, #tpu.memory_space<vmem>>, %arg7: memref<1x64xf32, #tpu.memory_space<vmem>>) attributes {dimension_semantics = [#tpu.dimension_semantics<arbitrary>], iteration_bounds = array<i64: 4>, scalar_prefetch = 0 : i64, scratch_operands = 0 : i64, tpu.core_type = #tpu.core_type<tc>, window_params = [{transform_indices = @transform_0, window_bounds = array<i64: 256, 64>}, {pipeline_mode = #tpu.pipeline_mode<synchronous>, transform_indices = @transform_1, window_bounds = array<i64: 1, 64>}, {pipeline_mode = #tpu.pipeline_mode<synchronous>, transform_indices = @transform_2, window_bounds = array<i64: 1, 64>}, {pipeline_mode = #tpu.pipeline_mode<synchronous>, transform_indices = @transform_3, window_bounds = array<i64: 64, 64>}, {transform_indices = @transform_4, window_bounds = array<i64: 256, 64>}, {pipeline_mode = #tpu.pipeline_mode<synchronous>, transform_indices = @transform_5, window_bounds = array<i64: 1, 64>}, {pipeline_mode = #tpu.pipeline_mode<synchronous>, transform_indices = @transform_6, window_bounds = array<i64: 1, 64>}]} {
    %c0_i32 = arith.constant 0 : i32
    %0 = arith.cmpi eq, %arg0, %c0_i32 : i32
    %1 = arith.extui %0 : i1 to i32
    %c0_i32_0 = arith.constant 0 : i32
    %2 = arith.cmpi ne, %1, %c0_i32_0 : i32
    scf.if %2 {
      %cst_22 = arith.constant 0.000000e+00 : f32
      %39 = vector.broadcast %cst_22 : f32 to vector<1x64xf32>
      %c0_23 = arith.constant 0 : index
      %c0_24 = arith.constant 0 : index
      %40 = vector.load %arg6[%c0_23, %c0_24] : memref<1x64xf32, #tpu.memory_space<vmem>>, vector<1x64xf32>
      tpu.vector_store %arg6[%c0_23, %c0_24], %39 {strides = array<i32>} : memref<1x64xf32, #tpu.memory_space<vmem>>, vector<1x64xf32>,
      %cst_25 = arith.constant 0.000000e+00 : f32
      %41 = vector.broadcast %cst_25 : f32 to vector<1x64xf32>
      %c0_26 = arith.constant 0 : index
      %c0_27 = arith.constant 0 : index
      %42 = vector.load %arg7[%c0_26, %c0_27] : memref<1x64xf32, #tpu.memory_space<vmem>>, vector<1x64xf32>
      tpu.vector_store %arg7[%c0_26, %c0_27], %41 {strides = array<i32>} : memref<1x64xf32, #tpu.memory_space<vmem>>, vector<1x64xf32>,
    } else {
    }
    %c0 = arith.constant 0 : index
    %c0_1 = arith.constant 0 : index
    %3 = vector.load %arg1[%c0, %c0_1] : memref<256x64xbf16, #tpu.memory_space<vmem>>, vector<256x64xbf16>
    %4 = arith.extf %3 : vector<256x64xbf16> to vector<256x64xf32>
    %c0_2 = arith.constant 0 : index
    %c0_3 = arith.constant 0 : index
    %5 = vector.load %arg2[%c0_2, %c0_3] : memref<1x64xf32, #tpu.memory_space<vmem>>, vector<1x64xf32>
    %6 = vector.broadcast %5 : vector<1x64xf32> to vector<256x64xf32>
    %7 = arith.mulf %4, %6 : vector<256x64xf32>
    %c0_4 = arith.constant 0 : index
    %c0_5 = arith.constant 0 : index
    %8 = vector.load %arg3[%c0_4, %c0_5] : memref<1x64xf32, #tpu.memory_space<vmem>>, vector<1x64xf32>
    %9 = vector.broadcast %8 : vector<1x64xf32> to vector<256x64xf32>
    %10 = arith.addf %7, %9 : vector<256x64xf32>
    %cst = arith.constant 0.000000e+00 : f32
    %11 = vector.broadcast %cst : f32 to vector<256x64xf32>
    %12 = arith.maximumf %10, %11 : vector<256x64xf32>
    %c256_i32 = arith.constant 256 : i32
    %13 = arith.muli %arg0, %c256_i32 : i32
    %14 = tpu.iota {dimensions = array<i32: 0>} : vector<256x1xi32>
    %15 = vector.broadcast %13 : i32 to vector<256x1xi32>
    %16 = arith.addi %15, %14 : vector<256x1xi32>
    %c1000_i32 = arith.constant 1000 : i32
    %17 = vector.broadcast %c1000_i32 : i32 to vector<256x1xi32>
    %18 = arith.cmpi slt, %16, %17 : vector<256x1xi32>
    %cst_6 = arith.constant 0.000000e+00 : f32
    %19 = vector.shape_cast %18 : vector<256x1xi1> to vector<256x1xi1>
    %20 = vector.broadcast %19 : vector<256x1xi1> to vector<256x64xi1>
    %21 = vector.broadcast %cst_6 : f32 to vector<256x64xf32>
    %22 = arith.select %20, %12, %21 : vector<256x64xi1>, vector<256x64xf32>
    %23 = arith.truncf %22 : vector<256x64xf32> to vector<256x64xbf16>
    %c0_7 = arith.constant 0 : index
    %c0_8 = arith.constant 0 : index
    %24 = vector.load %arg4[%c0_7, %c0_8] : memref<64x64xbf16, #tpu.memory_space<vmem>>, vector<64x64xbf16>
    %cst_9 = arith.constant dense<0.000000e+00> : vector<256x64xf32>
    %25 = tpu.matmul %23, %24, %cst_9 {dimension_numbers = #tpu.dot_dimension_numbers<[1], [0], [0], [1], [0, 0, 1, 1], [], []>} : vector<256x64xbf16>, vector<64x64xbf16>, vector<256x64xf32> -> vector<256x64xf32>
    %c0_10 = arith.constant 0 : index
    %c0_11 = arith.constant 0 : index
    %26 = vector.load %arg6[%c0_10, %c0_11] : memref<1x64xf32, #tpu.memory_space<vmem>>, vector<1x64xf32>
    %cst_12 = arith.constant dense<0.000000e+00> : vector<64xf32>
    %27 = vector.multi_reduction <add>, %25, %cst_12 [0] : vector<256x64xf32> to vector<64xf32>
    %28 = vector.shape_cast %27 : vector<64xf32> to vector<1x64xf32>
    %29 = arith.addf %26, %28 : vector<1x64xf32>
    %c0_13 = arith.constant 0 : index
    %c0_14 = arith.constant 0 : index
    %30 = vector.load %arg6[%c0_13, %c0_14] : memref<1x64xf32, #tpu.memory_space<vmem>>, vector<1x64xf32>
    tpu.vector_store %arg6[%c0_13, %c0_14], %29 {strides = array<i32>} : memref<1x64xf32, #tpu.memory_space<vmem>>, vector<1x64xf32>,
    %c0_15 = arith.constant 0 : index
    %c0_16 = arith.constant 0 : index
    %31 = vector.load %arg7[%c0_15, %c0_16] : memref<1x64xf32, #tpu.memory_space<vmem>>, vector<1x64xf32>
    %32 = arith.mulf %25, %25 : vector<256x64xf32>
    %cst_17 = arith.constant dense<0.000000e+00> : vector<64xf32>
    %33 = vector.multi_reduction <add>, %32, %cst_17 [0] : vector<256x64xf32> to vector<64xf32>
    %34 = vector.shape_cast %33 : vector<64xf32> to vector<1x64xf32>
    %35 = arith.addf %31, %34 : vector<1x64xf32>
    %c0_18 = arith.constant 0 : index
    %c0_19 = arith.constant 0 : index
    %36 = vector.load %arg7[%c0_18, %c0_19] : memref<1x64xf32, #tpu.memory_space<vmem>>, vector<1x64xf32>
    tpu.vector_store %arg7[%c0_18, %c0_19], %35 {strides = array<i32>} : memref<1x64xf32, #tpu.memory_space<vmem>>, vector<1x64xf32>,
    %37 = arith.truncf %25 : vector<256x64xf32> to vector<256x64xbf16>
    %c0_20 = arith.constant 0 : index
    %c0_21 = arith.constant 0 : index
    %38 = vector.load %arg5[%c0_20, %c0_21] : memref<256x64xbf16, #tpu.memory_space<vmem>>, vector<256x64xbf16>
    tpu.vector_store %arg5[%c0_20, %c0_21], %37 {strides = array<i32>} : memref<256x64xbf16, #tpu.memory_space<vmem>>, vector<256x64xbf16>,
    return
  }
  func.func @transform_0(%arg0: i32) -> (i32, i32) {
    %c0_i32 = arith.constant 0 : i32
    %c0_i32_0 = arith.constant 0 : i32
    return %arg0, %c0_i32 : i32, i32
  }
  func.func @transform_1(%arg0: i32) -> (i32, i32) {
    %c0_i32 = arith.constant 0 : i32
    %c0_i32_0 = arith.constant 0 : i32
    %c0_i32_1 = arith.constant 0 : i32
    return %c0_i32, %c0_i32_0 : i32, i32
  }
  func.func @transform_2(%arg0: i32) -> (i32, i32) {
    %c0_i32 = arith.constant 0 : i32
    %c0_i32_0 = arith.constant 0 : i32
    %c0_i32_1 = arith.constant 0 : i32
    return %c0_i32, %c0_i32_0 : i32, i32
  }
  func.func @transform_3(%arg0: i32) -> (i32, i32) {
    %c0_i32 = arith.constant 0 : i32
    %c0_i32_0 = arith.constant 0 : i32
    %c0_i32_1 = arith.constant 0 : i32
    return %c0_i32, %c0_i32_0 : i32, i32
  }
  func.func @transform_4(%arg0: i32) -> (i32, i32) {
    %c0_i32 = arith.constant 0 : i32
    %c0_i32_0 = arith.constant 0 : i32
    return %arg0, %c0_i32 : i32, i32
  }
  func.func @transform_5(%arg0: i32) -> (i32, i32) {
    %c0_i32 = arith.constant 0 : i32
    %c0_i32_0 = arith.constant 0 : i32
    %c0_i32_1 = arith.constant 0 : i32
    return %c0_i32, %c0_i32_0 : i32, i32
  }
  func.func @transform_6(%arg0: i32) -> (i32, i32) {
    %c0_i32 = arith.constant 0 : i32
    %c0_i32_0 = arith.constant 0 : i32
    %c0_i32_1 = arith.constant 0 : i32
    return %c0_i32, %c0_i32_0 : i32, i32
  }
}

module attributes {stable_mosaic.version = 11 : i64} {
  func.func @_stats_only_kernel(%arg0: i32, %arg1: memref<256x64xbf16, #tpu.memory_space<vmem>>, %arg2: memref<1x64xf32, #tpu.memory_space<vmem>>, %arg3: memref<1x64xf32, #tpu.memory_space<vmem>>, %arg4: memref<64x64xbf16, #tpu.memory_space<vmem>>, %arg5: memref<1x64xf32, #tpu.memory_space<vmem>>, %arg6: memref<1x64xf32, #tpu.memory_space<vmem>>) attributes {dimension_semantics = [#tpu.dimension_semantics<arbitrary>], iteration_bounds = array<i64: 4>, scalar_prefetch = 0 : i64, scratch_operands = 0 : i64, tpu.core_type = #tpu.core_type<tc>, window_params = [{transform_indices = @transform_0, window_bounds = array<i64: 256, 64>}, {pipeline_mode = #tpu.pipeline_mode<synchronous>, transform_indices = @transform_1, window_bounds = array<i64: 1, 64>}, {pipeline_mode = #tpu.pipeline_mode<synchronous>, transform_indices = @transform_2, window_bounds = array<i64: 1, 64>}, {pipeline_mode = #tpu.pipeline_mode<synchronous>, transform_indices = @transform_3, window_bounds = array<i64: 64, 64>}, {pipeline_mode = #tpu.pipeline_mode<synchronous>, transform_indices = @transform_4, window_bounds = array<i64: 1, 64>}, {pipeline_mode = #tpu.pipeline_mode<synchronous>, transform_indices = @transform_5, window_bounds = array<i64: 1, 64>}]} {
    %c0_i32 = arith.constant 0 : i32
    %0 = arith.cmpi eq, %arg0, %c0_i32 : i32
    %1 = arith.extui %0 : i1 to i32
    %c0_i32_0 = arith.constant 0 : i32
    %2 = arith.cmpi ne, %1, %c0_i32_0 : i32
    scf.if %2 {
      %cst_20 = arith.constant 0.000000e+00 : f32
      %37 = vector.broadcast %cst_20 : f32 to vector<1x64xf32>
      %c0_21 = arith.constant 0 : index
      %c0_22 = arith.constant 0 : index
      %38 = vector.load %arg5[%c0_21, %c0_22] : memref<1x64xf32, #tpu.memory_space<vmem>>, vector<1x64xf32>
      tpu.vector_store %arg5[%c0_21, %c0_22], %37 {strides = array<i32>} : memref<1x64xf32, #tpu.memory_space<vmem>>, vector<1x64xf32>,
      %cst_23 = arith.constant 0.000000e+00 : f32
      %39 = vector.broadcast %cst_23 : f32 to vector<1x64xf32>
      %c0_24 = arith.constant 0 : index
      %c0_25 = arith.constant 0 : index
      %40 = vector.load %arg6[%c0_24, %c0_25] : memref<1x64xf32, #tpu.memory_space<vmem>>, vector<1x64xf32>
      tpu.vector_store %arg6[%c0_24, %c0_25], %39 {strides = array<i32>} : memref<1x64xf32, #tpu.memory_space<vmem>>, vector<1x64xf32>,
    } else {
    }
    %c0 = arith.constant 0 : index
    %c0_1 = arith.constant 0 : index
    %3 = vector.load %arg1[%c0, %c0_1] : memref<256x64xbf16, #tpu.memory_space<vmem>>, vector<256x64xbf16>
    %4 = arith.extf %3 : vector<256x64xbf16> to vector<256x64xf32>
    %c0_2 = arith.constant 0 : index
    %c0_3 = arith.constant 0 : index
    %5 = vector.load %arg2[%c0_2, %c0_3] : memref<1x64xf32, #tpu.memory_space<vmem>>, vector<1x64xf32>
    %6 = vector.broadcast %5 : vector<1x64xf32> to vector<256x64xf32>
    %7 = arith.mulf %4, %6 : vector<256x64xf32>
    %c0_4 = arith.constant 0 : index
    %c0_5 = arith.constant 0 : index
    %8 = vector.load %arg3[%c0_4, %c0_5] : memref<1x64xf32, #tpu.memory_space<vmem>>, vector<1x64xf32>
    %9 = vector.broadcast %8 : vector<1x64xf32> to vector<256x64xf32>
    %10 = arith.addf %7, %9 : vector<256x64xf32>
    %cst = arith.constant 0.000000e+00 : f32
    %11 = vector.broadcast %cst : f32 to vector<256x64xf32>
    %12 = arith.maximumf %10, %11 : vector<256x64xf32>
    %c256_i32 = arith.constant 256 : i32
    %13 = arith.muli %arg0, %c256_i32 : i32
    %14 = tpu.iota {dimensions = array<i32: 0>} : vector<256x1xi32>
    %15 = vector.broadcast %13 : i32 to vector<256x1xi32>
    %16 = arith.addi %15, %14 : vector<256x1xi32>
    %c1000_i32 = arith.constant 1000 : i32
    %17 = vector.broadcast %c1000_i32 : i32 to vector<256x1xi32>
    %18 = arith.cmpi slt, %16, %17 : vector<256x1xi32>
    %cst_6 = arith.constant 0.000000e+00 : f32
    %19 = vector.shape_cast %18 : vector<256x1xi1> to vector<256x1xi1>
    %20 = vector.broadcast %19 : vector<256x1xi1> to vector<256x64xi1>
    %21 = vector.broadcast %cst_6 : f32 to vector<256x64xf32>
    %22 = arith.select %20, %12, %21 : vector<256x64xi1>, vector<256x64xf32>
    %23 = arith.truncf %22 : vector<256x64xf32> to vector<256x64xbf16>
    %c0_7 = arith.constant 0 : index
    %c0_8 = arith.constant 0 : index
    %24 = vector.load %arg4[%c0_7, %c0_8] : memref<64x64xbf16, #tpu.memory_space<vmem>>, vector<64x64xbf16>
    %cst_9 = arith.constant dense<0.000000e+00> : vector<256x64xf32>
    %25 = tpu.matmul %23, %24, %cst_9 {dimension_numbers = #tpu.dot_dimension_numbers<[1], [0], [0], [1], [0, 0, 1, 1], [], []>} : vector<256x64xbf16>, vector<64x64xbf16>, vector<256x64xf32> -> vector<256x64xf32>
    %c0_10 = arith.constant 0 : index
    %c0_11 = arith.constant 0 : index
    %26 = vector.load %arg5[%c0_10, %c0_11] : memref<1x64xf32, #tpu.memory_space<vmem>>, vector<1x64xf32>
    %cst_12 = arith.constant dense<0.000000e+00> : vector<64xf32>
    %27 = vector.multi_reduction <add>, %25, %cst_12 [0] : vector<256x64xf32> to vector<64xf32>
    %28 = vector.shape_cast %27 : vector<64xf32> to vector<1x64xf32>
    %29 = arith.addf %26, %28 : vector<1x64xf32>
    %c0_13 = arith.constant 0 : index
    %c0_14 = arith.constant 0 : index
    %30 = vector.load %arg5[%c0_13, %c0_14] : memref<1x64xf32, #tpu.memory_space<vmem>>, vector<1x64xf32>
    tpu.vector_store %arg5[%c0_13, %c0_14], %29 {strides = array<i32>} : memref<1x64xf32, #tpu.memory_space<vmem>>, vector<1x64xf32>,
    %c0_15 = arith.constant 0 : index
    %c0_16 = arith.constant 0 : index
    %31 = vector.load %arg6[%c0_15, %c0_16] : memref<1x64xf32, #tpu.memory_space<vmem>>, vector<1x64xf32>
    %32 = arith.mulf %25, %25 : vector<256x64xf32>
    %cst_17 = arith.constant dense<0.000000e+00> : vector<64xf32>
    %33 = vector.multi_reduction <add>, %32, %cst_17 [0] : vector<256x64xf32> to vector<64xf32>
    %34 = vector.shape_cast %33 : vector<64xf32> to vector<1x64xf32>
    %35 = arith.addf %31, %34 : vector<1x64xf32>
    %c0_18 = arith.constant 0 : index
    %c0_19 = arith.constant 0 : index
    %36 = vector.load %arg6[%c0_18, %c0_19] : memref<1x64xf32, #tpu.memory_space<vmem>>, vector<1x64xf32>
    tpu.vector_store %arg6[%c0_18, %c0_19], %35 {strides = array<i32>} : memref<1x64xf32, #tpu.memory_space<vmem>>, vector<1x64xf32>,
    return
  }
  func.func @transform_0(%arg0: i32) -> (i32, i32) {
    %c0_i32 = arith.constant 0 : i32
    %c0_i32_0 = arith.constant 0 : i32
    return %arg0, %c0_i32 : i32, i32
  }
  func.func @transform_1(%arg0: i32) -> (i32, i32) {
    %c0_i32 = arith.constant 0 : i32
    %c0_i32_0 = arith.constant 0 : i32
    %c0_i32_1 = arith.constant 0 : i32
    return %c0_i32, %c0_i32_0 : i32, i32
  }
  func.func @transform_2(%arg0: i32) -> (i32, i32) {
    %c0_i32 = arith.constant 0 : i32
    %c0_i32_0 = arith.constant 0 : i32
    %c0_i32_1 = arith.constant 0 : i32
    return %c0_i32, %c0_i32_0 : i32, i32
  }
  func.func @transform_3(%arg0: i32) -> (i32, i32) {
    %c0_i32 = arith.constant 0 : i32
    %c0_i32_0 = arith.constant 0 : i32
    %c0_i32_1 = arith.constant 0 : i32
    return %c0_i32, %c0_i32_0 : i32, i32
  }
  func.func @transform_4(%arg0: i32) -> (i32, i32) {
    %c0_i32 = arith.constant 0 : i32
    %c0_i32_0 = arith.constant 0 : i32
    %c0_i32_1 = arith.constant 0 : i32
    return %c0_i32, %c0_i32_0 : i32, i32
  }
  func.func @transform_5(%arg0: i32) -> (i32, i32) {
    %c0_i32 = arith.constant 0 : i32
    %c0_i32_0 = arith.constant 0 : i32
    %c0_i32_1 = arith.constant 0 : i32
    return %c0_i32, %c0_i32_0 : i32, i32
  }
}

</mosaic_0001>

<llo_original>
// kernel: innernet_forward.7
$region0: #{innernet_forward.7}
  #allocation0 [shape = 'u32[]', space=smem, size = 0x4, offset = 0x4, fixed_abs, tag = 'smem constant byte address 0x4 - core index']
  #allocation1 [shape = 'u32[144,128]{1,0:T(1,128)}', space=vmem, size = 0x12000, scoped, tag = 'internal scratch']
  %s0 = inlined_call_operand.vmem [shape: bf16[1000,64], index: 0, kind: input, shape index: {}]
  %s1 = inlined_call_operand.vmem [shape: f32[1,64], index: 1, kind: input, shape index: {}]
  %s2 = inlined_call_operand.vmem [shape: f32[1,64], index: 2, kind: input, shape index: {}]
  %s3 = inlined_call_operand.vmem [shape: bf16[64,64], index: 3, kind: input, shape index: {}]
  %s4 = inlined_call_operand.vmem [shape: f32[1,64], index: 4, kind: input, shape index: {}]
  %s5 = inlined_call_operand.vmem [shape: f32[1,64], index: 5, kind: input, shape index: {}]
  %s6 = inlined_call_operand.vmem [shape: f32[1000,64], index: 6, kind: output, shape index: {}]
  %s7 = sld [smem:[#allocation0]]
  $region105: #{innernet_forward.7} parent=0
    _
  %s9 = ssub.s32 1, %s7
  %s10 = scalar_select 0, %s9, %s7
  $region1: #{innernet_forward.7} parent=0
    #allocation2 [shape = 'u8[262144]{0}', space=vmem, size = 0x40000, scoped, tag = 'output window, operand 0']
    loop: start=0, step=1, limit=6
    $region2: #{innernet_forward.7} parent=1 // loop_pre_header
      _
    $region3: #{innernet_forward.7} parent=1 // loop_header
      %s12 = sphi 0, %s16
      %p13 = scmp.ge.s32.totalorder %s12, 6
      %s22 = sphi 0, %s24
      %s25 = sphi 0, %s22
      %s26 = sphi 0, %s25
      %s42 = sphi 0, %s26
      %s46 = sphi 0, %s46
      %s48 = sphi 0, %s46
      %s49 = sphi 0, %s48
      %s63 = sphi 0, %s49
      %s67 = sphi 0, %s67
      %s69 = sphi 0, %s67
      %s70 = sphi 0, %s69
      %s84 = sphi 0, %s70
      %s88 = sphi 0, %s88
      %s90 = sphi 0, %s88
      %s91 = sphi 0, %s90
      %s105 = sphi 0, %s91
      %s109 = sphi 0, %s109
      %s111 = sphi 0, %s109
      %s112 = sphi 0, %s111
      %s126 = sphi 0, %s112
      %s130 = sphi 0, %s130
      %s132 = sphi 0, %s130
      %s133 = sphi 0, %s132
      %s147 = sphi 0, %s133
      %s153 = sphi 0, %s155
      %s156 = sphi 0, %s153
      %s157 = sphi 0, %s156
      %s173 = sphi 0, %s157
    $region4: #{innernet_forward.7} parent=1 // loop_header_branch
      %15 = sbr.rel (%p13) target = $region8
    $region5: #{innernet_forward.7} parent=1 // loop_body
      %s17 = ssub.s32 %s12, 1
      %s18 = ssub.s32 %s12, 2
      %s19 = sadd.s32 %s12, 1
      %s20 = ssub.s32 %s12, %s19
      %p21 = scmp.eq.s32.totalorder %s20, 0
      %s23 = sadd.s32 %s22, 1
      %s24 = scalar_select %p21, %s22, %s23
      %p27 = pneg %p21
      %p28 = scmp.eq.s32.totalorder %s12, 3
      %p29 = por %p27, %p28
      %p30 = scmp.ne.s32.totalorder %s22, %s25
      %p31 = scmp.eq.s32.totalorder %s12, 0
      %p32 = por %p30, %p31
      %p33 = scmp.ne.s32.totalorder %s22, %s25
      %p34 = scmp.eq.s32.totalorder %s17, 3
      %p35 = por %p33, %p34
      %p36 = scmp.ne.s32.totalorder %s25, %s26
      %p37 = scmp.eq.s32.totalorder %s17, 0
      %p38 = por %p36, %p37
      %p39 = scmp.ne.s32.totalorder %s25, %s26
      %p40 = scmp.eq.s32.totalorder %s18, 3
      %p41 = por %p39, %p40
      %p43 = scmp.ne.s32.totalorder %s26, %s42
      %p44 = scmp.eq.s32.totalorder %s18, 0
      %p45 = por %p43, %p44
      %s47 = sadd.s32 %s46, 1
      %p50 = scmp.eq.s32.totalorder %s12, 3
      %p51 = scmp.ne.s32.totalorder %s46, %s48
      %p52 = scmp.eq.s32.totalorder %s12, 0
      %p53 = por %p51, %p52
      %p54 = scmp.ne.s32.totalorder %s46, %s48
      %p55 = scmp.eq.s32.totalorder %s17, 3
      %p56 = por %p54, %p55
      %p57 = scmp.ne.s32.totalorder %s48, %s49
      %p58 = scmp.eq.s32.totalorder %s17, 0
      %p59 = por %p57, %p58
      %p60 = scmp.ne.s32.totalorder %s48, %s49
      %p61 = scmp.eq.s32.totalorder %s18, 3
      %p62 = por %p60, %p61
      %p64 = scmp.ne.s32.totalorder %s49, %s63
      %p65 = scmp.eq.s32.totalorder %s18, 0
      %p66 = por %p64, %p65
      %s68 = sadd.s32 %s67, 1
      %p71 = scmp.eq.s32.totalorder %s12, 3
      %p72 = scmp.ne.s32.totalorder %s67, %s69
      %p73 = scmp.eq.s32.totalorder %s12, 0
      %p74 = por %p72, %p73
      %p75 = scmp.ne.s32.totalorder %s67, %s69
      %p76 = scmp.eq.s32.totalorder %s17, 3
      %p77 = por %p75, %p76
      %p78 = scmp.ne.s32.totalorder %s69, %s70
      %p79 = scmp.eq.s32.totalorder %s17, 0
      %p80 = por %p78, %p79
      %p81 = scmp.ne.s32.totalorder %s69, %s70
      %p82 = scmp.eq.s32.totalorder %s18, 3
      %p83 = por %p81, %p82
      %p85 = scmp.ne.s32.totalorder %s70, %s84
      %p86 = scmp.eq.s32.totalorder %s18, 0
      %p87 = por %p85, %p86
      %s89 = sadd.s32 %s88, 1
      %p92 = scmp.eq.s32.totalorder %s12, 3
      %p93 = scmp.ne.s32.totalorder %s88, %s90
      %p94 = scmp.eq.s32.totalorder %s12, 0
      %p95 = por %p93, %p94
      %p96 = scmp.ne.s32.totalorder %s88, %s90
      %p97 = scmp.eq.s32.totalorder %s17, 3
      %p98 = por %p96, %p97
      %p99 = scmp.ne.s32.totalorder %s90, %s91
      %p100 = scmp.eq.s32.totalorder %s17, 0
      %p101 = por %p99, %p100
      %p102 = scmp.ne.s32.totalorder %s90, %s91
      %p103 = scmp.eq.s32.totalorder %s18, 3
      %p104 = por %p102, %p103
      %p106 = scmp.ne.s32.totalorder %s91, %s105
      %p107 = scmp.eq.s32.totalorder %s18, 0
      %p108 = por %p106, %p107
      %s110 = sadd.s32 %s109, 1
      %p113 = scmp.eq.s32.totalorder %s12, 3
      %p114 = scmp.ne.s32.totalorder %s109, %s111
      %p115 = scmp.eq.s32.totalorder %s12, 0
      %p116 = por %p114, %p115
      %p117 = scmp.ne.s32.totalorder %s109, %s111
      %p118 = scmp.eq.s32.totalorder %s17, 3
      %p119 = por %p117, %p118
      %p120 = scmp.ne.s32.totalorder %s111, %s112
      %p121 = scmp.eq.s32.totalorder %s17, 0
      %p122 = por %p120, %p121
      %p123 = scmp.ne.s32.totalorder %s111, %s112
      %p124 = scmp.eq.s32.totalorder %s18, 3
      %p125 = por %p123, %p124
      %p127 = scmp.ne.s32.totalorder %s112, %s126
      %p128 = scmp.eq.s32.totalorder %s18, 0
      %p129 = por %p127, %p128
      %s131 = sadd.s32 %s130, 1
      %p134 = scmp.eq.s32.totalorder %s12, 3
      %p135 = scmp.ne.s32.totalorder %s130, %s132
      %p136 = scmp.eq.s32.totalorder %s12, 0
      %p137 = por %p135, %p136
      %p138 = scmp.ne.s32.totalorder %s130, %s132
      %p139 = scmp.eq.s32.totalorder %s17, 3
      %p140 = por %p138, %p139
      %p141 = scmp.ne.s32.totalorder %s132, %s133
      %p142 = scmp.eq.s32.totalorder %s17, 0
      %p143 = por %p141, %p142
      %p144 = scmp.ne.s32.totalorder %s132, %s133
      %p145 = scmp.eq.s32.totalorder %s18, 3
      %p146 = por %p144, %p145
      %p148 = scmp.ne.s32.totalorder %s133, %s147
      %p149 = scmp.eq.s32.totalorder %s18, 0
      %p150 = por %p148, %p149
      %s151 = ssub.s32 %s12, %s19
      %p152 = scmp.eq.s32.totalorder %s151, 0
      %s154 = sadd.s32 %s153, 1
      %s155 = scalar_select %p152, %s153, %s154
      %p158 = pneg %p152
      %p159 = scmp.eq.s32.totalorder %s12, 3
      %p160 = por %p158, %p159
      %p161 = scmp.ne.s32.totalorder %s153, %s156
      %p162 = scmp.eq.s32.totalorder %s12, 0
      %p163 = por %p161, %p162
      %p164 = scmp.ne.s32.totalorder %s153, %s156
      %p165 = scmp.eq.s32.totalorder %s17, 3
      %p166 = por %p164, %p165
      %p167 = scmp.ne.s32.totalorder %s156, %s157
      %p168 = scmp.eq.s32.totalorder %s17, 0
      %p169 = por %p167, %p168
      %p170 = scmp.ne.s32.totalorder %s156, %s157
      %p171 = scmp.eq.s32.totalorder %s18, 3
      %p172 = por %p170, %p171
      %p174 = scmp.ne.s32.totalorder %s157, %s173
      %p175 = scmp.eq.s32.totalorder %s18, 0
      %p176 = por %p174, %p175
      %p177 = scmp.le.s32.totalorder 1, %s12
      %p178 = scmp.lt.s32.totalorder %s12, 5
      %p179 = pnand %p177, %p178
      %p180 = pneg %p179
      // Predicated region
      $region9: #{innernet_forward.7} parent=5 // pred_check
        _
      $region10: #{innernet_forward.7} parent=5 // pred_check_branch
        %182 = sbr.rel (%p179) target = $region12
      $region11: #{innernet_forward.7} parent=5 // pred_region
        %s183 = ssub.s32 %s12, 1
        // Predicated region
        $region13: #{innernet_forward.7} parent=11 // pred_check
          %p184 = pneg %p59
        $region14: #{innernet_forward.7} parent=11 // pred_check_branch
          %186 = sbr.rel (%p184) target = $region16
        $region15: #{innernet_forward.7} parent=11 // pred_region
          _
        $region16: #{innernet_forward.7} parent=11 // pred_fallthru
          _
        // Predicated region
        $region17: #{innernet_forward.7} parent=11 // pred_check
          %p187 = pneg %p80
        $region18: #{innernet_forward.7} parent=11 // pred_check_branch
          %189 = sbr.rel (%p187) target = $region20
        $region19: #{innernet_forward.7} parent=11 // pred_region
          _
        $region20: #{innernet_forward.7} parent=11 // pred_fallthru
          _
        // Predicated region
        $region21: #{innernet_forward.7} parent=11 // pred_check
          %p190 = pneg %p101
        $region22: #{innernet_forward.7} parent=11 // pred_check_branch
          %192 = sbr.rel (%p190) target = $region24
        $region23: #{innernet_forward.7} parent=11 // pred_region
          _
        $region24: #{innernet_forward.7} parent=11 // pred_fallthru
          _
        // Predicated region
        $region25: #{innernet_forward.7} parent=11 // pred_check
          %p193 = pneg %p122
        $region26: #{innernet_forward.7} parent=11 // pred_check_branch
          %195 = sbr.rel (%p193) target = $region28
        $region27: #{innernet_forward.7} parent=11 // pred_region
          _
        $region28: #{innernet_forward.7} parent=11 // pred_fallthru
          _
        // Predicated region
        $region29: #{innernet_forward.7} parent=11 // pred_check
          %p196 = pneg %p143
        $region30: #{innernet_forward.7} parent=11 // pred_check_branch
          %198 = sbr.rel (%p196) target = $region32
        $region31: #{innernet_forward.7} parent=11 // pred_region
          _
        $region32: #{innernet_forward.7} parent=11 // pred_fallthru
          _
      $region12: #{innernet_forward.7} parent=5 // pred_fallthru
        _
      %p199 = scmp.lt.s32.totalorder %s12, 4
      // Predicated region
      $region33: #{innernet_forward.7} parent=5 // pred_check
        %p200 = pneg %p199
      $region34: #{innernet_forward.7} parent=5 // pred_check_branch
        %202 = sbr.rel (%p200) target = $region36
      $region35: #{innernet_forward.7} parent=5 // pred_region
        // Predicated region
        $region37: #{innernet_forward.7} parent=35 // pred_check
          %p203 = pneg %p32
        $region38: #{innernet_forward.7} parent=35 // pred_check_branch
          %205 = sbr.rel (%p203) target = $region40
        $region39: #{innernet_forward.7} parent=35 // pred_region
          %s206 = smul.u32 32, %s12
          %s207 = ssub.s32 125, %s206
          %p208 = scmp.lt.s32.totalorder %s207, 32
          %s209 = scalar_select %p208, %s207, 32
          %s210 = smul.u32 64, %s209
          %p211 = scmp.lt.s32.totalorder %s206, 124
          %s212 = scalar_select %p211, %s206, 124
          %s213 = smul.addr %s212, 4
          %s214 = scalar_lea.vmem %s0, %s213
          %s215 = smul.u32 32, %s12
          %s216 = ssub.s32 125, %s215
          %p217 = scmp.lt.s32.totalorder %s216, 32
          %s218 = scalar_select %p217, %s216, 32
          %s219 = smul.u32 64, %s218
        $region40: #{innernet_forward.7} parent=35 // pred_fallthru
          _
      $region36: #{innernet_forward.7} parent=5 // pred_fallthru
        _
      %p220 = scmp.le.s32.totalorder 1, %s12
      %p221 = scmp.lt.s32.totalorder %s12, 5
      %p222 = pnand %p220, %p221
      %p223 = pneg %p222
      // Predicated region
      $region41: #{innernet_forward.7} parent=5 // pred_check
        _
      $region42: #{innernet_forward.7} parent=5 // pred_check_branch
        %225 = sbr.rel (%p222) target = $region44
      $region43: #{innernet_forward.7} parent=5 // pred_region
        %s226 = ssub.s32 %s12, 1
        %s227 = smul.u32 32, %s17
        %s228 = ssub.s32 125, %s227
        %p229 = scmp.lt.s32.totalorder %s228, 32
        %s230 = scalar_select %p229, %s228, 32
        %s231 = smul.u32 64, %s230
        %p232 = scmp.lt.s32.totalorder %s227, 124
        %s233 = scalar_select %p232, %s227, 124
        %s234 = smul.addr %s233, 4
        %s235 = scalar_lea.vmem %s0, %s234
        %p236 = pneg %p38
        %p237 = pneg %p35
        %p238 = pneg %p59
        %p239 = pneg %p56
        %p240 = pneg %p80
        %p241 = pneg %p77
        %p242 = pneg %p101
        %p243 = pneg %p98
        %p244 = pneg %p122
        %p245 = pneg %p119
        %p246 = pneg %p143
        %p247 = pneg %p140
        %p248 = pneg %p169
        %p249 = pneg %p166
        %s250 = sand.u32 %s156, 1
        %s251 = sand.u32 %s156, 1
        %s252 = smul.addr %s251, 256
        %s253 = scalar_lea.vmem [#allocation2], %s252
        %s254 = smul.u32 32, %s17
        %s255 = ssub.s32 125, %s254
        %p256 = scmp.lt.s32.totalorder %s255, 32
        %s257 = scalar_select %p256, %s255, 32
        %s258 = smul.u32 64, %s257
        %p259 = scmp.lt.s32.totalorder %s254, 124
        %s260 = scalar_select %p259, %s254, 124
        %s261 = smul.addr %s260, 4
        %s262 = scalar_lea.vmem %s0, %s261
        %s263 = smul.u32 32, %s17
        %s264 = ssub.s32 125, %s263
        %p265 = scmp.lt.s32.totalorder %s264, 32
        %s266 = scalar_select %p265, %s264, 32
        %s267 = smul.u32 64, %s266
        %s268 = smul.u32 32, %s17
        %s269 = ssub.s32 125, %s268
        %p270 = scmp.lt.s32.totalorder %s269, 32
        %s271 = scalar_select %p270, %s269, 32
        %s272 = smul.u32 128, %s271
        %v274 = vld [vmem:[%s262] sm:$0xf]
        %v275 = vld [vmem:[%s262 + $0x4] sm:$0xf]
        %v276 = vld [vmem:[%s262 + $0x8] sm:$0xf]
        %v277 = vld [vmem:[%s262 + $0xc] sm:$0xf]
        %v278 = vld [vmem:[%s262 + $0x10] sm:$0xf]
        %v279 = vld [vmem:[%s262 + $0x14] sm:$0xf]
        %v280 = vld [vmem:[%s262 + $0x18] sm:$0xf]
        %v281 = vld [vmem:[%s262 + $0x1c] sm:$0xf]
        %v282 = vld [vmem:[%s262 + $0x20] sm:$0xf]
        %v283 = vld [vmem:[%s262 + $0x24] sm:$0xf]
        %v284 = vld [vmem:[%s262 + $0x28] sm:$0xf]
        %v285 = vld [vmem:[%s262 + $0x2c] sm:$0xf]
        %v286 = vld [vmem:[%s262 + $0x30] sm:$0xf]
        %v287 = vld [vmem:[%s262 + $0x34] sm:$0xf]
        %v288 = vld [vmem:[%s262 + $0x38] sm:$0xf]
        %v289 = vld [vmem:[%s262 + $0x3c] sm:$0xf]
        %v290 = vld [vmem:[%s262 + $0x40] sm:$0xf]
        %v291 = vld [vmem:[%s262 + $0x44] sm:$0xf]
        %v292 = vld [vmem:[%s262 + $0x48] sm:$0xf]
        %v293 = vld [vmem:[%s262 + $0x4c] sm:$0xf]
        %v294 = vld [vmem:[%s262 + $0x50] sm:$0xf]
        %v295 = vld [vmem:[%s262 + $0x54] sm:$0xf]
        %v296 = vld [vmem:[%s262 + $0x58] sm:$0xf]
        %v297 = vld [vmem:[%s262 + $0x5c] sm:$0xf]
        %v298 = vld [vmem:[%s262 + $0x60] sm:$0xf]
        %v299 = vld [vmem:[%s262 + $0x64] sm:$0xf]
        %v300 = vld [vmem:[%s262 + $0x68] sm:$0xf]
        %v301 = vld [vmem:[%s262 + $0x6c] sm:$0xf]
        %v302 = vld [vmem:[%s262 + $0x70] sm:$0xf]
        %v303 = vld [vmem:[%s262 + $0x74] sm:$0xf]
        %v304 = vld [vmem:[%s262 + $0x78] sm:$0xf]
        %v305 = vld [vmem:[%s262 + $0x7c] sm:$0xf]
        %v306 = vunpack.c.l.bf16 %v274
        %v307 = vunpack.c.l.bf16 %v275
        %v308 = vunpack.c.l.bf16 %v276
        %v309 = vunpack.c.l.bf16 %v277
        %v310 = vunpack.c.l.bf16 %v278
        %v311 = vunpack.c.l.bf16 %v279
        %v312 = vunpack.c.l.bf16 %v280
        %v313 = vunpack.c.l.bf16 %v281
        %v314 = vunpack.c.l.bf16 %v282
        %v315 = vunpack.c.l.bf16 %v283
        %v316 = vunpack.c.l.bf16 %v284
        %v317 = vunpack.c.l.bf16 %v285
        %v318 = vunpack.c.l.bf16 %v286
        %v319 = vunpack.c.l.bf16 %v287
        %v320 = vunpack.c.l.bf16 %v288
        %v321 = vunpack.c.l.bf16 %v289
        %v322 = vunpack.c.l.bf16 %v290
        %v323 = vunpack.c.l.bf16 %v291
        %v324 = vunpack.c.l.bf16 %v292
        %v325 = vunpack.c.l.bf16 %v293
        %v326 = vunpack.c.l.bf16 %v294
        %v327 = vunpack.c.l.bf16 %v295
        %v328 = vunpack.c.l.bf16 %v296
        %v329 = vunpack.c.l.bf16 %v297
        %v330 = vunpack.c.l.bf16 %v298
        %v331 = vunpack.c.l.bf16 %v299
        %v332 = vunpack.c.l.bf16 %v300
        %v333 = vunpack.c.l.bf16 %v301
        %v334 = vunpack.c.l.bf16 %v302
        %v335 = vunpack.c.l.bf16 %v303
        %v336 = vunpack.c.l.bf16 %v304
        %v337 = vunpack.c.l.bf16 %v305
        %v338 = vld [vmem:[%s1] sm:$0x1]
        %v340 = vlaneseq
        %v341 = vshrl.u32 %v340, 7
        %v342 = vsub.s32 0, %v341
        %v343 = vrot.slane %v338, %v342
        %v345 = vmul.f32 %v306, %v343
        %v346 = vmul.f32 %v307, %v343
        %v347 = vmul.f32 %v308, %v343
        %v348 = vmul.f32 %v309, %v343
        %v349 = vmul.f32 %v310, %v343
        %v350 = vmul.f32 %v311, %v343
        %v351 = vmul.f32 %v312, %v343
        %v352 = vmul.f32 %v313, %v343
        %v353 = vmul.f32 %v314, %v343
        %v354 = vmul.f32 %v315, %v343
        %v355 = vmul.f32 %v316, %v343
        %v356 = vmul.f32 %v317, %v343
        %v357 = vmul.f32 %v318, %v343
        %v358 = vmul.f32 %v319, %v343
        %v359 = vmul.f32 %v320, %v343
        %v360 = vmul.f32 %v321, %v343
        %v361 = vmul.f32 %v322, %v343
        %v362 = vmul.f32 %v323, %v343
        %v363 = vmul.f32 %v324, %v343
        %v364 = vmul.f32 %v325, %v343
        %v365 = vmul.f32 %v326, %v343
        %v366 = vmul.f32 %v327, %v343
        %v367 = vmul.f32 %v328, %v343
        %v368 = vmul.f32 %v329, %v343
        %v369 = vmul.f32 %v330, %v343
        %v370 = vmul.f32 %v331, %v343
        %v371 = vmul.f32 %v332, %v343
        %v372 = vmul.f32 %v333, %v343
        %v373 = vmul.f32 %v334, %v343
        %v374 = vmul.f32 %v335, %v343
        %v375 = vmul.f32 %v336, %v343
        %v376 = vmul.f32 %v337, %v343
        %v377 = vld [vmem:[%s2] sm:$0x1]
        %v379 = vlaneseq
        %v380 = vshrl.u32 %v379, 7
        %v381 = vsub.s32 0, %v380
        %v382 = vrot.slane %v377, %v381
        %v384 = vadd.f32 %v345, %v382
        %v385 = vadd.f32 %v346, %v382
        %v386 = vadd.f32 %v347, %v382
        %v387 = vadd.f32 %v348, %v382
        %v388 = vadd.f32 %v349, %v382
        %v389 = vadd.f32 %v350, %v382
        %v390 = vadd.f32 %v351, %v382
        %v391 = vadd.f32 %v352, %v382
        %v392 = vadd.f32 %v353, %v382
        %v393 = vadd.f32 %v354, %v382
        %v394 = vadd.f32 %v355, %v382
        %v395 = vadd.f32 %v356, %v382
        %v396 = vadd.f32 %v357, %v382
        %v397 = vadd.f32 %v358, %v382
        %v398 = vadd.f32 %v359, %v382
        %v399 = vadd.f32 %v360, %v382
        %v400 = vadd.f32 %v361, %v382
        %v401 = vadd.f32 %v362, %v382
        %v402 = vadd.f32 %v363, %v382
        %v403 = vadd.f32 %v364, %v382
        %v404 = vadd.f32 %v365, %v382
        %v405 = vadd.f32 %v366, %v382
        %v406 = vadd.f32 %v367, %v382
        %v407 = vadd.f32 %v368, %v382
        %v408 = vadd.f32 %v369, %v382
        %v409 = vadd.f32 %v370, %v382
        %v410 = vadd.f32 %v371, %v382
        %v411 = vadd.f32 %v372, %v382
        %v412 = vadd.f32 %v373, %v382
        %v413 = vadd.f32 %v374, %v382
        %v414 = vadd.f32 %v375, %v382
        %v415 = vadd.f32 %v376, %v382
        %v416 = vmax.f32 %v384, 0.0
        %v417 = vmax.f32 %v385, 0.0
        %v418 = vmax.f32 %v386, 0.0
        %v419 = vmax.f32 %v387, 0.0
        %v420 = vmax.f32 %v388, 0.0
        %v421 = vmax.f32 %v389, 0.0
        %v422 = vmax.f32 %v390, 0.0
        %v423 = vmax.f32 %v391, 0.0
        %v424 = vmax.f32 %v392, 0.0
        %v425 = vmax.f32 %v393, 0.0
        %v426 = vmax.f32 %v394, 0.0
        %v427 = vmax.f32 %v395, 0.0
        %v428 = vmax.f32 %v396, 0.0
        %v429 = vmax.f32 %v397, 0.0
        %v430 = vmax.f32 %v398, 0.0
        %v431 = vmax.f32 %v399, 0.0
        %v432 = vmax.f32 %v400, 0.0
        %v433 = vmax.f32 %v401, 0.0
        %v434 = vmax.f32 %v402, 0.0
        %v435 = vmax.f32 %v403, 0.0
        %v436 = vmax.f32 %v404, 0.0
        %v437 = vmax.f32 %v405, 0.0
        %v438 = vmax.f32 %v406, 0.0
        %v439 = vmax.f32 %v407, 0.0
        %v440 = vmax.f32 %v408, 0.0
        %v441 = vmax.f32 %v409, 0.0
        %v442 = vmax.f32 %v410, 0.0
        %v443 = vmax.f32 %v411, 0.0
        %v444 = vmax.f32 %v412, 0.0
        %v445 = vmax.f32 %v413, 0.0
        %v446 = vmax.f32 %v414, 0.0
        %v447 = vmax.f32 %v415, 0.0
        %v448 = vpack.c.bf16 %v417, %v416
        %v449 = vpack.c.bf16 %v419, %v418
        %v450 = vpack.c.bf16 %v421, %v420
        %v451 = vpack.c.bf16 %v423, %v422
        %v452 = vpack.c.bf16 %v425, %v424
        %v453 = vpack.c.bf16 %v427, %v426
        %v454 = vpack.c.bf16 %v429, %v428
        %v455 = vpack.c.bf16 %v431, %v430
        %v456 = vpack.c.bf16 %v433, %v432
        %v457 = vpack.c.bf16 %v435, %v434
        %v458 = vpack.c.bf16 %v437, %v436
        %v459 = vpack.c.bf16 %v439, %v438
        %v460 = vpack.c.bf16 %v441, %v440
        %v461 = vpack.c.bf16 %v443, %v442
        %v462 = vpack.c.bf16 %v445, %v444
        %v463 = vpack.c.bf16 %v447, %v446
        %v464 = vld [vmem:[%s3] sm:$0xf]
        %v465 = vld [vmem:[%s3 + $0x4] sm:$0xf]
        %v466 = vld [vmem:[%s3 + $0x8] sm:$0xf]
        %v467 = vld [vmem:[%s3 + $0xc] sm:$0xf]
        %v468 = vld [vmem:[%s3 + $0x10] sm:$0xf]
        %v469 = vld [vmem:[%s3 + $0x14] sm:$0xf]
        %v470 = vld [vmem:[%s3 + $0x18] sm:$0xf]
        %v471 = vld [vmem:[%s3 + $0x1c] sm:$0xf]
        %v480 = vunpack.c.l.b16 %v464
        %v481 = vunpack.c.l.b16 %v465
        %v482 = vunpack.c.l.b16 %v466
        %v483 = vunpack.c.l.b16 %v467
        %v484 = vunpack.c.l.b16 %v468
        %v485 = vunpack.c.l.b16 %v469
        %v486 = vunpack.c.l.b16 %v470
        %v487 = vunpack.c.l.b16 %v471
        %v488 = vpack.c.b16 %v481, %v480
        %v489 = vpack.c.b16 %v483, %v482
        %v490 = vpack.c.b16 %v485, %v484
        %v491 = vpack.c.b16 %v487, %v486
        %vm496 = vcmask 523264
        %v498 = vsel %vm496, %v448, 0
        %v501 = vsel %vm496, %v449, 0
        %v504 = vsel %vm496, %v450, 0
        %v507 = vsel %vm496, %v451, 0
        %v510 = vsel %vm496, %v452, 0
        %v513 = vsel %vm496, %v453, 0
        %v516 = vsel %vm496, %v454, 0
        %v519 = vsel %vm496, %v455, 0
        %v522 = vsel %vm496, %v456, 0
        %v525 = vsel %vm496, %v457, 0
        %v528 = vsel %vm496, %v458, 0
        %v531 = vsel %vm496, %v459, 0
        %v534 = vsel %vm496, %v460, 0
        %v537 = vsel %vm496, %v461, 0
        %v540 = vsel %vm496, %v462, 0
        %v543 = vsel %vm496, %v463, 0
        %545 = vmatprep.subr.bf16.mxu0 0
        %546 = vmatpush1.bf16.msra.mxu0 %v488
        %547 = vmatprep.subr.bf16.mxu0 0
        %548 = vmatpush1.bf16.msra.mxu0 %v489
        %549 = vmatprep.subr.bf16.mxu0 0
        %550 = vmatpush1.bf16.msra.mxu0 %v490
        %551 = vmatprep.subr.bf16.mxu0 0
        %552 = vmatpush1.bf16.msra.mxu0 %v491
        %553 = vmatprep.subr.bf16.mxu0 0
        %554 = vmatpush1.bf16.msra.mxu0 0
        %555 = vmatprep.subr.bf16.mxu0 0
        %556 = vmatpush1.bf16.msra.mxu0 0
        %557 = vmatprep.subr.bf16.mxu0 0
        %558 = vmatpush1.bf16.msra.mxu0 0
        %559 = vmatprep.subr.bf16.mxu0 0
        %560 = vmatpush1.bf16.msra.mxu0 0
        %561 = vmatprep.subr.bf16.mxu0 0
        %562 = vmatpush1.bf16.msra.mxu0 0
        %563 = vmatprep.subr.bf16.mxu0 0
        %564 = vmatpush1.bf16.msra.mxu0 0
        %565 = vmatprep.subr.bf16.mxu0 0
        %566 = vmatpush1.bf16.msra.mxu0 0
        %567 = vmatprep.subr.bf16.mxu0 0
        %568 = vmatpush1.bf16.msra.mxu0 0
        %569 = vmatprep.subr.bf16.mxu0 0
        %570 = vmatpush1.bf16.msra.mxu0 0
        %571 = vmatprep.subr.bf16.mxu0 0
        %572 = vmatpush1.bf16.msra.mxu0 0
        %573 = vmatprep.subr.bf16.mxu0 0
        %574 = vmatpush1.bf16.msra.mxu0 0
        %575 = vmatprep.subr.bf16.mxu0 0
        %576 = vmatpush1.bf16.msra.mxu0 0
        %577 = vmatprep.mubr.bf16.mxu0 0
        %578 = vmatmul.mubr.bf16.gmra.mrb[0].mxu0 %v498
        %v579 = vpop.f32.mrb[0].mxu0
        %v580 = vadd.f32 0.0, %v579
        %v581 = vpop.f32.mrb[0].mxu0
        %v582 = vpop.f32.mrb[0].mxu0
        %v583 = vadd.f32 0.0, %v582
        %v584 = vpop.f32.mrb[0].mxu0
        %585 = vmatprep.mubr.bf16.mxu0 0
        %586 = vmatmul.mubr.bf16.gmra.mrb[0].mxu0 %v501
        %v587 = vpop.f32.mrb[0].mxu0
        %v588 = vadd.f32 0.0, %v587
        %v589 = vpop.f32.mrb[0].mxu0
        %v590 = vpop.f32.mrb[0].mxu0
        %v591 = vadd.f32 0.0, %v590
        %v592 = vpop.f32.mrb[0].mxu0
        %593 = vmatprep.mubr.bf16.mxu0 0
        %594 = vmatmul.mubr.bf16.gmra.mrb[0].mxu0 %v504
        %v595 = vpop.f32.mrb[0].mxu0
        %v596 = vadd.f32 0.0, %v595
        %v597 = vpop.f32.mrb[0].mxu0
        %v598 = vpop.f32.mrb[0].mxu0
        %v599 = vadd.f32 0.0, %v598
        %v600 = vpop.f32.mrb[0].mxu0
        %601 = vmatprep.mubr.bf16.mxu0 0
        %602 = vmatmul.mubr.bf16.gmra.mrb[0].mxu0 %v507
        %v603 = vpop.f32.mrb[0].mxu0
        %v604 = vadd.f32 0.0, %v603
        %v605 = vpop.f32.mrb[0].mxu0
        %v606 = vpop.f32.mrb[0].mxu0
        %v607 = vadd.f32 0.0, %v606
        %v608 = vpop.f32.mrb[0].mxu0
        %609 = vmatprep.mubr.bf16.mxu0 0
        %610 = vmatmul.mubr.bf16.gmra.mrb[0].mxu0 %v510
        %v611 = vpop.f32.mrb[0].mxu0
        %v612 = vadd.f32 0.0, %v611
        %v613 = vpop.f32.mrb[0].mxu0
        %v614 = vpop.f32.mrb[0].mxu0
        %v615 = vadd.f32 0.0, %v614
        %v616 = vpop.f32.mrb[0].mxu0
        %617 = vmatprep.mubr.bf16.mxu0 0
        %618 = vmatmul.mubr.bf16.gmra.mrb[0].mxu0 %v513
        %v619 = vpop.f32.mrb[0].mxu0
        %v620 = vadd.f32 0.0, %v619
        %v621 = vpop.f32.mrb[0].mxu0
        %v622 = vpop.f32.mrb[0].mxu0
        %v623 = vadd.f32 0.0, %v622
        %v624 = vpop.f32.mrb[0].mxu0
        %625 = vmatprep.mubr.bf16.mxu0 0
        %626 = vmatmul.mubr.bf16.gmra.mrb[0].mxu0 %v516
        %v627 = vpop.f32.mrb[0].mxu0
        %v628 = vadd.f32 0.0, %v627
        %v629 = vpop.f32.mrb[0].mxu0
        %v630 = vpop.f32.mrb[0].mxu0
        %v631 = vadd.f32 0.0, %v630
        %v632 = vpop.f32.mrb[0].mxu0
        %633 = vmatprep.mubr.bf16.mxu0 0
        %634 = vmatmul.mubr.bf16.gmra.mrb[0].mxu0 %v519
        %v635 = vpop.f32.mrb[0].mxu0
        %v636 = vadd.f32 0.0, %v635
        %v637 = vpop.f32.mrb[0].mxu0
        %v638 = vpop.f32.mrb[0].mxu0
        %v639 = vadd.f32 0.0, %v638
        %v640 = vpop.f32.mrb[0].mxu0
        %641 = vmatprep.mubr.bf16.mxu0 0
        %642 = vmatmul.mubr.bf16.gmra.mrb[0].mxu0 %v522
        %v643 = vpop.f32.mrb[0].mxu0
        %v644 = vadd.f32 0.0, %v643
        %v645 = vpop.f32.mrb[0].mxu0
        %v646 = vpop.f32.mrb[0].mxu0
        %v647 = vadd.f32 0.0, %v646
        %v648 = vpop.f32.mrb[0].mxu0
        %649 = vmatprep.mubr.bf16.mxu0 0
        %650 = vmatmul.mubr.bf16.gmra.mrb[0].mxu0 %v525
        %v651 = vpop.f32.mrb[0].mxu0
        %v652 = vadd.f32 0.0, %v651
        %v653 = vpop.f32.mrb[0].mxu0
        %v654 = vpop.f32.mrb[0].mxu0
        %v655 = vadd.f32 0.0, %v654
        %v656 = vpop.f32.mrb[0].mxu0
        %657 = vmatprep.mubr.bf16.mxu0 0
        %658 = vmatmul.mubr.bf16.gmra.mrb[0].mxu0 %v528
        %v659 = vpop.f32.mrb[0].mxu0
        %v660 = vadd.f32 0.0, %v659
        %v661 = vpop.f32.mrb[0].mxu0
        %v662 = vpop.f32.mrb[0].mxu0
        %v663 = vadd.f32 0.0, %v662
        %v664 = vpop.f32.mrb[0].mxu0
        %665 = vmatprep.mubr.bf16.mxu0 0
        %666 = vmatmul.mubr.bf16.gmra.mrb[0].mxu0 %v531
        %v667 = vpop.f32.mrb[0].mxu0
        %v668 = vadd.f32 0.0, %v667
        %v669 = vpop.f32.mrb[0].mxu0
        %v670 = vpop.f32.mrb[0].mxu0
        %v671 = vadd.f32 0.0, %v670
        %v672 = vpop.f32.mrb[0].mxu0
        %673 = vmatprep.mubr.bf16.mxu0 0
        %674 = vmatmul.mubr.bf16.gmra.mrb[0].mxu0 %v534
        %v675 = vpop.f32.mrb[0].mxu0
        %v676 = vadd.f32 0.0, %v675
        %v677 = vpop.f32.mrb[0].mxu0
        %v678 = vpop.f32.mrb[0].mxu0
        %v679 = vadd.f32 0.0, %v678
        %v680 = vpop.f32.mrb[0].mxu0
        %681 = vmatprep.mubr.bf16.mxu0 0
        %682 = vmatmul.mubr.bf16.gmra.mrb[0].mxu0 %v537
        %v683 = vpop.f32.mrb[0].mxu0
        %v684 = vadd.f32 0.0, %v683
        %v685 = vpop.f32.mrb[0].mxu0
        %v686 = vpop.f32.mrb[0].mxu0
        %v687 = vadd.f32 0.0, %v686
        %v688 = vpop.f32.mrb[0].mxu0
        %689 = vmatprep.mubr.bf16.mxu0 0
        %690 = vmatmul.mubr.bf16.gmra.mrb[0].mxu0 %v540
        %v691 = vpop.f32.mrb[0].mxu0
        %v692 = vadd.f32 0.0, %v691
        %v693 = vpop.f32.mrb[0].mxu0
        %v694 = vpop.f32.mrb[0].mxu0
        %v695 = vadd.f32 0.0, %v694
        %v696 = vpop.f32.mrb[0].mxu0
        %697 = vmatprep.mubr.bf16.mxu0 0
        %698 = vmatmul.mubr.bf16.gmra.mrb[0].mxu0 %v543
        %v699 = vpop.f32.mrb[0].mxu0
        %v700 = vadd.f32 0.0, %v699
        %v701 = vpop.f32.mrb[0].mxu0
        %v702 = vpop.f32.mrb[0].mxu0
        %v703 = vadd.f32 0.0, %v702
        %v704 = vpop.f32.mrb[0].mxu0
        %705 = vdwg.mxu0
        %v706 = vld [vmem:[%s4] sm:$0x1]
        %v708 = vlaneseq
        %v709 = vshrl.u32 %v708, 7
        %v710 = vsub.s32 0, %v709
        %v711 = vrot.slane %v706, %v710
        %v713 = vmul.f32 %v580, %v711
        %v714 = vmul.f32 %v583, %v711
        %v715 = vmul.f32 %v588, %v711
        %v716 = vmul.f32 %v591, %v711
        %v717 = vmul.f32 %v596, %v711
        %v718 = vmul.f32 %v599, %v711
        %v719 = vmul.f32 %v604, %v711
        %v720 = vmul.f32 %v607, %v711
        %v721 = vmul.f32 %v612, %v711
        %v722 = vmul.f32 %v615, %v711
        %v723 = vmul.f32 %v620, %v711
        %v724 = vmul.f32 %v623, %v711
        %v725 = vmul.f32 %v628, %v711
        %v726 = vmul.f32 %v631, %v711
        %v727 = vmul.f32 %v636, %v711
        %v728 = vmul.f32 %v639, %v711
        %v729 = vmul.f32 %v644, %v711
        %v730 = vmul.f32 %v647, %v711
        %v731 = vmul.f32 %v652, %v711
        %v732 = vmul.f32 %v655, %v711
        %v733 = vmul.f32 %v660, %v711
        %v734 = vmul.f32 %v663, %v711
        %v735 = vmul.f32 %v668, %v711
        %v736 = vmul.f32 %v671, %v711
        %v737 = vmul.f32 %v676, %v711
        %v738 = vmul.f32 %v679, %v711
        %v739 = vmul.f32 %v684, %v711
        %v740 = vmul.f32 %v687, %v711
        %v741 = vmul.f32 %v692, %v711
        %v742 = vmul.f32 %v695, %v711
        %v743 = vmul.f32 %v700, %v711
        %v744 = vmul.f32 %v703, %v711
        %v745 = vld [vmem:[%s5] sm:$0x1]
        %v747 = vlaneseq
        %v748 = vshrl.u32 %v747, 7
        %v749 = vsub.s32 0, %v748
        %v750 = vrot.slane %v745, %v749
        %v752 = vadd.f32 %v713, %v750
        %v753 = vadd.f32 %v714, %v750
        %v754 = vadd.f32 %v715, %v750
        %v755 = vadd.f32 %v716, %v750
        %v756 = vadd.f32 %v717, %v750
        %v757 = vadd.f32 %v718, %v750
        %v758 = vadd.f32 %v719, %v750
        %v759 = vadd.f32 %v720, %v750
        %v760 = vadd.f32 %v721, %v750
        %v761 = vadd.f32 %v722, %v750
        %v762 = vadd.f32 %v723, %v750
        %v763 = vadd.f32 %v724, %v750
        %v764 = vadd.f32 %v725, %v750
        %v765 = vadd.f32 %v726, %v750
        %v766 = vadd.f32 %v727, %v750
        %v767 = vadd.f32 %v728, %v750
        %v768 = vadd.f32 %v729, %v750
        %v769 = vadd.f32 %v730, %v750
        %v770 = vadd.f32 %v731, %v750
        %v771 = vadd.f32 %v732, %v750
        %v772 = vadd.f32 %v733, %v750
        %v773 = vadd.f32 %v734, %v750
        %v774 = vadd.f32 %v735, %v750
        %v775 = vadd.f32 %v736, %v750
        %v776 = vadd.f32 %v737, %v750
        %v777 = vadd.f32 %v738, %v750
        %v778 = vadd.f32 %v739, %v750
        %v779 = vadd.f32 %v740, %v750
        %v780 = vadd.f32 %v741, %v750
        %v781 = vadd.f32 %v742, %v750
        %v782 = vadd.f32 %v743, %v750
        %v783 = vadd.f32 %v744, %v750
        %v784 = vmax.f32 %v752, 0.0
        %v785 = vmax.f32 %v753, 0.0
        %v786 = vmax.f32 %v754, 0.0
        %v787 = vmax.f32 %v755, 0.0
        %v788 = vmax.f32 %v756, 0.0
        %v789 = vmax.f32 %v757, 0.0
        %v790 = vmax.f32 %v758, 0.0
        %v791 = vmax.f32 %v759, 0.0
        %v792 = vmax.f32 %v760, 0.0
        %v793 = vmax.f32 %v761, 0.0
        %v794 = vmax.f32 %v762, 0.0
        %v795 = vmax.f32 %v763, 0.0
        %v796 = vmax.f32 %v764, 0.0
        %v797 = vmax.f32 %v765, 0.0
        %v798 = vmax.f32 %v766, 0.0
        %v799 = vmax.f32 %v767, 0.0
        %v800 = vmax.f32 %v768, 0.0
        %v801 = vmax.f32 %v769, 0.0
        %v802 = vmax.f32 %v770, 0.0
        %v803 = vmax.f32 %v771, 0.0
        %v804 = vmax.f32 %v772, 0.0
        %v805 = vmax.f32 %v773, 0.0
        %v806 = vmax.f32 %v774, 0.0
        %v807 = vmax.f32 %v775, 0.0
        %v808 = vmax.f32 %v776, 0.0
        %v809 = vmax.f32 %v777, 0.0
        %v810 = vmax.f32 %v778, 0.0
        %v811 = vmax.f32 %v779, 0.0
        %v812 = vmax.f32 %v780, 0.0
        %v813 = vmax.f32 %v781, 0.0
        %v814 = vmax.f32 %v782, 0.0
        %v815 = vmax.f32 %v783, 0.0
        %816 = vst.msk [vmem:[%s253] sm:$0xff] %vm496, %v784
        %817 = vst.msk [vmem:[%s253 + $0x8] sm:$0xff] %vm496, %v785
        %818 = vst.msk [vmem:[%s253 + $0x10] sm:$0xff] %vm496, %v786
        %819 = vst.msk [vmem:[%s253 + $0x18] sm:$0xff] %vm496, %v787
        %820 = vst.msk [vmem:[%s253 + $0x20] sm:$0xff] %vm496, %v788
        %821 = vst.msk [vmem:[%s253 + $0x28] sm:$0xff] %vm496, %v789
        %822 = vst.msk [vmem:[%s253 + $0x30] sm:$0xff] %vm496, %v790
        %823 = vst.msk [vmem:[%s253 + $0x38] sm:$0xff] %vm496, %v791
        %824 = vst.msk [vmem:[%s253 + $0x40] sm:$0xff] %vm496, %v792
        %825 = vst.msk [vmem:[%s253 + $0x48] sm:$0xff] %vm496, %v793
        %826 = vst.msk [vmem:[%s253 + $0x50] sm:$0xff] %vm496, %v794
        %827 = vst.msk [vmem:[%s253 + $0x58] sm:$0xff] %vm496, %v795
        %828 = vst.msk [vmem:[%s253 + $0x60] sm:$0xff] %vm496, %v796
        %829 = vst.msk [vmem:[%s253 + $0x68] sm:$0xff] %vm496, %v797
        %830 = vst.msk [vmem:[%s253 + $0x70] sm:$0xff] %vm496, %v798
        %831 = vst.msk [vmem:[%s253 + $0x78] sm:$0xff] %vm496, %v799
        %832 = vst.msk [vmem:[%s253 + $0x80] sm:$0xff] %vm496, %v800
        %833 = vst.msk [vmem:[%s253 + $0x88] sm:$0xff] %vm496, %v801
        %834 = vst.msk [vmem:[%s253 + $0x90] sm:$0xff] %vm496, %v802
        %835 = vst.msk [vmem:[%s253 + $0x98] sm:$0xff] %vm496, %v803
        %836 = vst.msk [vmem:[%s253 + $0xa0] sm:$0xff] %vm496, %v804
        %837 = vst.msk [vmem:[%s253 + $0xa8] sm:$0xff] %vm496, %v805
        %838 = vst.msk [vmem:[%s253 + $0xb0] sm:$0xff] %vm496, %v806
        %839 = vst.msk [vmem:[%s253 + $0xb8] sm:$0xff] %vm496, %v807
        %840 = vst.msk [vmem:[%s253 + $0xc0] sm:$0xff] %vm496, %v808
        %841 = vst.msk [vmem:[%s253 + $0xc8] sm:$0xff] %vm496, %v809
        %842 = vst.msk [vmem:[%s253 + $0xd0] sm:$0xff] %vm496, %v810
        %843 = vst.msk [vmem:[%s253 + $0xd8] sm:$0xff] %vm496, %v811
        %844 = vst.msk [vmem:[%s253 + $0xe0] sm:$0xff] %vm496, %v812
        %845 = vst.msk [vmem:[%s253 + $0xe8] sm:$0xff] %vm496, %v813
        %846 = vst.msk [vmem:[%s253 + $0xf0] sm:$0xff] %vm496, %v814
        %847 = vst.msk [vmem:[%s253 + $0xf8] sm:$0xff] %vm496, %v815
        %s848 = sand.u32 %s156, 1
        %s849 = sand.u32 %s156, 1
        %s850 = smul.addr %s849, 256
        %s851 = scalar_lea.vmem [#allocation2], %s850
        // Predicated region
        $region45: #{innernet_forward.7} parent=43 // pred_check
          %p852 = pneg %p166
        $region46: #{innernet_forward.7} parent=43 // pred_check_branch
          %854 = sbr.rel (%p852) target = $region48
        $region47: #{innernet_forward.7} parent=43 // pred_region
          %s855 = smul.u32 32, %s17
          %s856 = ssub.s32 125, %s855
          %p857 = scmp.lt.s32.totalorder %s856, 32
          %s858 = scalar_select %p857, %s856, 32
          %s859 = smul.u32 128, %s858
          %p860 = scmp.ne.s32.totalorder 0, %s859
          %s861 = smul.addr %s855, 8
          %s862 = scalar_lea.vmem %s6, %s861
          // Predicated region
          $region49: #{innernet_forward.7} parent=47 // pred_check
            %p863 = pneg %p860
          $region50: #{innernet_forward.7} parent=47 // pred_check_branch
            %865 = sbr.rel (%p863) target = $region52
          $region51: #{innernet_forward.7} parent=47 // pred_region
            // Predicated region
            $region53: #{innernet_forward.7} parent=51 // pred_check
              _
            $region54: #{innernet_forward.7} parent=51 // pred_check_branch
              %867 = sbr.rel (0) target = $region56
            $region55: #{innernet_forward.7} parent=51 // pred_region
              // Predicated region
              $region75: #{innernet_forward.7} parent=55 // pred_check
                _
              $region76: #{innernet_forward.7} parent=55 // pred_check_branch
                %978 = sbr.rel (0) target = $region78
              $region77: #{innernet_forward.7} parent=55 // pred_region
                %s979 = sshrl.u32 %s858, 5
                // While loop
                $region79: #{innernet_forward.7} parent=77 // loop_pre_header
                  _
                $region80: #{innernet_forward.7} parent=77 // loop_header
                  %s981 = sphi 0, %s983
                  %p982 = scmp.ge.s32.totalorder %s981, %s979
                  %s986 = sphi 0, %s1055
                  %s987 = sphi %s851, %s1058
                  %s988 = sphi %s862, %s1059
                $region81: #{innernet_forward.7} parent=77 // loop_header_branch
                  %985 = sbr.rel (%p982) target = $region85
                $region82: #{innernet_forward.7} parent=77 // loop_body
                  %v989 = vld [vmem:[%s987] sm:$0xff]
                  %990 = vst [vmem:[%s988] sm:$0xff] %v989
                  %v991 = vld [vmem:[%s987 + $0x8] sm:$0xff]
                  %992 = vst [vmem:[%s988 + $0x8] sm:$0xff] %v991
                  %v993 = vld [vmem:[%s987 + $0x10] sm:$0xff]
                  %994 = vst [vmem:[%s988 + $0x10] sm:$0xff] %v993
                  %v995 = vld [vmem:[%s987 + $0x18] sm:$0xff]
                  %996 = vst [vmem:[%s988 + $0x18] sm:$0xff] %v995
                  %v997 = vld [vmem:[%s987 + $0x20] sm:$0xff]
                  %998 = vst [vmem:[%s988 + $0x20] sm:$0xff] %v997
                  %v999 = vld [vmem:[%s987 + $0x28] sm:$0xff]
                  %1000 = vst [vmem:[%s988 + $0x28] sm:$0xff] %v999
                  %v1001 = vld [vmem:[%s987 + $0x30] sm:$0xff]
                  %1002 = vst [vmem:[%s988 + $0x30] sm:$0xff] %v1001
                  %v1003 = vld [vmem:[%s987 + $0x38] sm:$0xff]
                  %1004 = vst [vmem:[%s988 + $0x38] sm:$0xff] %v1003
                  %v1005 = vld [vmem:[%s987 + $0x40] sm:$0xff]
                  %1006 = vst [vmem:[%s988 + $0x40] sm:$0xff] %v1005
                  %v1007 = vld [vmem:[%s987 + $0x48] sm:$0xff]
                  %1008 = vst [vmem:[%s988 + $0x48] sm:$0xff] %v1007
                  %v1009 = vld [vmem:[%s987 + $0x50] sm:$0xff]
                  %1010 = vst [vmem:[%s988 + $0x50] sm:$0xff] %v1009
                  %v1011 = vld [vmem:[%s987 + $0x58] sm:$0xff]
                  %1012 = vst [vmem:[%s988 + $0x58] sm:$0xff] %v1011
                  %v1013 = vld [vmem:[%s987 + $0x60] sm:$0xff]
                  %1014 = vst [vmem:[%s988 + $0x60] sm:$0xff] %v1013
                  %v1015 = vld [vmem:[%s987 + $0x68] sm:$0xff]
                  %1016 = vst [vmem:[%s988 + $0x68] sm:$0xff] %v1015
                  %v1017 = vld [vmem:[%s987 + $0x70] sm:$0xff]
                  %1018 = vst [vmem:[%s988 + $0x70] sm:$0xff] %v1017
                  %v1019 = vld [vmem:[%s987 + $0x78] sm:$0xff]
                  %1020 = vst [vmem:[%s988 + $0x78] sm:$0xff] %v1019
                  %v1021 = vld [vmem:[%s987 + $0x80] sm:$0xff]
                  %1022 = vst [vmem:[%s988 + $0x80] sm:$0xff] %v1021
                  %v1023 = vld [vmem:[%s987 + $0x88] sm:$0xff]
                  %1024 = vst [vmem:[%s988 + $0x88] sm:$0xff] %v1023
                  %v1025 = vld [vmem:[%s987 + $0x90] sm:$0xff]
                  %1026 = vst [vmem:[%s988 + $0x90] sm:$0xff] %v1025
                  %v1027 = vld [vmem:[%s987 + $0x98] sm:$0xff]
                  %1028 = vst [vmem:[%s988 + $0x98] sm:$0xff] %v1027
                  %v1029 = vld [vmem:[%s987 + $0xa0] sm:$0xff]
                  %1030 = vst [vmem:[%s988 + $0xa0] sm:$0xff] %v1029
                  %v1031 = vld [vmem:[%s987 + $0xa8] sm:$0xff]
                  %1032 = vst [vmem:[%s988 + $0xa8] sm:$0xff] %v1031
                  %v1033 = vld [vmem:[%s987 + $0xb0] sm:$0xff]
                  %1034 = vst [vmem:[%s988 + $0xb0] sm:$0xff] %v1033
                  %v1035 = vld [vmem:[%s987 + $0xb8] sm:$0xff]
                  %1036 = vst [vmem:[%s988 + $0xb8] sm:$0xff] %v1035
                  %v1037 = vld [vmem:[%s987 + $0xc0] sm:$0xff]
                  %1038 = vst [vmem:[%s988 + $0xc0] sm:$0xff] %v1037
                  %v1039 = vld [vmem:[%s987 + $0xc8] sm:$0xff]
                  %1040 = vst [vmem:[%s988 + $0xc8] sm:$0xff] %v1039
                  %v1041 = vld [vmem:[%s987 + $0xd0] sm:$0xff]
                  %1042 = vst [vmem:[%s988 + $0xd0] sm:$0xff] %v1041
                  %v1043 = vld [vmem:[%s987 + $0xd8] sm:$0xff]
                  %1044 = vst [vmem:[%s988 + $0xd8] sm:$0xff] %v1043
                  %v1045 = vld [vmem:[%s987 + $0xe0] sm:$0xff]
                  %1046 = vst [vmem:[%s988 + $0xe0] sm:$0xff] %v1045
                  %v1047 = vld [vmem:[%s987 + $0xe8] sm:$0xff]
                  %1048 = vst [vmem:[%s988 + $0xe8] sm:$0xff] %v1047
                  %v1049 = vld [vmem:[%s987 + $0xf0] sm:$0xff]
                  %1050 = vst [vmem:[%s988 + $0xf0] sm:$0xff] %v1049
                  %v1051 = vld [vmem:[%s987 + $0xf8] sm:$0xff]
                  %1052 = vst [vmem:[%s988 + $0xf8] sm:$0xff] %v1051
                  %s1053 = sadd.s32 1, %s986
                  %p1054 = scmp.ge.s32.totalorder %s1053, %s979
                  %s1055 = scalar_select %p1054, 0, %s1053
                  %s1056 = smul.u32 %s1055, 256
                  %s1057 = smul.u32 %s1055, 256
                  %s1058 = scalar_lea.vmem %s851, %s1056 [#allocation2]
                  %s1059 = scalar_lea.vmem %s862, %s1057
                $region83: #{innernet_forward.7} parent=77 // loop_footer
                  %s983 = sadd.s32 %s981, 1
                $region84: #{innernet_forward.7} parent=77 // loop_footer_branch
                  %980 = sbr.rel target = $region80
                $region85: #{innernet_forward.7} parent=77 // loop_exit
                  _
                %s1060 = sshrl.u32 %s858, 5
                %s1061 = sand.u32 %s858, 31
                %s1062 = smul.u32 %s1060, 32
                %s1063 = smul.u32 8, %s1062
                %s1064 = scalar_lea.vmem %s851, %s1063 [#allocation2]
                %s1065 = smul.u32 8, %s1062
                %s1066 = scalar_lea.vmem %s862, %s1065
                // While loop
                $region86: #{innernet_forward.7} parent=77 // loop_pre_header
                  _
                $region87: #{innernet_forward.7} parent=77 // loop_header
                  %s1068 = sphi 0, %s1070
                  %p1069 = scmp.ge.s32.totalorder %s1068, %s1061
                  %s1073 = sphi 0, %s1080
                  %s1074 = sphi %s1064, %s1083
                  %s1075 = sphi %s1066, %s1084
                $region88: #{innernet_forward.7} parent=77 // loop_header_branch
                  %1072 = sbr.rel (%p1069) target = $region92
                $region89: #{innernet_forward.7} parent=77 // loop_body
                  %v1076 = vld [vmem:[%s1074] sm:$0xff]
                  %1077 = vst [vmem:[%s1075] sm:$0xff] %v1076
                  %s1078 = sadd.s32 1, %s1073
                  %p1079 = scmp.ge.s32.totalorder %s1078, %s1061
                  %s1080 = scalar_select %p1079, 0, %s1078
                  %s1081 = smul.u32 %s1080, 8
                  %s1082 = smul.u32 %s1080, 8
                  %s1083 = scalar_lea.vmem %s1064, %s1081 [#allocation2]
                  %s1084 = scalar_lea.vmem %s1066, %s1082
                $region90: #{innernet_forward.7} parent=77 // loop_footer
                  %s1070 = sadd.s32 %s1068, 1
                $region91: #{innernet_forward.7} parent=77 // loop_footer_branch
                  %1067 = sbr.rel target = $region87
                $region92: #{innernet_forward.7} parent=77 // loop_exit
                  _
              $region78: #{innernet_forward.7} parent=55 // pred_fallthru
                _
              // Predicated region
              $region93: #{innernet_forward.7} parent=55 // pred_check
                _
              $region94: #{innernet_forward.7} parent=55 // pred_check_branch
                %1086 = sbr.rel target = $region96
              $region95: #{innernet_forward.7} parent=55 // pred_region
                _
              $region96: #{innernet_forward.7} parent=55 // pred_fallthru
                _
            $region56: #{innernet_forward.7} parent=51 // pred_fallthru
              _
            // Predicated region
            $region57: #{innernet_forward.7} parent=51 // pred_check
              _
            $region58: #{innernet_forward.7} parent=51 // pred_check_branch
              %869 = sbr.rel target = $region60
            $region59: #{innernet_forward.7} parent=51 // pred_region
              %s871 = sshrl.u32 %s858, 5
              // While loop
              $region61: #{innernet_forward.7} parent=59 // loop_pre_header
                _
              $region62: #{innernet_forward.7} parent=59 // loop_header
                %s873 = sphi 0, %s875
                %p874 = scmp.ge.s32.totalorder %s873, %s871
                %s878 = sphi 0, %s947
                %s879 = sphi %s851, %s950
                %s880 = sphi %s862, %s951
              $region63: #{innernet_forward.7} parent=59 // loop_header_branch
                %877 = sbr.rel (%p874) target = $region67
              $region64: #{innernet_forward.7} parent=59 // loop_body
                %v881 = vld [vmem:[%s879] sm:$0xff]
                %882 = vst [vmem:[%s880] sm:$0xff] %v881
                %v883 = vld [vmem:[%s879 + $0x8] sm:$0xff]
                %884 = vst [vmem:[%s880 + $0x8] sm:$0xff] %v883
                %v885 = vld [vmem:[%s879 + $0x10] sm:$0xff]
                %886 = vst [vmem:[%s880 + $0x10] sm:$0xff] %v885
                %v887 = vld [vmem:[%s879 + $0x18] sm:$0xff]
                %888 = vst [vmem:[%s880 + $0x18] sm:$0xff] %v887
                %v889 = vld [vmem:[%s879 + $0x20] sm:$0xff]
                %890 = vst [vmem:[%s880 + $0x20] sm:$0xff] %v889
                %v891 = vld [vmem:[%s879 + $0x28] sm:$0xff]
                %892 = vst [vmem:[%s880 + $0x28] sm:$0xff] %v891
                %v893 = vld [vmem:[%s879 + $0x30] sm:$0xff]
                %894 = vst [vmem:[%s880 + $0x30] sm:$0xff] %v893
                %v895 = vld [vmem:[%s879 + $0x38] sm:$0xff]
                %896 = vst [vmem:[%s880 + $0x38] sm:$0xff] %v895
                %v897 = vld [vmem:[%s879 + $0x40] sm:$0xff]
                %898 = vst [vmem:[%s880 + $0x40] sm:$0xff] %v897
                %v899 = vld [vmem:[%s879 + $0x48] sm:$0xff]
                %900 = vst [vmem:[%s880 + $0x48] sm:$0xff] %v899
                %v901 = vld [vmem:[%s879 + $0x50] sm:$0xff]
                %902 = vst [vmem:[%s880 + $0x50] sm:$0xff] %v901
                %v903 = vld [vmem:[%s879 + $0x58] sm:$0xff]
                %904 = vst [vmem:[%s880 + $0x58] sm:$0xff] %v903
                %v905 = vld [vmem:[%s879 + $0x60] sm:$0xff]
                %906 = vst [vmem:[%s880 + $0x60] sm:$0xff] %v905
                %v907 = vld [vmem:[%s879 + $0x68] sm:$0xff]
                %908 = vst [vmem:[%s880 + $0x68] sm:$0xff] %v907
                %v909 = vld [vmem:[%s879 + $0x70] sm:$0xff]
                %910 = vst [vmem:[%s880 + $0x70] sm:$0xff] %v909
                %v911 = vld [vmem:[%s879 + $0x78] sm:$0xff]
                %912 = vst [vmem:[%s880 + $0x78] sm:$0xff] %v911
                %v913 = vld [vmem:[%s879 + $0x80] sm:$0xff]
                %914 = vst [vmem:[%s880 + $0x80] sm:$0xff] %v913
                %v915 = vld [vmem:[%s879 + $0x88] sm:$0xff]
                %916 = vst [vmem:[%s880 + $0x88] sm:$0xff] %v915
                %v917 = vld [vmem:[%s879 + $0x90] sm:$0xff]
                %918 = vst [vmem:[%s880 + $0x90] sm:$0xff] %v917
                %v919 = vld [vmem:[%s879 + $0x98] sm:$0xff]
                %920 = vst [vmem:[%s880 + $0x98] sm:$0xff] %v919
                %v921 = vld [vmem:[%s879 + $0xa0] sm:$0xff]
                %922 = vst [vmem:[%s880 + $0xa0] sm:$0xff] %v921
                %v923 = vld [vmem:[%s879 + $0xa8] sm:$0xff]
                %924 = vst [vmem:[%s880 + $0xa8] sm:$0xff] %v923
                %v925 = vld [vmem:[%s879 + $0xb0] sm:$0xff]
                %926 = vst [vmem:[%s880 + $0xb0] sm:$0xff] %v925
                %v927 = vld [vmem:[%s879 + $0xb8] sm:$0xff]
                %928 = vst [vmem:[%s880 + $0xb8] sm:$0xff] %v927
                %v929 = vld [vmem:[%s879 + $0xc0] sm:$0xff]
                %930 = vst [vmem:[%s880 + $0xc0] sm:$0xff] %v929
                %v931 = vld [vmem:[%s879 + $0xc8] sm:$0xff]
                %932 = vst [vmem:[%s880 + $0xc8] sm:$0xff] %v931
                %v933 = vld [vmem:[%s879 + $0xd0] sm:$0xff]
                %934 = vst [vmem:[%s880 + $0xd0] sm:$0xff] %v933
                %v935 = vld [vmem:[%s879 + $0xd8] sm:$0xff]
                %936 = vst [vmem:[%s880 + $0xd8] sm:$0xff] %v935
                %v937 = vld [vmem:[%s879 + $0xe0] sm:$0xff]
                %938 = vst [vmem:[%s880 + $0xe0] sm:$0xff] %v937
                %v939 = vld [vmem:[%s879 + $0xe8] sm:$0xff]
                %940 = vst [vmem:[%s880 + $0xe8] sm:$0xff] %v939
                %v941 = vld [vmem:[%s879 + $0xf0] sm:$0xff]
                %942 = vst [vmem:[%s880 + $0xf0] sm:$0xff] %v941
                %v943 = vld [vmem:[%s879 + $0xf8] sm:$0xff]
                %944 = vst [vmem:[%s880 + $0xf8] sm:$0xff] %v943
                %s945 = sadd.s32 1, %s878
                %p946 = scmp.ge.s32.totalorder %s945, %s871
                %s947 = scalar_select %p946, 0, %s945
                %s948 = smul.u32 %s947, 256
                %s949 = smul.u32 %s947, 256
                %s950 = scalar_lea.vmem %s851, %s948 [#allocation2]
                %s951 = scalar_lea.vmem %s862, %s949
              $region65: #{innernet_forward.7} parent=59 // loop_footer
                %s875 = sadd.s32 %s873, 1
              $region66: #{innernet_forward.7} parent=59 // loop_footer_branch
                %872 = sbr.rel target = $region62
              $region67: #{innernet_forward.7} parent=59 // loop_exit
                _
              %s952 = sshrl.u32 %s858, 5
              %s953 = sand.u32 %s858, 31
              %s954 = smul.u32 %s952, 32
              %s955 = smul.u32 8, %s954
              %s956 = scalar_lea.vmem %s851, %s955 [#allocation2]
              %s957 = smul.u32 8, %s954
              %s958 = scalar_lea.vmem %s862, %s957
              // While loop
              $region68: #{innernet_forward.7} parent=59 // loop_pre_header
                _
              $region69: #{innernet_forward.7} parent=59 // loop_header
                %s960 = sphi 0, %s962
                %p961 = scmp.ge.s32.totalorder %s960, %s953
                %s965 = sphi 0, %s972
                %s966 = sphi %s956, %s975
                %s967 = sphi %s958, %s976
              $region70: #{innernet_forward.7} parent=59 // loop_header_branch
                %964 = sbr.rel (%p961) target = $region74
              $region71: #{innernet_forward.7} parent=59 // loop_body
                %v968 = vld [vmem:[%s966] sm:$0xff]
                %969 = vst [vmem:[%s967] sm:$0xff] %v968
                %s970 = sadd.s32 1, %s965
                %p971 = scmp.ge.s32.totalorder %s970, %s953
                %s972 = scalar_select %p971, 0, %s970
                %s973 = smul.u32 %s972, 8
                %s974 = smul.u32 %s972, 8
                %s975 = scalar_lea.vmem %s956, %s973 [#allocation2]
                %s976 = scalar_lea.vmem %s958, %s974
              $region72: #{innernet_forward.7} parent=59 // loop_footer
                %s962 = sadd.s32 %s960, 1
              $region73: #{innernet_forward.7} parent=59 // loop_footer_branch
                %959 = sbr.rel target = $region69
              $region74: #{innernet_forward.7} parent=59 // loop_exit
                _
            $region60: #{innernet_forward.7} parent=51 // pred_fallthru
              _
          $region52: #{innernet_forward.7} parent=47 // pred_fallthru
            _
          %1087 = vnop
        $region48: #{innernet_forward.7} parent=43 // pred_fallthru
          _
      $region44: #{innernet_forward.7} parent=5 // pred_fallthru
        _
      %p1088 = scmp.le.s32.totalorder 2, %s12
      // Predicated region
      $region97: #{innernet_forward.7} parent=5 // pred_check
        %p1089 = pneg %p1088
      $region98: #{innernet_forward.7} parent=5 // pred_check_branch
        %1091 = sbr.rel (%p1089) target = $region100
      $region99: #{innernet_forward.7} parent=5 // pred_region
        %s1092 = ssub.s32 %s12, 2
        // Predicated region
        $region101: #{innernet_forward.7} parent=99 // pred_check
          %p1093 = pneg %p172
        $region102: #{innernet_forward.7} parent=99 // pred_check_branch
          %1095 = sbr.rel (%p1093) target = $region104
        $region103: #{innernet_forward.7} parent=99 // pred_region
          %s1096 = sand.u32 %s157, 1
          %s1097 = sand.u32 %s157, 1
          %s1098 = smul.addr %s1097, 256
          %s1099 = scalar_lea.vmem [#allocation2], %s1098
        $region104: #{innernet_forward.7} parent=99 // pred_fallthru
          _
      $region100: #{innernet_forward.7} parent=5 // pred_fallthru
        _
    $region6: #{innernet_forward.7} parent=1 // loop_footer
      %s16 = sadd.s32 1, %s12
    $region7: #{innernet_forward.7} parent=1 // loop_footer_branch
      %11 = sbr.rel target = $region3
    $region8: #{innernet_forward.7} parent=1 // loop_exit
      _

// kernel: innernet_forward.4
$region0: #{innernet_forward.4}
  #allocation0 [shape = 'u32[]', space=smem, size = 0x4, offset = 0x4, fixed_abs, tag = 'smem constant byte address 0x4 - core index']
  #allocation1 [shape = 'u32[144,128]{1,0:T(1,128)}', space=vmem, size = 0x12000, scoped, tag = 'internal scratch']
  %s0 = inlined_call_operand.vmem [shape: f32[1000,32], index: 0, kind: input, shape index: {}]
  %s1 = inlined_call_operand.vmem [shape: bf16[32,64], index: 1, kind: input, shape index: {}]
  %s2 = inlined_call_operand.vmem [shape: bf16[1000,64], index: 2, kind: output, shape index: {0}]
  %s3 = inlined_call_operand.vmem [shape: f32[1,64], index: 3, kind: output, shape index: {1}]
  %s4 = inlined_call_operand.vmem [shape: f32[1,64], index: 4, kind: output, shape index: {2}]
  %5 = xla_tuple %s2, %s3, %s4
  %s6 = sld [smem:[#allocation0]]
  $region105: #{innernet_forward.4} parent=0
    _
  %s8 = ssub.s32 1, %s6
  %s9 = scalar_select 0, %s8, %s6
  $region1: #{innernet_forward.4} parent=0
    #allocation2 [shape = 'u8[131072]{0}', space=vmem, size = 0x20000, scoped, tag = 'output window, operand 0']
    loop: start=0, step=1, limit=6
    $region2: #{innernet_forward.4} parent=1 // loop_pre_header
      _
    $region3: #{innernet_forward.4} parent=1 // loop_header
      %s11 = sphi 0, %s15
      %p12 = scmp.ge.s32.totalorder %s11, 6
      %s21 = sphi 0, %s23
      %s24 = sphi 0, %s21
      %s25 = sphi 0, %s24
      %s41 = sphi 0, %s25
      %s45 = sphi 0, %s45
      %s47 = sphi 0, %s45
      %s48 = sphi 0, %s47
      %s62 = sphi 0, %s48
      %s68 = sphi 0, %s70
      %s71 = sphi 0, %s68
      %s72 = sphi 0, %s71
      %s88 = sphi 0, %s72
      %s92 = sphi 0, %s92
      %s94 = sphi 0, %s92
      %s95 = sphi 0, %s94
      %s109 = sphi 0, %s95
      %s113 = sphi 0, %s113
      %s115 = sphi 0, %s113
      %s116 = sphi 0, %s115
      %s130 = sphi 0, %s116
    $region4: #{innernet_forward.4} parent=1 // loop_header_branch
      %14 = sbr.rel (%p12) target = $region8
    $region5: #{innernet_forward.4} parent=1 // loop_body
      %s16 = ssub.s32 %s11, 1
      %s17 = ssub.s32 %s11, 2
      %s18 = sadd.s32 %s11, 1
      %s19 = ssub.s32 %s11, %s18
      %p20 = scmp.eq.s32.totalorder %s19, 0
      %s22 = sadd.s32 %s21, 1
      %s23 = scalar_select %p20, %s21, %s22
      %p26 = pneg %p20
      %p27 = scmp.eq.s32.totalorder %s11, 3
      %p28 = por %p26, %p27
      %p29 = scmp.ne.s32.totalorder %s21, %s24
      %p30 = scmp.eq.s32.totalorder %s11, 0
      %p31 = por %p29, %p30
      %p32 = scmp.ne.s32.totalorder %s21, %s24
      %p33 = scmp.eq.s32.totalorder %s16, 3
      %p34 = por %p32, %p33
      %p35 = scmp.ne.s32.totalorder %s24, %s25
      %p36 = scmp.eq.s32.totalorder %s16, 0
      %p37 = por %p35, %p36
      %p38 = scmp.ne.s32.totalorder %s24, %s25
      %p39 = scmp.eq.s32.totalorder %s17, 3
      %p40 = por %p38, %p39
      %p42 = scmp.ne.s32.totalorder %s25, %s41
      %p43 = scmp.eq.s32.totalorder %s17, 0
      %p44 = por %p42, %p43
      %s46 = sadd.s32 %s45, 1
      %p49 = scmp.eq.s32.totalorder %s11, 3
      %p50 = scmp.ne.s32.totalorder %s45, %s47
      %p51 = scmp.eq.s32.totalorder %s11, 0
      %p52 = por %p50, %p51
      %p53 = scmp.ne.s32.totalorder %s45, %s47
      %p54 = scmp.eq.s32.totalorder %s16, 3
      %p55 = por %p53, %p54
      %p56 = scmp.ne.s32.totalorder %s47, %s48
      %p57 = scmp.eq.s32.totalorder %s16, 0
      %p58 = por %p56, %p57
      %p59 = scmp.ne.s32.totalorder %s47, %s48
      %p60 = scmp.eq.s32.totalorder %s17, 3
      %p61 = por %p59, %p60
      %p63 = scmp.ne.s32.totalorder %s48, %s62
      %p64 = scmp.eq.s32.totalorder %s17, 0
      %p65 = por %p63, %p64
      %s66 = ssub.s32 %s11, %s18
      %p67 = scmp.eq.s32.totalorder %s66, 0
      %s69 = sadd.s32 %s68, 1
      %s70 = scalar_select %p67, %s68, %s69
      %p73 = pneg %p67
      %p74 = scmp.eq.s32.totalorder %s11, 3
      %p75 = por %p73, %p74
      %p76 = scmp.ne.s32.totalorder %s68, %s71
      %p77 = scmp.eq.s32.totalorder %s11, 0
      %p78 = por %p76, %p77
      %p79 = scmp.ne.s32.totalorder %s68, %s71
      %p80 = scmp.eq.s32.totalorder %s16, 3
      %p81 = por %p79, %p80
      %p82 = scmp.ne.s32.totalorder %s71, %s72
      %p83 = scmp.eq.s32.totalorder %s16, 0
      %p84 = por %p82, %p83
      %p85 = scmp.ne.s32.totalorder %s71, %s72
      %p86 = scmp.eq.s32.totalorder %s17, 3
      %p87 = por %p85, %p86
      %p89 = scmp.ne.s32.totalorder %s72, %s88
      %p90 = scmp.eq.s32.totalorder %s17, 0
      %p91 = por %p89, %p90
      %s93 = sadd.s32 %s92, 1
      %p96 = scmp.eq.s32.totalorder %s11, 3
      %p97 = scmp.ne.s32.totalorder %s92, %s94
      %p98 = scmp.eq.s32.totalorder %s11, 0
      %p99 = por %p97, %p98
      %p100 = scmp.ne.s32.totalorder %s92, %s94
      %p101 = scmp.eq.s32.totalorder %s16, 3
      %p102 = por %p100, %p101
      %p103 = scmp.ne.s32.totalorder %s94, %s95
      %p104 = scmp.eq.s32.totalorder %s16, 0
      %p105 = por %p103, %p104
      %p106 = scmp.ne.s32.totalorder %s94, %s95
      %p107 = scmp.eq.s32.totalorder %s17, 3
      %p108 = por %p106, %p107
      %p110 = scmp.ne.s32.totalorder %s95, %s109
      %p111 = scmp.eq.s32.totalorder %s17, 0
      %p112 = por %p110, %p111
      %s114 = sadd.s32 %s113, 1
      %p117 = scmp.eq.s32.totalorder %s11, 3
      %p118 = scmp.ne.s32.totalorder %s113, %s115
      %p119 = scmp.eq.s32.totalorder %s11, 0
      %p120 = por %p118, %p119
      %p121 = scmp.ne.s32.totalorder %s113, %s115
      %p122 = scmp.eq.s32.totalorder %s16, 3
      %p123 = por %p121, %p122
      %p124 = scmp.ne.s32.totalorder %s115, %s116
      %p125 = scmp.eq.s32.totalorder %s16, 0
      %p126 = por %p124, %p125
      %p127 = scmp.ne.s32.totalorder %s115, %s116
      %p128 = scmp.eq.s32.totalorder %s17, 3
      %p129 = por %p127, %p128
      %p131 = scmp.ne.s32.totalorder %s116, %s130
      %p132 = scmp.eq.s32.totalorder %s17, 0
      %p133 = por %p131, %p132
      %p134 = scmp.le.s32.totalorder 1, %s11
      %p135 = scmp.lt.s32.totalorder %s11, 5
      %p136 = pnand %p134, %p135
      %p137 = pneg %p136
      // Predicated region
      $region9: #{innernet_forward.4} parent=5 // pred_check
        _
      $region10: #{innernet_forward.4} parent=5 // pred_check_branch
        %139 = sbr.rel (%p136) target = $region12
      $region11: #{innernet_forward.4} parent=5 // pred_region
        %s140 = ssub.s32 %s11, 1
        // Predicated region
        $region13: #{innernet_forward.4} parent=11 // pred_check
          %p141 = pneg %p58
        $region14: #{innernet_forward.4} parent=11 // pred_check_branch
          %143 = sbr.rel (%p141) target = $region16
        $region15: #{innernet_forward.4} parent=11 // pred_region
          _
        $region16: #{innernet_forward.4} parent=11 // pred_fallthru
          _
      $region12: #{innernet_forward.4} parent=5 // pred_fallthru
        _
      %p144 = scmp.lt.s32.totalorder %s11, 4
      // Predicated region
      $region17: #{innernet_forward.4} parent=5 // pred_check
        %p145 = pneg %p144
      $region18: #{innernet_forward.4} parent=5 // pred_check_branch
        %147 = sbr.rel (%p145) target = $region20
      $region19: #{innernet_forward.4} parent=5 // pred_region
        // Predicated region
        $region21: #{innernet_forward.4} parent=19 // pred_check
          %p148 = pneg %p31
        $region22: #{innernet_forward.4} parent=19 // pred_check_branch
          %150 = sbr.rel (%p148) target = $region24
        $region23: #{innernet_forward.4} parent=19 // pred_region
          %s151 = smul.u32 32, %s11
          %s152 = ssub.s32 125, %s151
          %p153 = scmp.lt.s32.totalorder %s152, 32
          %s154 = scalar_select %p153, %s152, 32
          %s155 = smul.u32 128, %s154
          %p156 = scmp.lt.s32.totalorder %s151, 124
          %s157 = scalar_select %p156, %s151, 124
          %s158 = smul.addr %s157, 8
          %s159 = scalar_lea.vmem %s0, %s158
          %s160 = smul.u32 32, %s11
          %s161 = ssub.s32 125, %s160
          %p162 = scmp.lt.s32.totalorder %s161, 32
          %s163 = scalar_select %p162, %s161, 32
          %s164 = smul.u32 128, %s163
        $region24: #{innernet_forward.4} parent=19 // pred_fallthru
          _
      $region20: #{innernet_forward.4} parent=5 // pred_fallthru
        _
      %p165 = scmp.le.s32.totalorder 1, %s11
      %p166 = scmp.lt.s32.totalorder %s11, 5
      %p167 = pnand %p165, %p166
      %p168 = pneg %p167
      // Predicated region
      $region25: #{innernet_forward.4} parent=5 // pred_check
        _
      $region26: #{innernet_forward.4} parent=5 // pred_check_branch
        %170 = sbr.rel (%p167) target = $region28
      $region27: #{innernet_forward.4} parent=5 // pred_region
        %s171 = ssub.s32 %s11, 1
        %s172 = smul.u32 32, %s16
        %s173 = ssub.s32 125, %s172
        %p174 = scmp.lt.s32.totalorder %s173, 32
        %s175 = scalar_select %p174, %s173, 32
        %s176 = smul.u32 128, %s175
        %p177 = scmp.lt.s32.totalorder %s172, 124
        %s178 = scalar_select %p177, %s172, 124
        %s179 = smul.addr %s178, 8
        %s180 = scalar_lea.vmem %s0, %s179
        %p181 = pneg %p37
        %p182 = pneg %p34
        %p183 = pneg %p58
        %p184 = pneg %p55
        %p185 = pneg %p84
        %p186 = pneg %p81
        %s187 = sand.u32 %s71, 1
        %s188 = sand.u32 %s71, 1
        %s189 = smul.addr %s188, 128
        %s190 = scalar_lea.vmem [#allocation2], %s189
        %p191 = pneg %p105
        %p192 = pneg %p102
        %p193 = pneg %p126
        %p194 = pneg %p123
        %s195 = smul.u32 32, %s16
        %s196 = ssub.s32 125, %s195
        %p197 = scmp.lt.s32.totalorder %s196, 32
        %s198 = scalar_select %p197, %s196, 32
        %s199 = smul.u32 128, %s198
        %p200 = scmp.lt.s32.totalorder %s195, 124
        %s201 = scalar_select %p200, %s195, 124
        %s202 = smul.addr %s201, 8
        %s203 = scalar_lea.vmem %s0, %s202
        %s204 = smul.u32 32, %s16
        %s205 = ssub.s32 125, %s204
        %p206 = scmp.lt.s32.totalorder %s205, 32
        %s207 = scalar_select %p206, %s205, 32
        %s208 = smul.u32 128, %s207
        %s209 = smul.u32 32, %s16
        %s210 = ssub.s32 125, %s209
        %p211 = scmp.lt.s32.totalorder %s210, 32
        %s212 = scalar_select %p211, %s210, 32
        %s213 = smul.u32 64, %s212
        %p215 = scmp.eq.s32.totalorder %s16, 0
        // Predicated region
        $region29: #{innernet_forward.4} parent=27 // pred_check
          %p216 = pneg %p215
        $region30: #{innernet_forward.4} parent=27 // pred_check_branch
          %218 = sbr.rel (%p216) target = $region32
        $region31: #{innernet_forward.4} parent=27 // pred_region
          %vm219 = vcmask 516096
          %220 = vst.msk [vmem:[%s3] sm:$0x1] %vm219, 0.0
          %221 = vst.msk [vmem:[%s4] sm:$0x1] %vm219, 0.0
        $region32: #{innernet_forward.4} parent=27 // pred_fallthru
          _
        %v222 = vld [vmem:[%s203] sm:$0xff]
        %v223 = vld [vmem:[%s203 + $0x8] sm:$0xff]
        %v224 = vld [vmem:[%s203 + $0x10] sm:$0xff]
        %v225 = vld [vmem:[%s203 + $0x18] sm:$0xff]
        %v226 = vld [vmem:[%s203 + $0x20] sm:$0xff]
        %v227 = vld [vmem:[%s203 + $0x28] sm:$0xff]
        %v228 = vld [vmem:[%s203 + $0x30] sm:$0xff]
        %v229 = vld [vmem:[%s203 + $0x38] sm:$0xff]
        %v230 = vld [vmem:[%s203 + $0x40] sm:$0xff]
        %v231 = vld [vmem:[%s203 + $0x48] sm:$0xff]
        %v232 = vld [vmem:[%s203 + $0x50] sm:$0xff]
        %v233 = vld [vmem:[%s203 + $0x58] sm:$0xff]
        %v234 = vld [vmem:[%s203 + $0x60] sm:$0xff]
        %v235 = vld [vmem:[%s203 + $0x68] sm:$0xff]
        %v236 = vld [vmem:[%s203 + $0x70] sm:$0xff]
        %v237 = vld [vmem:[%s203 + $0x78] sm:$0xff]
        %v238 = vld [vmem:[%s203 + $0x80] sm:$0xff]
        %v239 = vld [vmem:[%s203 + $0x88] sm:$0xff]
        %v240 = vld [vmem:[%s203 + $0x90] sm:$0xff]
        %v241 = vld [vmem:[%s203 + $0x98] sm:$0xff]
        %v242 = vld [vmem:[%s203 + $0xa0] sm:$0xff]
        %v243 = vld [vmem:[%s203 + $0xa8] sm:$0xff]
        %v244 = vld [vmem:[%s203 + $0xb0] sm:$0xff]
        %v245 = vld [vmem:[%s203 + $0xb8] sm:$0xff]
        %v246 = vld [vmem:[%s203 + $0xc0] sm:$0xff]
        %v247 = vld [vmem:[%s203 + $0xc8] sm:$0xff]
        %v248 = vld [vmem:[%s203 + $0xd0] sm:$0xff]
        %v249 = vld [vmem:[%s203 + $0xd8] sm:$0xff]
        %v250 = vld [vmem:[%s203 + $0xe0] sm:$0xff]
        %v251 = vld [vmem:[%s203 + $0xe8] sm:$0xff]
        %v252 = vld [vmem:[%s203 + $0xf0] sm:$0xff]
        %v253 = vld [vmem:[%s203 + $0xf8] sm:$0xff]
        %s254 = smul.u32 %s16, 256
        %v255 = vlaneseq
        %v256 = vshrl.u32 %v255, 7
        %v257 = vadd.s32 %v256, 8
        %v258 = vadd.s32 %v256, 16
        %v259 = vadd.s32 %v256, 24
        %v260 = vadd.s32 %v256, 32
        %v261 = vadd.s32 %v256, 40
        %v262 = vadd.s32 %v256, 48
        %v263 = vadd.s32 %v256, 56
        %v264 = vadd.s32 %v256, 64
        %v265 = vadd.s32 %v256, 72
        %v266 = vadd.s32 %v256, 80
        %v267 = vadd.s32 %v256, 88
        %v268 = vadd.s32 %v256, 96
        %v269 = vadd.s32 %v256, 104
        %v270 = vadd.s32 %v256, 112
        %v271 = vadd.s32 %v256, 120
        %v272 = vadd.s32 %v256, 128
        %v273 = vadd.s32 %v256, 136
        %v274 = vadd.s32 %v256, 144
        %v275 = vadd.s32 %v256, 152
        %v276 = vadd.s32 %v256, 160
        %v277 = vadd.s32 %v256, 168
        %v278 = vadd.s32 %v256, 176
        %v279 = vadd.s32 %v256, 184
        %v280 = vadd.s32 %v256, 192
        %v281 = vadd.s32 %v256, 200
        %v282 = vadd.s32 %v256, 208
        %v283 = vadd.s32 %v256, 216
        %v284 = vadd.s32 %v256, 224
        %v285 = vadd.s32 %v256, 232
        %v286 = vadd.s32 %v256, 240
        %v287 = vadd.s32 %v256, 248
        %v288 = vstv %s254
        %v289 = vadd.s32 %v288, %v256
        %v290 = vadd.s32 %v288, %v257
        %v291 = vadd.s32 %v288, %v258
        %v292 = vadd.s32 %v288, %v259
        %v293 = vadd.s32 %v288, %v260
        %v294 = vadd.s32 %v288, %v261
        %v295 = vadd.s32 %v288, %v262
        %v296 = vadd.s32 %v288, %v263
        %v297 = vadd.s32 %v288, %v264
        %v298 = vadd.s32 %v288, %v265
        %v299 = vadd.s32 %v288, %v266
        %v300 = vadd.s32 %v288, %v267
        %v301 = vadd.s32 %v288, %v268
        %v302 = vadd.s32 %v288, %v269
        %v303 = vadd.s32 %v288, %v270
        %v304 = vadd.s32 %v288, %v271
        %v305 = vadd.s32 %v288, %v272
        %v306 = vadd.s32 %v288, %v273
        %v307 = vadd.s32 %v288, %v274
        %v308 = vadd.s32 %v288, %v275
        %v309 = vadd.s32 %v288, %v276
        %v310 = vadd.s32 %v288, %v277
        %v311 = vadd.s32 %v288, %v278
        %v312 = vadd.s32 %v288, %v279
        %v313 = vadd.s32 %v288, %v280
        %v314 = vadd.s32 %v288, %v281
        %v315 = vadd.s32 %v288, %v282
        %v316 = vadd.s32 %v288, %v283
        %v317 = vadd.s32 %v288, %v284
        %v318 = vadd.s32 %v288, %v285
        %v319 = vadd.s32 %v288, %v286
        %v320 = vadd.s32 %v288, %v287
        %vm321 = vcmp.lt.s32.totalorder %v289, 1000
        %vm322 = vcmp.lt.s32.totalorder %v290, 1000
        %vm323 = vcmp.lt.s32.totalorder %v291, 1000
        %vm324 = vcmp.lt.s32.totalorder %v292, 1000
        %vm325 = vcmp.lt.s32.totalorder %v293, 1000
        %vm326 = vcmp.lt.s32.totalorder %v294, 1000
        %vm327 = vcmp.lt.s32.totalorder %v295, 1000
        %vm328 = vcmp.lt.s32.totalorder %v296, 1000
        %vm329 = vcmp.lt.s32.totalorder %v297, 1000
        %vm330 = vcmp.lt.s32.totalorder %v298, 1000
        %vm331 = vcmp.lt.s32.totalorder %v299, 1000
        %vm332 = vcmp.lt.s32.totalorder %v300, 1000
        %vm333 = vcmp.lt.s32.totalorder %v301, 1000
        %vm334 = vcmp.lt.s32.totalorder %v302, 1000
        %vm335 = vcmp.lt.s32.totalorder %v303, 1000
        %vm336 = vcmp.lt.s32.totalorder %v304, 1000
        %vm337 = vcmp.lt.s32.totalorder %v305, 1000
        %vm338 = vcmp.lt.s32.totalorder %v306, 1000
        %vm339 = vcmp.lt.s32.totalorder %v307, 1000
        %vm340 = vcmp.lt.s32.totalorder %v308, 1000
        %vm341 = vcmp.lt.s32.totalorder %v309, 1000
        %vm342 = vcmp.lt.s32.totalorder %v310, 1000
        %vm343 = vcmp.lt.s32.totalorder %v311, 1000
        %vm344 = vcmp.lt.s32.totalorder %v312, 1000
        %vm345 = vcmp.lt.s32.totalorder %v313, 1000
        %vm346 = vcmp.lt.s32.totalorder %v314, 1000
        %vm347 = vcmp.lt.s32.totalorder %v315, 1000
        %vm348 = vcmp.lt.s32.totalorder %v316, 1000
        %vm349 = vcmp.lt.s32.totalorder %v317, 1000
        %vm350 = vcmp.lt.s32.totalorder %v318, 1000
        %vm351 = vcmp.lt.s32.totalorder %v319, 1000
        %vm352 = vcmp.lt.s32.totalorder %v320, 1000
        %v353 = vsel %vm321, 1, 0
        %v354 = vsel %vm322, 1, 0
        %v355 = vsel %vm323, 1, 0
        %v356 = vsel %vm324, 1, 0
        %v357 = vsel %vm325, 1, 0
        %v358 = vsel %vm326, 1, 0
        %v359 = vsel %vm327, 1, 0
        %v360 = vsel %vm328, 1, 0
        %v361 = vsel %vm329, 1, 0
        %v362 = vsel %vm330, 1, 0
        %v363 = vsel %vm331, 1, 0
        %v364 = vsel %vm332, 1, 0
        %v365 = vsel %vm333, 1, 0
        %v366 = vsel %vm334, 1, 0
        %v367 = vsel %vm335, 1, 0
        %v368 = vsel %vm336, 1, 0
        %v369 = vsel %vm337, 1, 0
        %v370 = vsel %vm338, 1, 0
        %v371 = vsel %vm339, 1, 0
        %v372 = vsel %vm340, 1, 0
        %v373 = vsel %vm341, 1, 0
        %v374 = vsel %vm342, 1, 0
        %v375 = vsel %vm343, 1, 0
        %v376 = vsel %vm344, 1, 0
        %v377 = vsel %vm345, 1, 0
        %v378 = vsel %vm346, 1, 0
        %v379 = vsel %vm347, 1, 0
        %v380 = vsel %vm348, 1, 0
        %v381 = vsel %vm349, 1, 0
        %v382 = vsel %vm350, 1, 0
        %v383 = vsel %vm351, 1, 0
        %v384 = vsel %vm352, 1, 0
        %vm385 = vcmp.eq.s32.totalorder %v353, 1
        %vm386 = vcmp.eq.s32.totalorder %v354, 1
        %vm387 = vcmp.eq.s32.totalorder %v355, 1
        %vm388 = vcmp.eq.s32.totalorder %v356, 1
        %vm389 = vcmp.eq.s32.totalorder %v357, 1
        %vm390 = vcmp.eq.s32.totalorder %v358, 1
        %vm391 = vcmp.eq.s32.totalorder %v359, 1
        %vm392 = vcmp.eq.s32.totalorder %v360, 1
        %vm393 = vcmp.eq.s32.totalorder %v361, 1
        %vm394 = vcmp.eq.s32.totalorder %v362, 1
        %vm395 = vcmp.eq.s32.totalorder %v363, 1
        %vm396 = vcmp.eq.s32.totalorder %v364, 1
        %vm397 = vcmp.eq.s32.totalorder %v365, 1
        %vm398 = vcmp.eq.s32.totalorder %v366, 1
        %vm399 = vcmp.eq.s32.totalorder %v367, 1
        %vm400 = vcmp.eq.s32.totalorder %v368, 1
        %vm401 = vcmp.eq.s32.totalorder %v369, 1
        %vm402 = vcmp.eq.s32.totalorder %v370, 1
        %vm403 = vcmp.eq.s32.totalorder %v371, 1
        %vm404 = vcmp.eq.s32.totalorder %v372, 1
        %vm405 = vcmp.eq.s32.totalorder %v373, 1
        %vm406 = vcmp.eq.s32.totalorder %v374, 1
        %vm407 = vcmp.eq.s32.totalorder %v375, 1
        %vm408 = vcmp.eq.s32.totalorder %v376, 1
        %vm409 = vcmp.eq.s32.totalorder %v377, 1
        %vm410 = vcmp.eq.s32.totalorder %v378, 1
        %vm411 = vcmp.eq.s32.totalorder %v379, 1
        %vm412 = vcmp.eq.s32.totalorder %v380, 1
        %vm413 = vcmp.eq.s32.totalorder %v381, 1
        %vm414 = vcmp.eq.s32.totalorder %v382, 1
        %vm415 = vcmp.eq.s32.totalorder %v383, 1
        %vm416 = vcmp.eq.s32.totalorder %v384, 1
        %v417 = vsel %vm385, %v222, 0.0
        %v418 = vsel %vm386, %v223, 0.0
        %v419 = vsel %vm387, %v224, 0.0
        %v420 = vsel %vm388, %v225, 0.0
        %v421 = vsel %vm389, %v226, 0.0
        %v422 = vsel %vm390, %v227, 0.0
        %v423 = vsel %vm391, %v228, 0.0
        %v424 = vsel %vm392, %v229, 0.0
        %v425 = vsel %vm393, %v230, 0.0
        %v426 = vsel %vm394, %v231, 0.0
        %v427 = vsel %vm395, %v232, 0.0
        %v428 = vsel %vm396, %v233, 0.0
        %v429 = vsel %vm397, %v234, 0.0
        %v430 = vsel %vm398, %v235, 0.0
        %v431 = vsel %vm399, %v236, 0.0
        %v432 = vsel %vm400, %v237, 0.0
        %v433 = vsel %vm401, %v238, 0.0
        %v434 = vsel %vm402, %v239, 0.0
        %v435 = vsel %vm403, %v240, 0.0
        %v436 = vsel %vm404, %v241, 0.0
        %v437 = vsel %vm405, %v242, 0.0
        %v438 = vsel %vm406, %v243, 0.0
        %v439 = vsel %vm407, %v244, 0.0
        %v440 = vsel %vm408, %v245, 0.0
        %v441 = vsel %vm409, %v246, 0.0
        %v442 = vsel %vm410, %v247, 0.0
        %v443 = vsel %vm411, %v248, 0.0
        %v444 = vsel %vm412, %v249, 0.0
        %v445 = vsel %vm413, %v250, 0.0
        %v446 = vsel %vm414, %v251, 0.0
        %v447 = vsel %vm415, %v252, 0.0
        %v448 = vsel %vm416, %v253, 0.0
        %v449 = vpack.c.bf16 %v418, %v417
        %v450 = vpack.c.bf16 %v420, %v419
        %v451 = vpack.c.bf16 %v422, %v421
        %v452 = vpack.c.bf16 %v424, %v423
        %v453 = vpack.c.bf16 %v426, %v425
        %v454 = vpack.c.bf16 %v428, %v427
        %v455 = vpack.c.bf16 %v430, %v429
        %v456 = vpack.c.bf16 %v432, %v431
        %v457 = vpack.c.bf16 %v434, %v433
        %v458 = vpack.c.bf16 %v436, %v435
        %v459 = vpack.c.bf16 %v438, %v437
        %v460 = vpack.c.bf16 %v440, %v439
        %v461 = vpack.c.bf16 %v442, %v441
        %v462 = vpack.c.bf16 %v444, %v443
        %v463 = vpack.c.bf16 %v446, %v445
        %v464 = vpack.c.bf16 %v448, %v447
        %v465 = vld [vmem:[%s1] sm:$0xf]
        %v466 = vld [vmem:[%s1 + $0x4] sm:$0xf]
        %v467 = vld [vmem:[%s1 + $0x8] sm:$0xf]
        %v468 = vld [vmem:[%s1 + $0xc] sm:$0xf]
        %v473 = vunpack.c.l.b16 %v465
        %v474 = vunpack.c.l.b16 %v466
        %v475 = vunpack.c.l.b16 %v467
        %v476 = vunpack.c.l.b16 %v468
        %v477 = vpack.c.b16 %v474, %v473
        %v478 = vpack.c.b16 %v476, %v475
        %vm481 = vcmask 261120
        %v483 = vsel %vm481, %v449, 0
        %v486 = vsel %vm481, %v450, 0
        %v489 = vsel %vm481, %v451, 0
        %v492 = vsel %vm481, %v452, 0
        %v495 = vsel %vm481, %v453, 0
        %v498 = vsel %vm481, %v454, 0
        %v501 = vsel %vm481, %v455, 0
        %v504 = vsel %vm481, %v456, 0
        %v507 = vsel %vm481, %v457, 0
        %v510 = vsel %vm481, %v458, 0
        %v513 = vsel %vm481, %v459, 0
        %v516 = vsel %vm481, %v460, 0
        %v519 = vsel %vm481, %v461, 0
        %v522 = vsel %vm481, %v462, 0
        %v525 = vsel %vm481, %v463, 0
        %v528 = vsel %vm481, %v464, 0
        %530 = vmatprep.subr.bf16.mxu0 0
        %531 = vmatpush1.bf16.msra.mxu0 %v477
        %532 = vmatprep.subr.bf16.mxu0 0
        %533 = vmatpush1.bf16.msra.mxu0 %v478
        %534 = vmatprep.subr.bf16.mxu0 0
        %535 = vmatpush1.bf16.msra.mxu0 0
        %536 = vmatprep.subr.bf16.mxu0 0
        %537 = vmatpush1.bf16.msra.mxu0 0
        %538 = vmatprep.subr.bf16.mxu0 0
        %539 = vmatpush1.bf16.msra.mxu0 0
        %540 = vmatprep.subr.bf16.mxu0 0
        %541 = vmatpush1.bf16.msra.mxu0 0
        %542 = vmatprep.subr.bf16.mxu0 0
        %543 = vmatpush1.bf16.msra.mxu0 0
        %544 = vmatprep.subr.bf16.mxu0 0
        %545 = vmatpush1.bf16.msra.mxu0 0
        %546 = vmatprep.subr.bf16.mxu0 0
        %547 = vmatpush1.bf16.msra.mxu0 0
        %548 = vmatprep.subr.bf16.mxu0 0
        %549 = vmatpush1.bf16.msra.mxu0 0
        %550 = vmatprep.subr.bf16.mxu0 0
        %551 = vmatpush1.bf16.msra.mxu0 0
        %552 = vmatprep.subr.bf16.mxu0 0
        %553 = vmatpush1.bf16.msra.mxu0 0
        %554 = vmatprep.subr.bf16.mxu0 0
        %555 = vmatpush1.bf16.msra.mxu0 0
        %556 = vmatprep.subr.bf16.mxu0 0
        %557 = vmatpush1.bf16.msra.mxu0 0
        %558 = vmatprep.subr.bf16.mxu0 0
        %559 = vmatpush1.bf16.msra.mxu0 0
        %560 = vmatprep.subr.bf16.mxu0 0
        %561 = vmatpush1.bf16.msra.mxu0 0
        %562 = vmatprep.mubr.bf16.mxu0 0
        %563 = vmatmul.mubr.bf16.gmra.mrb[0].mxu0 %v483
        %v564 = vpop.f32.mrb[0].mxu0
        %v565 = vadd.f32 0.0, %v564
        %v566 = vpop.f32.mrb[0].mxu0
        %v567 = vpop.f32.mrb[0].mxu0
        %v568 = vadd.f32 0.0, %v567
        %v569 = vpop.f32.mrb[0].mxu0
        %570 = vmatprep.mubr.bf16.mxu0 0
        %571 = vmatmul.mubr.bf16.gmra.mrb[0].mxu0 %v486
        %v572 = vpop.f32.mrb[0].mxu0
        %v573 = vadd.f32 0.0, %v572
        %v574 = vpop.f32.mrb[0].mxu0
        %v575 = vpop.f32.mrb[0].mxu0
        %v576 = vadd.f32 0.0, %v575
        %v577 = vpop.f32.mrb[0].mxu0
        %578 = vmatprep.mubr.bf16.mxu0 0
        %579 = vmatmul.mubr.bf16.gmra.mrb[0].mxu0 %v489
        %v580 = vpop.f32.mrb[0].mxu0
        %v581 = vadd.f32 0.0, %v580
        %v582 = vpop.f32.mrb[0].mxu0
        %v583 = vpop.f32.mrb[0].mxu0
        %v584 = vadd.f32 0.0, %v583
        %v585 = vpop.f32.mrb[0].mxu0
        %586 = vmatprep.mubr.bf16.mxu0 0
        %587 = vmatmul.mubr.bf16.gmra.mrb[0].mxu0 %v492
        %v588 = vpop.f32.mrb[0].mxu0
        %v589 = vadd.f32 0.0, %v588
        %v590 = vpop.f32.mrb[0].mxu0
        %v591 = vpop.f32.mrb[0].mxu0
        %v592 = vadd.f32 0.0, %v591
        %v593 = vpop.f32.mrb[0].mxu0
        %594 = vmatprep.mubr.bf16.mxu0 0
        %595 = vmatmul.mubr.bf16.gmra.mrb[0].mxu0 %v495
        %v596 = vpop.f32.mrb[0].mxu0
        %v597 = vadd.f32 0.0, %v596
        %v598 = vpop.f32.mrb[0].mxu0
        %v599 = vpop.f32.mrb[0].mxu0
        %v600 = vadd.f32 0.0, %v599
        %v601 = vpop.f32.mrb[0].mxu0
        %602 = vmatprep.mubr.bf16.mxu0 0
        %603 = vmatmul.mubr.bf16.gmra.mrb[0].mxu0 %v498
        %v604 = vpop.f32.mrb[0].mxu0
        %v605 = vadd.f32 0.0, %v604
        %v606 = vpop.f32.mrb[0].mxu0
        %v607 = vpop.f32.mrb[0].mxu0
        %v608 = vadd.f32 0.0, %v607
        %v609 = vpop.f32.mrb[0].mxu0
        %610 = vmatprep.mubr.bf16.mxu0 0
        %611 = vmatmul.mubr.bf16.gmra.mrb[0].mxu0 %v501
        %v612 = vpop.f32.mrb[0].mxu0
        %v613 = vadd.f32 0.0, %v612
        %v614 = vpop.f32.mrb[0].mxu0
        %v615 = vpop.f32.mrb[0].mxu0
        %v616 = vadd.f32 0.0, %v615
        %v617 = vpop.f32.mrb[0].mxu0
        %618 = vmatprep.mubr.bf16.mxu0 0
        %619 = vmatmul.mubr.bf16.gmra.mrb[0].mxu0 %v504
        %v620 = vpop.f32.mrb[0].mxu0
        %v621 = vadd.f32 0.0, %v620
        %v622 = vpop.f32.mrb[0].mxu0
        %v623 = vpop.f32.mrb[0].mxu0
        %v624 = vadd.f32 0.0, %v623
        %v625 = vpop.f32.mrb[0].mxu0
        %626 = vmatprep.mubr.bf16.mxu0 0
        %627 = vmatmul.mubr.bf16.gmra.mrb[0].mxu0 %v507
        %v628 = vpop.f32.mrb[0].mxu0
        %v629 = vadd.f32 0.0, %v628
        %v630 = vpop.f32.mrb[0].mxu0
        %v631 = vpop.f32.mrb[0].mxu0
        %v632 = vadd.f32 0.0, %v631
        %v633 = vpop.f32.mrb[0].mxu0
        %634 = vmatprep.mubr.bf16.mxu0 0
        %635 = vmatmul.mubr.bf16.gmra.mrb[0].mxu0 %v510
        %v636 = vpop.f32.mrb[0].mxu0
        %v637 = vadd.f32 0.0, %v636
        %v638 = vpop.f32.mrb[0].mxu0
        %v639 = vpop.f32.mrb[0].mxu0
        %v640 = vadd.f32 0.0, %v639
        %v641 = vpop.f32.mrb[0].mxu0
        %642 = vmatprep.mubr.bf16.mxu0 0
        %643 = vmatmul.mubr.bf16.gmra.mrb[0].mxu0 %v513
        %v644 = vpop.f32.mrb[0].mxu0
        %v645 = vadd.f32 0.0, %v644
        %v646 = vpop.f32.mrb[0].mxu0
        %v647 = vpop.f32.mrb[0].mxu0
        %v648 = vadd.f32 0.0, %v647
        %v649 = vpop.f32.mrb[0].mxu0
        %650 = vmatprep.mubr.bf16.mxu0 0
        %651 = vmatmul.mubr.bf16.gmra.mrb[0].mxu0 %v516
        %v652 = vpop.f32.mrb[0].mxu0
        %v653 = vadd.f32 0.0, %v652
        %v654 = vpop.f32.mrb[0].mxu0
        %v655 = vpop.f32.mrb[0].mxu0
        %v656 = vadd.f32 0.0, %v655
        %v657 = vpop.f32.mrb[0].mxu0
        %658 = vmatprep.mubr.bf16.mxu0 0
        %659 = vmatmul.mubr.bf16.gmra.mrb[0].mxu0 %v519
        %v660 = vpop.f32.mrb[0].mxu0
        %v661 = vadd.f32 0.0, %v660
        %v662 = vpop.f32.mrb[0].mxu0
        %v663 = vpop.f32.mrb[0].mxu0
        %v664 = vadd.f32 0.0, %v663
        %v665 = vpop.f32.mrb[0].mxu0
        %666 = vmatprep.mubr.bf16.mxu0 0
        %667 = vmatmul.mubr.bf16.gmra.mrb[0].mxu0 %v522
        %v668 = vpop.f32.mrb[0].mxu0
        %v669 = vadd.f32 0.0, %v668
        %v670 = vpop.f32.mrb[0].mxu0
        %v671 = vpop.f32.mrb[0].mxu0
        %v672 = vadd.f32 0.0, %v671
        %v673 = vpop.f32.mrb[0].mxu0
        %674 = vmatprep.mubr.bf16.mxu0 0
        %675 = vmatmul.mubr.bf16.gmra.mrb[0].mxu0 %v525
        %v676 = vpop.f32.mrb[0].mxu0
        %v677 = vadd.f32 0.0, %v676
        %v678 = vpop.f32.mrb[0].mxu0
        %v679 = vpop.f32.mrb[0].mxu0
        %v680 = vadd.f32 0.0, %v679
        %v681 = vpop.f32.mrb[0].mxu0
        %682 = vmatprep.mubr.bf16.mxu0 0
        %683 = vmatmul.mubr.bf16.gmra.mrb[0].mxu0 %v528
        %v684 = vpop.f32.mrb[0].mxu0
        %v685 = vadd.f32 0.0, %v684
        %v686 = vpop.f32.mrb[0].mxu0
        %v687 = vpop.f32.mrb[0].mxu0
        %v688 = vadd.f32 0.0, %v687
        %v689 = vpop.f32.mrb[0].mxu0
        %690 = vdwg.mxu0
        %v691 = vld [vmem:[%s3] sm:$0x1]
        %vm692 = vcmask 523264
        %v693 = vsel %vm692, %v565, 0.0
        %v694 = vsel %vm692, %v568, 0.0
        %v695 = vadd.f32 %v693, %v694
        %v696 = vsel %vm692, %v573, 0.0
        %v697 = vadd.f32 %v695, %v696
        %v698 = vsel %vm692, %v576, 0.0
        %v699 = vadd.f32 %v697, %v698
        %v700 = vsel %vm692, %v581, 0.0
        %v701 = vadd.f32 %v699, %v700
        %v702 = vsel %vm692, %v584, 0.0
        %v703 = vadd.f32 %v701, %v702
        %v704 = vsel %vm692, %v589, 0.0
        %v705 = vadd.f32 %v703, %v704
        %v706 = vsel %vm692, %v592, 0.0
        %v707 = vadd.f32 %v705, %v706
        %v708 = vsel %vm692, %v597, 0.0
        %v709 = vadd.f32 %v707, %v708
        %v710 = vsel %vm692, %v600, 0.0
        %v711 = vadd.f32 %v709, %v710
        %v712 = vsel %vm692, %v605, 0.0
        %v713 = vadd.f32 %v711, %v712
        %v714 = vsel %vm692, %v608, 0.0
        %v715 = vadd.f32 %v713, %v714
        %v716 = vsel %vm692, %v613, 0.0
        %v717 = vadd.f32 %v715, %v716
        %v718 = vsel %vm692, %v616, 0.0
        %v719 = vadd.f32 %v717, %v718
        %v720 = vsel %vm692, %v621, 0.0
        %v721 = vadd.f32 %v719, %v720
        %v722 = vsel %vm692, %v624, 0.0
        %v723 = vadd.f32 %v721, %v722
        %v724 = vsel %vm692, %v629, 0.0
        %v725 = vadd.f32 %v723, %v724
        %v726 = vsel %vm692, %v632, 0.0
        %v727 = vadd.f32 %v725, %v726
        %v728 = vsel %vm692, %v637, 0.0
        %v729 = vadd.f32 %v727, %v728
        %v730 = vsel %vm692, %v640, 0.0
        %v731 = vadd.f32 %v729, %v730
        %v732 = vsel %vm692, %v645, 0.0
        %v733 = vadd.f32 %v731, %v732
        %v734 = vsel %vm692, %v648, 0.0
        %v735 = vadd.f32 %v733, %v734
        %v736 = vsel %vm692, %v653, 0.0
        %v737 = vadd.f32 %v735, %v736
        %v738 = vsel %vm692, %v656, 0.0
        %v739 = vadd.f32 %v737, %v738
        %v740 = vsel %vm692, %v661, 0.0
        %v741 = vadd.f32 %v739, %v740
        %v742 = vsel %vm692, %v664, 0.0
        %v743 = vadd.f32 %v741, %v742
        %v744 = vsel %vm692, %v669, 0.0
        %v745 = vadd.f32 %v743, %v744
        %v746 = vsel %vm692, %v672, 0.0
        %v747 = vadd.f32 %v745, %v746
        %v748 = vsel %vm692, %v677, 0.0
        %v749 = vadd.f32 %v747, %v748
        %v750 = vsel %vm692, %v680, 0.0
        %v751 = vadd.f32 %v749, %v750
        %v752 = vsel %vm692, %v685, 0.0
        %v753 = vadd.f32 %v751, %v752
        %v754 = vsel %vm692, %v688, 0.0
        %v755 = vadd.f32 %v753, %v754
        %v756 = vrot.slane %v755, 4
        %v757 = vadd.f32 %v755, %v756
        %v758 = vrot.slane %v757, 2
        %v759 = vadd.f32 %v757, %v758
        %v760 = vrot.slane %v759, 1
        %v761 = vadd.f32 %v759, %v760
        %v762 = vadd.f32 %v691, %v761
        %vm763 = vcmask 516096
        %764 = vst.msk [vmem:[%s3] sm:$0x1] %vm763, %v762
        %v765 = vld [vmem:[%s4] sm:$0x1]
        %v766 = vmul.f32 %v565, %v565
        %v767 = vmul.f32 %v568, %v568
        %v768 = vmul.f32 %v573, %v573
        %v769 = vmul.f32 %v576, %v576
        %v770 = vmul.f32 %v581, %v581
        %v771 = vmul.f32 %v584, %v584
        %v772 = vmul.f32 %v589, %v589
        %v773 = vmul.f32 %v592, %v592
        %v774 = vmul.f32 %v597, %v597
        %v775 = vmul.f32 %v600, %v600
        %v776 = vmul.f32 %v605, %v605
        %v777 = vmul.f32 %v608, %v608
        %v778 = vmul.f32 %v613, %v613
        %v779 = vmul.f32 %v616, %v616
        %v780 = vmul.f32 %v621, %v621
        %v781 = vmul.f32 %v624, %v624
        %v782 = vmul.f32 %v629, %v629
        %v783 = vmul.f32 %v632, %v632
        %v784 = vmul.f32 %v637, %v637
        %v785 = vmul.f32 %v640, %v640
        %v786 = vmul.f32 %v645, %v645
        %v787 = vmul.f32 %v648, %v648
        %v788 = vmul.f32 %v653, %v653
        %v789 = vmul.f32 %v656, %v656
        %v790 = vmul.f32 %v661, %v661
        %v791 = vmul.f32 %v664, %v664
        %v792 = vmul.f32 %v669, %v669
        %v793 = vmul.f32 %v672, %v672
        %v794 = vmul.f32 %v677, %v677
        %v795 = vmul.f32 %v680, %v680
        %v796 = vmul.f32 %v685, %v685
        %v797 = vmul.f32 %v688, %v688
        %v798 = vsel %vm692, %v766, 0.0
        %v799 = vsel %vm692, %v767, 0.0
        %v800 = vadd.f32 %v798, %v799
        %v801 = vsel %vm692, %v768, 0.0
        %v802 = vadd.f32 %v800, %v801
        %v803 = vsel %vm692, %v769, 0.0
        %v804 = vadd.f32 %v802, %v803
        %v805 = vsel %vm692, %v770, 0.0
        %v806 = vadd.f32 %v804, %v805
        %v807 = vsel %vm692, %v771, 0.0
        %v808 = vadd.f32 %v806, %v807
        %v809 = vsel %vm692, %v772, 0.0
        %v810 = vadd.f32 %v808, %v809
        %v811 = vsel %vm692, %v773, 0.0
        %v812 = vadd.f32 %v810, %v811
        %v813 = vsel %vm692, %v774, 0.0
        %v814 = vadd.f32 %v812, %v813
        %v815 = vsel %vm692, %v775, 0.0
        %v816 = vadd.f32 %v814, %v815
        %v817 = vsel %vm692, %v776, 0.0
        %v818 = vadd.f32 %v816, %v817
        %v819 = vsel %vm692, %v777, 0.0
        %v820 = vadd.f32 %v818, %v819
        %v821 = vsel %vm692, %v778, 0.0
        %v822 = vadd.f32 %v820, %v821
        %v823 = vsel %vm692, %v779, 0.0
        %v824 = vadd.f32 %v822, %v823
        %v825 = vsel %vm692, %v780, 0.0
        %v826 = vadd.f32 %v824, %v825
        %v827 = vsel %vm692, %v781, 0.0
        %v828 = vadd.f32 %v826, %v827
        %v829 = vsel %vm692, %v782, 0.0
        %v830 = vadd.f32 %v828, %v829
        %v831 = vsel %vm692, %v783, 0.0
        %v832 = vadd.f32 %v830, %v831
        %v833 = vsel %vm692, %v784, 0.0
        %v834 = vadd.f32 %v832, %v833
        %v835 = vsel %vm692, %v785, 0.0
        %v836 = vadd.f32 %v834, %v835
        %v837 = vsel %vm692, %v786, 0.0
        %v838 = vadd.f32 %v836, %v837
        %v839 = vsel %vm692, %v787, 0.0
        %v840 = vadd.f32 %v838, %v839
        %v841 = vsel %vm692, %v788, 0.0
        %v842 = vadd.f32 %v840, %v841
        %v843 = vsel %vm692, %v789, 0.0
        %v844 = vadd.f32 %v842, %v843
        %v845 = vsel %vm692, %v790, 0.0
        %v846 = vadd.f32 %v844, %v845
        %v847 = vsel %vm692, %v791, 0.0
        %v848 = vadd.f32 %v846, %v847
        %v849 = vsel %vm692, %v792, 0.0
        %v850 = vadd.f32 %v848, %v849
        %v851 = vsel %vm692, %v793, 0.0
        %v852 = vadd.f32 %v850, %v851
        %v853 = vsel %vm692, %v794, 0.0
        %v854 = vadd.f32 %v852, %v853
        %v855 = vsel %vm692, %v795, 0.0
        %v856 = vadd.f32 %v854, %v855
        %v857 = vsel %vm692, %v796, 0.0
        %v858 = vadd.f32 %v856, %v857
        %v859 = vsel %vm692, %v797, 0.0
        %v860 = vadd.f32 %v858, %v859
        %v861 = vrot.slane %v860, 4
        %v862 = vadd.f32 %v860, %v861
        %v863 = vrot.slane %v862, 2
        %v864 = vadd.f32 %v862, %v863
        %v865 = vrot.slane %v864, 1
        %v866 = vadd.f32 %v864, %v865
        %v867 = vadd.f32 %v765, %v866
        %868 = vst.msk [vmem:[%s4] sm:$0x1] %vm763, %v867
        %v869 = vpack.c.bf16 %v568, %v565
        %v870 = vpack.c.bf16 %v576, %v573
        %v871 = vpack.c.bf16 %v584, %v581
        %v872 = vpack.c.bf16 %v592, %v589
        %v873 = vpack.c.bf16 %v600, %v597
        %v874 = vpack.c.bf16 %v608, %v605
        %v875 = vpack.c.bf16 %v616, %v613
        %v876 = vpack.c.bf16 %v624, %v621
        %v877 = vpack.c.bf16 %v632, %v629
        %v878 = vpack.c.bf16 %v640, %v637
        %v879 = vpack.c.bf16 %v648, %v645
        %v880 = vpack.c.bf16 %v656, %v653
        %v881 = vpack.c.bf16 %v664, %v661
        %v882 = vpack.c.bf16 %v672, %v669
        %v883 = vpack.c.bf16 %v680, %v677
        %v884 = vpack.c.bf16 %v688, %v685
        %v901 = vunpack.c.l.b16 %v869
        %v902 = vunpack.c.h.b16 %v869
        %v903 = vunpack.c.l.b16 %v870
        %v904 = vunpack.c.h.b16 %v870
        %v905 = vunpack.c.l.b16 %v871
        %v906 = vunpack.c.h.b16 %v871
        %v907 = vunpack.c.l.b16 %v872
        %v908 = vunpack.c.h.b16 %v872
        %v909 = vunpack.c.l.b16 %v873
        %v910 = vunpack.c.h.b16 %v873
        %v911 = vunpack.c.l.b16 %v874
        %v912 = vunpack.c.h.b16 %v874
        %v913 = vunpack.c.l.b16 %v875
        %v914 = vunpack.c.h.b16 %v875
        %v915 = vunpack.c.l.b16 %v876
        %v916 = vunpack.c.h.b16 %v876
        %v917 = vunpack.c.l.b16 %v877
        %v918 = vunpack.c.h.b16 %v877
        %v919 = vunpack.c.l.b16 %v878
        %v920 = vunpack.c.h.b16 %v878
        %v921 = vunpack.c.l.b16 %v879
        %v922 = vunpack.c.h.b16 %v879
        %v923 = vunpack.c.l.b16 %v880
        %v924 = vunpack.c.h.b16 %v880
        %v925 = vunpack.c.l.b16 %v881
        %v926 = vunpack.c.h.b16 %v881
        %v927 = vunpack.c.l.b16 %v882
        %v928 = vunpack.c.h.b16 %v882
        %v929 = vunpack.c.l.b16 %v883
        %v930 = vunpack.c.h.b16 %v883
        %v931 = vunpack.c.l.b16 %v884
        %v932 = vunpack.c.h.b16 %v884
        %v933 = vpack.c.b16 %v901, %v901
        %v934 = vpack.c.b16 %v902, %v902
        %v935 = vpack.c.b16 %v903, %v903
        %v936 = vpack.c.b16 %v904, %v904
        %v937 = vpack.c.b16 %v905, %v905
        %v938 = vpack.c.b16 %v906, %v906
        %v939 = vpack.c.b16 %v907, %v907
        %v940 = vpack.c.b16 %v908, %v908
        %v941 = vpack.c.b16 %v909, %v909
        %v942 = vpack.c.b16 %v910, %v910
        %v943 = vpack.c.b16 %v911, %v911
        %v944 = vpack.c.b16 %v912, %v912
        %v945 = vpack.c.b16 %v913, %v913
        %v946 = vpack.c.b16 %v914, %v914
        %v947 = vpack.c.b16 %v915, %v915
        %v948 = vpack.c.b16 %v916, %v916
        %v949 = vpack.c.b16 %v917, %v917
        %v950 = vpack.c.b16 %v918, %v918
        %v951 = vpack.c.b16 %v919, %v919
        %v952 = vpack.c.b16 %v920, %v920
        %v953 = vpack.c.b16 %v921, %v921
        %v954 = vpack.c.b16 %v922, %v922
        %v955 = vpack.c.b16 %v923, %v923
        %v956 = vpack.c.b16 %v924, %v924
        %v957 = vpack.c.b16 %v925, %v925
        %v958 = vpack.c.b16 %v926, %v926
        %v959 = vpack.c.b16 %v927, %v927
        %v960 = vpack.c.b16 %v928, %v928
        %v961 = vpack.c.b16 %v929, %v929
        %v962 = vpack.c.b16 %v930, %v930
        %v963 = vpack.c.b16 %v931, %v931
        %v964 = vpack.c.b16 %v932, %v932
        %vm997 = vcmask 519168
        %998 = vst.msk [vmem:[%s190] sm:$0xf] %vm997, %v933
        %999 = vst.msk [vmem:[%s190 + $0x4] sm:$0xf] %vm997, %v934
        %1000 = vst.msk [vmem:[%s190 + $0x8] sm:$0xf] %vm997, %v935
        %1001 = vst.msk [vmem:[%s190 + $0xc] sm:$0xf] %vm997, %v936
        %1002 = vst.msk [vmem:[%s190 + $0x10] sm:$0xf] %vm997, %v937
        %1003 = vst.msk [vmem:[%s190 + $0x14] sm:$0xf] %vm997, %v938
        %1004 = vst.msk [vmem:[%s190 + $0x18] sm:$0xf] %vm997, %v939
        %1005 = vst.msk [vmem:[%s190 + $0x1c] sm:$0xf] %vm997, %v940
        %1006 = vst.msk [vmem:[%s190 + $0x20] sm:$0xf] %vm997, %v941
        %1007 = vst.msk [vmem:[%s190 + $0x24] sm:$0xf] %vm997, %v942
        %1008 = vst.msk [vmem:[%s190 + $0x28] sm:$0xf] %vm997, %v943
        %1009 = vst.msk [vmem:[%s190 + $0x2c] sm:$0xf] %vm997, %v944
        %1010 = vst.msk [vmem:[%s190 + $0x30] sm:$0xf] %vm997, %v945
        %1011 = vst.msk [vmem:[%s190 + $0x34] sm:$0xf] %vm997, %v946
        %1012 = vst.msk [vmem:[%s190 + $0x38] sm:$0xf] %vm997, %v947
        %1013 = vst.msk [vmem:[%s190 + $0x3c] sm:$0xf] %vm997, %v948
        %1014 = vst.msk [vmem:[%s190 + $0x40] sm:$0xf] %vm997, %v949
        %1015 = vst.msk [vmem:[%s190 + $0x44] sm:$0xf] %vm997, %v950
        %1016 = vst.msk [vmem:[%s190 + $0x48] sm:$0xf] %vm997, %v951
        %1017 = vst.msk [vmem:[%s190 + $0x4c] sm:$0xf] %vm997, %v952
        %1018 = vst.msk [vmem:[%s190 + $0x50] sm:$0xf] %vm997, %v953
        %1019 = vst.msk [vmem:[%s190 + $0x54] sm:$0xf] %vm997, %v954
        %1020 = vst.msk [vmem:[%s190 + $0x58] sm:$0xf] %vm997, %v955
        %1021 = vst.msk [vmem:[%s190 + $0x5c] sm:$0xf] %vm997, %v956
        %1022 = vst.msk [vmem:[%s190 + $0x60] sm:$0xf] %vm997, %v957
        %1023 = vst.msk [vmem:[%s190 + $0x64] sm:$0xf] %vm997, %v958
        %1024 = vst.msk [vmem:[%s190 + $0x68] sm:$0xf] %vm997, %v959
        %1025 = vst.msk [vmem:[%s190 + $0x6c] sm:$0xf] %vm997, %v960
        %1026 = vst.msk [vmem:[%s190 + $0x70] sm:$0xf] %vm997, %v961
        %1027 = vst.msk [vmem:[%s190 + $0x74] sm:$0xf] %vm997, %v962
        %1028 = vst.msk [vmem:[%s190 + $0x78] sm:$0xf] %vm997, %v963
        %1029 = vst.msk [vmem:[%s190 + $0x7c] sm:$0xf] %vm997, %v964
        %s1030 = sand.u32 %s71, 1
        %s1031 = sand.u32 %s71, 1
        %s1032 = smul.addr %s1031, 128
        %s1033 = scalar_lea.vmem [#allocation2], %s1032
        // Predicated region
        $region33: #{innernet_forward.4} parent=27 // pred_check
          %p1034 = pneg %p81
        $region34: #{innernet_forward.4} parent=27 // pred_check_branch
          %1036 = sbr.rel (%p1034) target = $region36
        $region35: #{innernet_forward.4} parent=27 // pred_region
          %s1037 = smul.u32 32, %s16
          %s1038 = ssub.s32 125, %s1037
          %p1039 = scmp.lt.s32.totalorder %s1038, 32
          %s1040 = scalar_select %p1039, %s1038, 32
          %s1041 = smul.u32 64, %s1040
          %p1042 = scmp.ne.s32.totalorder 0, %s1041
          %s1043 = smul.addr %s1037, 4
          %s1044 = scalar_lea.vmem %s2, %s1043
          // Predicated region
          $region37: #{innernet_forward.4} parent=35 // pred_check
            %p1045 = pneg %p1042
          $region38: #{innernet_forward.4} parent=35 // pred_check_branch
            %1047 = sbr.rel (%p1045) target = $region40
          $region39: #{innernet_forward.4} parent=35 // pred_region
            // Predicated region
            $region41: #{innernet_forward.4} parent=39 // pred_check
              _
            $region42: #{innernet_forward.4} parent=39 // pred_check_branch
              %1049 = sbr.rel target = $region44
            $region43: #{innernet_forward.4} parent=39 // pred_region
              // Predicated region
              $region63: #{innernet_forward.4} parent=43 // pred_check
                _
              $region64: #{innernet_forward.4} parent=43 // pred_check_branch
                %1160 = sbr.rel (0) target = $region66
              $region65: #{innernet_forward.4} parent=43 // pred_region
                %s1162 = sshrl.u32 %s1040, 5
                // While loop
                $region67: #{innernet_forward.4} parent=65 // loop_pre_header
                  _
                $region68: #{innernet_forward.4} parent=65 // loop_header
                  %s1164 = sphi 0, %s1166
                  %p1165 = scmp.ge.s32.totalorder %s1164, %s1162
                  %s1169 = sphi 0, %s1238
                  %s1170 = sphi %s1033, %s1241
                  %s1171 = sphi %s1044, %s1242
                $region69: #{innernet_forward.4} parent=65 // loop_header_branch
                  %1168 = sbr.rel (%p1165) target = $region73
                $region70: #{innernet_forward.4} parent=65 // loop_body
                  %v1172 = vld [vmem:[%s1170] sm:$0xf]
                  %1173 = vst [vmem:[%s1171] sm:$0xf] %v1172
                  %v1174 = vld [vmem:[%s1170 + $0x4] sm:$0xf]
                  %1175 = vst [vmem:[%s1171 + $0x4] sm:$0xf] %v1174
                  %v1176 = vld [vmem:[%s1170 + $0x8] sm:$0xf]
                  %1177 = vst [vmem:[%s1171 + $0x8] sm:$0xf] %v1176
                  %v1178 = vld [vmem:[%s1170 + $0xc] sm:$0xf]
                  %1179 = vst [vmem:[%s1171 + $0xc] sm:$0xf] %v1178
                  %v1180 = vld [vmem:[%s1170 + $0x10] sm:$0xf]
                  %1181 = vst [vmem:[%s1171 + $0x10] sm:$0xf] %v1180
                  %v1182 = vld [vmem:[%s1170 + $0x14] sm:$0xf]
                  %1183 = vst [vmem:[%s1171 + $0x14] sm:$0xf] %v1182
                  %v1184 = vld [vmem:[%s1170 + $0x18] sm:$0xf]
                  %1185 = vst [vmem:[%s1171 + $0x18] sm:$0xf] %v1184
                  %v1186 = vld [vmem:[%s1170 + $0x1c] sm:$0xf]
                  %1187 = vst [vmem:[%s1171 + $0x1c] sm:$0xf] %v1186
                  %v1188 = vld [vmem:[%s1170 + $0x20] sm:$0xf]
                  %1189 = vst [vmem:[%s1171 + $0x20] sm:$0xf] %v1188
                  %v1190 = vld [vmem:[%s1170 + $0x24] sm:$0xf]
                  %1191 = vst [vmem:[%s1171 + $0x24] sm:$0xf] %v1190
                  %v1192 = vld [vmem:[%s1170 + $0x28] sm:$0xf]
                  %1193 = vst [vmem:[%s1171 + $0x28] sm:$0xf] %v1192
                  %v1194 = vld [vmem:[%s1170 + $0x2c] sm:$0xf]
                  %1195 = vst [vmem:[%s1171 + $0x2c] sm:$0xf] %v1194
                  %v1196 = vld [vmem:[%s1170 + $0x30] sm:$0xf]
                  %1197 = vst [vmem:[%s1171 + $0x30] sm:$0xf] %v1196
                  %v1198 = vld [vmem:[%s1170 + $0x34] sm:$0xf]
                  %1199 = vst [vmem:[%s1171 + $0x34] sm:$0xf] %v1198
                  %v1200 = vld [vmem:[%s1170 + $0x38] sm:$0xf]
                  %1201 = vst [vmem:[%s1171 + $0x38] sm:$0xf] %v1200
                  %v1202 = vld [vmem:[%s1170 + $0x3c] sm:$0xf]
                  %1203 = vst [vmem:[%s1171 + $0x3c] sm:$0xf] %v1202
                  %v1204 = vld [vmem:[%s1170 + $0x40] sm:$0xf]
                  %1205 = vst [vmem:[%s1171 + $0x40] sm:$0xf] %v1204
                  %v1206 = vld [vmem:[%s1170 + $0x44] sm:$0xf]
                  %1207 = vst [vmem:[%s1171 + $0x44] sm:$0xf] %v1206
                  %v1208 = vld [vmem:[%s1170 + $0x48] sm:$0xf]
                  %1209 = vst [vmem:[%s1171 + $0x48] sm:$0xf] %v1208
                  %v1210 = vld [vmem:[%s1170 + $0x4c] sm:$0xf]
                  %1211 = vst [vmem:[%s1171 + $0x4c] sm:$0xf] %v1210
                  %v1212 = vld [vmem:[%s1170 + $0x50] sm:$0xf]
                  %1213 = vst [vmem:[%s1171 + $0x50] sm:$0xf] %v1212
                  %v1214 = vld [vmem:[%s1170 + $0x54] sm:$0xf]
                  %1215 = vst [vmem:[%s1171 + $0x54] sm:$0xf] %v1214
                  %v1216 = vld [vmem:[%s1170 + $0x58] sm:$0xf]
                  %1217 = vst [vmem:[%s1171 + $0x58] sm:$0xf] %v1216
                  %v1218 = vld [vmem:[%s1170 + $0x5c] sm:$0xf]
                  %1219 = vst [vmem:[%s1171 + $0x5c] sm:$0xf] %v1218
                  %v1220 = vld [vmem:[%s1170 + $0x60] sm:$0xf]
                  %1221 = vst [vmem:[%s1171 + $0x60] sm:$0xf] %v1220
                  %v1222 = vld [vmem:[%s1170 + $0x64] sm:$0xf]
                  %1223 = vst [vmem:[%s1171 + $0x64] sm:$0xf] %v1222
                  %v1224 = vld [vmem:[%s1170 + $0x68] sm:$0xf]
                  %1225 = vst [vmem:[%s1171 + $0x68] sm:$0xf] %v1224
                  %v1226 = vld [vmem:[%s1170 + $0x6c] sm:$0xf]
                  %1227 = vst [vmem:[%s1171 + $0x6c] sm:$0xf] %v1226
                  %v1228 = vld [vmem:[%s1170 + $0x70] sm:$0xf]
                  %1229 = vst [vmem:[%s1171 + $0x70] sm:$0xf] %v1228
                  %v1230 = vld [vmem:[%s1170 + $0x74] sm:$0xf]
                  %1231 = vst [vmem:[%s1171 + $0x74] sm:$0xf] %v1230
                  %v1232 = vld [vmem:[%s1170 + $0x78] sm:$0xf]
                  %1233 = vst [vmem:[%s1171 + $0x78] sm:$0xf] %v1232
                  %v1234 = vld [vmem:[%s1170 + $0x7c] sm:$0xf]
                  %1235 = vst [vmem:[%s1171 + $0x7c] sm:$0xf] %v1234
                  %s1236 = sadd.s32 1, %s1169
                  %p1237 = scmp.ge.s32.totalorder %s1236, %s1162
                  %s1238 = scalar_select %p1237, 0, %s1236
                  %s1239 = smul.u32 %s1238, 128
                  %s1240 = smul.u32 %s1238, 128
                  %s1241 = scalar_lea.vmem %s1033, %s1239 [#allocation2]
                  %s1242 = scalar_lea.vmem %s1044, %s1240
                $region71: #{innernet_forward.4} parent=65 // loop_footer
                  %s1166 = sadd.s32 %s1164, 1
                $region72: #{innernet_forward.4} parent=65 // loop_footer_branch
                  %1163 = sbr.rel target = $region68
                $region73: #{innernet_forward.4} parent=65 // loop_exit
                  _
                %s1243 = sshrl.u32 %s1040, 5
                %s1244 = sand.u32 %s1040, 31
                %s1245 = smul.u32 %s1243, 32
                %s1246 = smul.u32 4, %s1245
                %s1247 = scalar_lea.vmem %s1033, %s1246 [#allocation2]
                %s1248 = smul.u32 4, %s1245
                %s1249 = scalar_lea.vmem %s1044, %s1248
                // While loop
                $region74: #{innernet_forward.4} parent=65 // loop_pre_header
                  _
                $region75: #{innernet_forward.4} parent=65 // loop_header
                  %s1251 = sphi 0, %s1253
                  %p1252 = scmp.ge.s32.totalorder %s1251, %s1244
                  %s1256 = sphi 0, %s1263
                  %s1257 = sphi %s1247, %s1266
                  %s1258 = sphi %s1249, %s1267
                $region76: #{innernet_forward.4} parent=65 // loop_header_branch
                  %1255 = sbr.rel (%p1252) target = $region80
                $region77: #{innernet_forward.4} parent=65 // loop_body
                  %v1259 = vld [vmem:[%s1257] sm:$0xf]
                  %1260 = vst [vmem:[%s1258] sm:$0xf] %v1259
                  %s1261 = sadd.s32 1, %s1256
                  %p1262 = scmp.ge.s32.totalorder %s1261, %s1244
                  %s1263 = scalar_select %p1262, 0, %s1261
                  %s1264 = smul.u32 %s1263, 4
                  %s1265 = smul.u32 %s1263, 4
                  %s1266 = scalar_lea.vmem %s1247, %s1264 [#allocation2]
                  %s1267 = scalar_lea.vmem %s1249, %s1265
                $region78: #{innernet_forward.4} parent=65 // loop_footer
                  %s1253 = sadd.s32 %s1251, 1
                $region79: #{innernet_forward.4} parent=65 // loop_footer_branch
                  %1250 = sbr.rel target = $region75
                $region80: #{innernet_forward.4} parent=65 // loop_exit
                  _
              $region66: #{innernet_forward.4} parent=43 // pred_fallthru
                _
            $region44: #{innernet_forward.4} parent=39 // pred_fallthru
              _
            // Predicated region
            $region45: #{innernet_forward.4} parent=39 // pred_check
              _
            $region46: #{innernet_forward.4} parent=39 // pred_check_branch
              %1051 = sbr.rel (0) target = $region48
            $region47: #{innernet_forward.4} parent=39 // pred_region
              %s1053 = sshrl.u32 %s1040, 5
              // While loop
              $region49: #{innernet_forward.4} parent=47 // loop_pre_header
                _
              $region50: #{innernet_forward.4} parent=47 // loop_header
                %s1055 = sphi 0, %s1057
                %p1056 = scmp.ge.s32.totalorder %s1055, %s1053
                %s1060 = sphi 0, %s1129
                %s1061 = sphi %s1033, %s1132
                %s1062 = sphi %s1044, %s1133
              $region51: #{innernet_forward.4} parent=47 // loop_header_branch
                %1059 = sbr.rel (%p1056) target = $region55
              $region52: #{innernet_forward.4} parent=47 // loop_body
                %v1063 = vld [vmem:[%s1061] sm:$0xf]
                %1064 = vst [vmem:[%s1062] sm:$0xf] %v1063
                %v1065 = vld [vmem:[%s1061 + $0x4] sm:$0xf]
                %1066 = vst [vmem:[%s1062 + $0x4] sm:$0xf] %v1065
                %v1067 = vld [vmem:[%s1061 + $0x8] sm:$0xf]
                %1068 = vst [vmem:[%s1062 + $0x8] sm:$0xf] %v1067
                %v1069 = vld [vmem:[%s1061 + $0xc] sm:$0xf]
                %1070 = vst [vmem:[%s1062 + $0xc] sm:$0xf] %v1069
                %v1071 = vld [vmem:[%s1061 + $0x10] sm:$0xf]
                %1072 = vst [vmem:[%s1062 + $0x10] sm:$0xf] %v1071
                %v1073 = vld [vmem:[%s1061 + $0x14] sm:$0xf]
                %1074 = vst [vmem:[%s1062 + $0x14] sm:$0xf] %v1073
                %v1075 = vld [vmem:[%s1061 + $0x18] sm:$0xf]
                %1076 = vst [vmem:[%s1062 + $0x18] sm:$0xf] %v1075
                %v1077 = vld [vmem:[%s1061 + $0x1c] sm:$0xf]
                %1078 = vst [vmem:[%s1062 + $0x1c] sm:$0xf] %v1077
                %v1079 = vld [vmem:[%s1061 + $0x20] sm:$0xf]
                %1080 = vst [vmem:[%s1062 + $0x20] sm:$0xf] %v1079
                %v1081 = vld [vmem:[%s1061 + $0x24] sm:$0xf]
                %1082 = vst [vmem:[%s1062 + $0x24] sm:$0xf] %v1081
                %v1083 = vld [vmem:[%s1061 + $0x28] sm:$0xf]
                %1084 = vst [vmem:[%s1062 + $0x28] sm:$0xf] %v1083
                %v1085 = vld [vmem:[%s1061 + $0x2c] sm:$0xf]
                %1086 = vst [vmem:[%s1062 + $0x2c] sm:$0xf] %v1085
                %v1087 = vld [vmem:[%s1061 + $0x30] sm:$0xf]
                %1088 = vst [vmem:[%s1062 + $0x30] sm:$0xf] %v1087
                %v1089 = vld [vmem:[%s1061 + $0x34] sm:$0xf]
                %1090 = vst [vmem:[%s1062 + $0x34] sm:$0xf] %v1089
                %v1091 = vld [vmem:[%s1061 + $0x38] sm:$0xf]
                %1092 = vst [vmem:[%s1062 + $0x38] sm:$0xf] %v1091
                %v1093 = vld [vmem:[%s1061 + $0x3c] sm:$0xf]
                %1094 = vst [vmem:[%s1062 + $0x3c] sm:$0xf] %v1093
                %v1095 = vld [vmem:[%s1061 + $0x40] sm:$0xf]
                %1096 = vst [vmem:[%s1062 + $0x40] sm:$0xf] %v1095
                %v1097 = vld [vmem:[%s1061 + $0x44] sm:$0xf]
                %1098 = vst [vmem:[%s1062 + $0x44] sm:$0xf] %v1097
                %v1099 = vld [vmem:[%s1061 + $0x48] sm:$0xf]
                %1100 = vst [vmem:[%s1062 + $0x48] sm:$0xf] %v1099
                %v1101 = vld [vmem:[%s1061 + $0x4c] sm:$0xf]
                %1102 = vst [vmem:[%s1062 + $0x4c] sm:$0xf] %v1101
                %v1103 = vld [vmem:[%s1061 + $0x50] sm:$0xf]
                %1104 = vst [vmem:[%s1062 + $0x50] sm:$0xf] %v1103
                %v1105 = vld [vmem:[%s1061 + $0x54] sm:$0xf]
                %1106 = vst [vmem:[%s1062 + $0x54] sm:$0xf] %v1105
                %v1107 = vld [vmem:[%s1061 + $0x58] sm:$0xf]
                %1108 = vst [vmem:[%s1062 + $0x58] sm:$0xf] %v1107
                %v1109 = vld [vmem:[%s1061 + $0x5c] sm:$0xf]
                %1110 = vst [vmem:[%s1062 + $0x5c] sm:$0xf] %v1109
                %v1111 = vld [vmem:[%s1061 + $0x60] sm:$0xf]
                %1112 = vst [vmem:[%s1062 + $0x60] sm:$0xf] %v1111
                %v1113 = vld [vmem:[%s1061 + $0x64] sm:$0xf]
                %1114 = vst [vmem:[%s1062 + $0x64] sm:$0xf] %v1113
                %v1115 = vld [vmem:[%s1061 + $0x68] sm:$0xf]
                %1116 = vst [vmem:[%s1062 + $0x68] sm:$0xf] %v1115
                %v1117 = vld [vmem:[%s1061 + $0x6c] sm:$0xf]
                %1118 = vst [vmem:[%s1062 + $0x6c] sm:$0xf] %v1117
                %v1119 = vld [vmem:[%s1061 + $0x70] sm:$0xf]
                %1120 = vst [vmem:[%s1062 + $0x70] sm:$0xf] %v1119
                %v1121 = vld [vmem:[%s1061 + $0x74] sm:$0xf]
                %1122 = vst [vmem:[%s1062 + $0x74] sm:$0xf] %v1121
                %v1123 = vld [vmem:[%s1061 + $0x78] sm:$0xf]
                %1124 = vst [vmem:[%s1062 + $0x78] sm:$0xf] %v1123
                %v1125 = vld [vmem:[%s1061 + $0x7c] sm:$0xf]
                %1126 = vst [vmem:[%s1062 + $0x7c] sm:$0xf] %v1125
                %s1127 = sadd.s32 1, %s1060
                %p1128 = scmp.ge.s32.totalorder %s1127, %s1053
                %s1129 = scalar_select %p1128, 0, %s1127
                %s1130 = smul.u32 %s1129, 128
                %s1131 = smul.u32 %s1129, 128
                %s1132 = scalar_lea.vmem %s1033, %s1130 [#allocation2]
                %s1133 = scalar_lea.vmem %s1044, %s1131
              $region53: #{innernet_forward.4} parent=47 // loop_footer
                %s1057 = sadd.s32 %s1055, 1
              $region54: #{innernet_forward.4} parent=47 // loop_footer_branch
                %1054 = sbr.rel target = $region50
              $region55: #{innernet_forward.4} parent=47 // loop_exit
                _
              %s1134 = sshrl.u32 %s1040, 5
              %s1135 = sand.u32 %s1040, 31
              %s1136 = smul.u32 %s1134, 32
              %s1137 = smul.u32 4, %s1136
              %s1138 = scalar_lea.vmem %s1033, %s1137 [#allocation2]
              %s1139 = smul.u32 4, %s1136
              %s1140 = scalar_lea.vmem %s1044, %s1139
              // While loop
              $region56: #{innernet_forward.4} parent=47 // loop_pre_header
                _
              $region57: #{innernet_forward.4} parent=47 // loop_header
                %s1142 = sphi 0, %s1144
                %p1143 = scmp.ge.s32.totalorder %s1142, %s1135
                %s1147 = sphi 0, %s1154
                %s1148 = sphi %s1138, %s1157
                %s1149 = sphi %s1140, %s1158
              $region58: #{innernet_forward.4} parent=47 // loop_header_branch
                %1146 = sbr.rel (%p1143) target = $region62
              $region59: #{innernet_forward.4} parent=47 // loop_body
                %v1150 = vld [vmem:[%s1148] sm:$0xf]
                %1151 = vst [vmem:[%s1149] sm:$0xf] %v1150
                %s1152 = sadd.s32 1, %s1147
                %p1153 = scmp.ge.s32.totalorder %s1152, %s1135
                %s1154 = scalar_select %p1153, 0, %s1152
                %s1155 = smul.u32 %s1154, 4
                %s1156 = smul.u32 %s1154, 4
                %s1157 = scalar_lea.vmem %s1138, %s1155 [#allocation2]
                %s1158 = scalar_lea.vmem %s1140, %s1156
              $region60: #{innernet_forward.4} parent=47 // loop_footer
                %s1144 = sadd.s32 %s1142, 1
              $region61: #{innernet_forward.4} parent=47 // loop_footer_branch
                %1141 = sbr.rel target = $region57
              $region62: #{innernet_forward.4} parent=47 // loop_exit
                _
            $region48: #{innernet_forward.4} parent=39 // pred_fallthru
              _
          $region40: #{innernet_forward.4} parent=35 // pred_fallthru
            _
          %1268 = vnop
        $region36: #{innernet_forward.4} parent=27 // pred_fallthru
          _
        // Predicated region
        $region81: #{innernet_forward.4} parent=27 // pred_check
          %p1269 = pneg %p102
        $region82: #{innernet_forward.4} parent=27 // pred_check_branch
          %1271 = sbr.rel (%p1269) target = $region84
        $region83: #{innernet_forward.4} parent=27 // pred_region
          _
        $region84: #{innernet_forward.4} parent=27 // pred_fallthru
          _
        // Predicated region
        $region85: #{innernet_forward.4} parent=27 // pred_check
          %p1272 = pneg %p123
        $region86: #{innernet_forward.4} parent=27 // pred_check_branch
          %1274 = sbr.rel (%p1272) target = $region88
        $region87: #{innernet_forward.4} parent=27 // pred_region
          _
        $region88: #{innernet_forward.4} parent=27 // pred_fallthru
          _
        // Predicated region
        $region89: #{innernet_forward.4} parent=27 // pred_check
          %p1275 = pneg %p102
        $region90: #{innernet_forward.4} parent=27 // pred_check_branch
          %1277 = sbr.rel (%p1275) target = $region92
        $region91: #{innernet_forward.4} parent=27 // pred_region
          _
        $region92: #{innernet_forward.4} parent=27 // pred_fallthru
          _
        // Predicated region
        $region93: #{innernet_forward.4} parent=27 // pred_check
          %p1278 = pneg %p123
        $region94: #{innernet_forward.4} parent=27 // pred_check_branch
          %1280 = sbr.rel (%p1278) target = $region96
        $region95: #{innernet_forward.4} parent=27 // pred_region
          _
        $region96: #{innernet_forward.4} parent=27 // pred_fallthru
          _
      $region28: #{innernet_forward.4} parent=5 // pred_fallthru
        _
      %p1281 = scmp.le.s32.totalorder 2, %s11
      // Predicated region
      $region97: #{innernet_forward.4} parent=5 // pred_check
        %p1282 = pneg %p1281
      $region98: #{innernet_forward.4} parent=5 // pred_check_branch
        %1284 = sbr.rel (%p1282) target = $region100
      $region99: #{innernet_forward.4} parent=5 // pred_region
        %s1285 = ssub.s32 %s11, 2
        // Predicated region
        $region101: #{innernet_forward.4} parent=99 // pred_check
          %p1286 = pneg %p87
        $region102: #{innernet_forward.4} parent=99 // pred_check_branch
          %1288 = sbr.rel (%p1286) target = $region104
        $region103: #{innernet_forward.4} parent=99 // pred_region
          %s1289 = sand.u32 %s72, 1
          %s1290 = sand.u32 %s72, 1
          %s1291 = smul.addr %s1290, 128
          %s1292 = scalar_lea.vmem [#allocation2], %s1291
        $region104: #{innernet_forward.4} parent=99 // pred_fallthru
          _
      $region100: #{innernet_forward.4} parent=5 // pred_fallthru
        _
    $region6: #{innernet_forward.4} parent=1 // loop_footer
      %s15 = sadd.s32 1, %s11
    $region7: #{innernet_forward.4} parent=1 // loop_footer_branch
      %10 = sbr.rel target = $region3
    $region8: #{innernet_forward.4} parent=1 // loop_exit
      _

// kernel: innernet_forward.6
$region0: #{innernet_forward.6}
  #allocation0 [shape = 'u32[]', space=smem, size = 0x4, offset = 0x4, fixed_abs, tag = 'smem constant byte address 0x4 - core index']
  #allocation1 [shape = 'u32[144,128]{1,0:T(1,128)}', space=vmem, size = 0x12000, scoped, tag = 'internal scratch']
  %s0 = inlined_call_operand.vmem [shape: bf16[1000,64], index: 0, kind: input, shape index: {}]
  %s1 = inlined_call_operand.vmem [shape: f32[1,64], index: 1, kind: input, shape index: {}]
  %s2 = inlined_call_operand.vmem [shape: f32[1,64], index: 2, kind: input, shape index: {}]
  %s3 = inlined_call_operand.vmem [shape: bf16[64,64], index: 3, kind: input, shape index: {}]
  %s4 = inlined_call_operand.vmem [shape: f32[1,64], index: 4, kind: output, shape index: {0}]
  %s5 = inlined_call_operand.vmem [shape: f32[1,64], index: 5, kind: output, shape index: {1}]
  %6 = xla_tuple %s4, %s5
  %s7 = sld [smem:[#allocation0]]
  $region61: #{innernet_forward.6} parent=0
    _
  %s9 = ssub.s32 1, %s7
  %s10 = scalar_select 0, %s9, %s7
  loop: start=0, step=1, limit=6
  $region2: #{innernet_forward.6} parent=0 // loop_pre_header
    _
  $region3: #{innernet_forward.6} parent=0 // loop_header
    %s12 = sphi 0, %s16
    %p13 = scmp.ge.s32.totalorder %s12, 6
    %s22 = sphi 0, %s24
    %s25 = sphi 0, %s22
    %s26 = sphi 0, %s25
    %s42 = sphi 0, %s26
    %s46 = sphi 0, %s46
    %s48 = sphi 0, %s46
    %s49 = sphi 0, %s48
    %s63 = sphi 0, %s49
    %s67 = sphi 0, %s67
    %s69 = sphi 0, %s67
    %s70 = sphi 0, %s69
    %s84 = sphi 0, %s70
    %s88 = sphi 0, %s88
    %s90 = sphi 0, %s88
    %s91 = sphi 0, %s90
    %s105 = sphi 0, %s91
    %s109 = sphi 0, %s109
    %s111 = sphi 0, %s109
    %s112 = sphi 0, %s111
    %s126 = sphi 0, %s112
    %s130 = sphi 0, %s130
    %s132 = sphi 0, %s130
    %s133 = sphi 0, %s132
    %s147 = sphi 0, %s133
  $region4: #{innernet_forward.6} parent=0 // loop_header_branch
    %15 = sbr.rel (%p13) target = $region8
  $region5: #{innernet_forward.6} parent=0 // loop_body
    %s17 = ssub.s32 %s12, 1
    %s18 = ssub.s32 %s12, 2
    %s19 = sadd.s32 %s12, 1
    %s20 = ssub.s32 %s12, %s19
    %p21 = scmp.eq.s32.totalorder %s20, 0
    %s23 = sadd.s32 %s22, 1
    %s24 = scalar_select %p21, %s22, %s23
    %p27 = pneg %p21
    %p28 = scmp.eq.s32.totalorder %s12, 3
    %p29 = por %p27, %p28
    %p30 = scmp.ne.s32.totalorder %s22, %s25
    %p31 = scmp.eq.s32.totalorder %s12, 0
    %p32 = por %p30, %p31
    %p33 = scmp.ne.s32.totalorder %s22, %s25
    %p34 = scmp.eq.s32.totalorder %s17, 3
    %p35 = por %p33, %p34
    %p36 = scmp.ne.s32.totalorder %s25, %s26
    %p37 = scmp.eq.s32.totalorder %s17, 0
    %p38 = por %p36, %p37
    %p39 = scmp.ne.s32.totalorder %s25, %s26
    %p40 = scmp.eq.s32.totalorder %s18, 3
    %p41 = por %p39, %p40
    %p43 = scmp.ne.s32.totalorder %s26, %s42
    %p44 = scmp.eq.s32.totalorder %s18, 0
    %p45 = por %p43, %p44
    %s47 = sadd.s32 %s46, 1
    %p50 = scmp.eq.s32.totalorder %s12, 3
    %p51 = scmp.ne.s32.totalorder %s46, %s48
    %p52 = scmp.eq.s32.totalorder %s12, 0
    %p53 = por %p51, %p52
    %p54 = scmp.ne.s32.totalorder %s46, %s48
    %p55 = scmp.eq.s32.totalorder %s17, 3
    %p56 = por %p54, %p55
    %p57 = scmp.ne.s32.totalorder %s48, %s49
    %p58 = scmp.eq.s32.totalorder %s17, 0
    %p59 = por %p57, %p58
    %p60 = scmp.ne.s32.totalorder %s48, %s49
    %p61 = scmp.eq.s32.totalorder %s18, 3
    %p62 = por %p60, %p61
    %p64 = scmp.ne.s32.totalorder %s49, %s63
    %p65 = scmp.eq.s32.totalorder %s18, 0
    %p66 = por %p64, %p65
    %s68 = sadd.s32 %s67, 1
    %p71 = scmp.eq.s32.totalorder %s12, 3
    %p72 = scmp.ne.s32.totalorder %s67, %s69
    %p73 = scmp.eq.s32.totalorder %s12, 0
    %p74 = por %p72, %p73
    %p75 = scmp.ne.s32.totalorder %s67, %s69
    %p76 = scmp.eq.s32.totalorder %s17, 3
    %p77 = por %p75, %p76
    %p78 = scmp.ne.s32.totalorder %s69, %s70
    %p79 = scmp.eq.s32.totalorder %s17, 0
    %p80 = por %p78, %p79
    %p81 = scmp.ne.s32.totalorder %s69, %s70
    %p82 = scmp.eq.s32.totalorder %s18, 3
    %p83 = por %p81, %p82
    %p85 = scmp.ne.s32.totalorder %s70, %s84
    %p86 = scmp.eq.s32.totalorder %s18, 0
    %p87 = por %p85, %p86
    %s89 = sadd.s32 %s88, 1
    %p92 = scmp.eq.s32.totalorder %s12, 3
    %p93 = scmp.ne.s32.totalorder %s88, %s90
    %p94 = scmp.eq.s32.totalorder %s12, 0
    %p95 = por %p93, %p94
    %p96 = scmp.ne.s32.totalorder %s88, %s90
    %p97 = scmp.eq.s32.totalorder %s17, 3
    %p98 = por %p96, %p97
    %p99 = scmp.ne.s32.totalorder %s90, %s91
    %p100 = scmp.eq.s32.totalorder %s17, 0
    %p101 = por %p99, %p100
    %p102 = scmp.ne.s32.totalorder %s90, %s91
    %p103 = scmp.eq.s32.totalorder %s18, 3
    %p104 = por %p102, %p103
    %p106 = scmp.ne.s32.totalorder %s91, %s105
    %p107 = scmp.eq.s32.totalorder %s18, 0
    %p108 = por %p106, %p107
    %s110 = sadd.s32 %s109, 1
    %p113 = scmp.eq.s32.totalorder %s12, 3
    %p114 = scmp.ne.s32.totalorder %s109, %s111
    %p115 = scmp.eq.s32.totalorder %s12, 0
    %p116 = por %p114, %p115
    %p117 = scmp.ne.s32.totalorder %s109, %s111
    %p118 = scmp.eq.s32.totalorder %s17, 3
    %p119 = por %p117, %p118
    %p120 = scmp.ne.s32.totalorder %s111, %s112
    %p121 = scmp.eq.s32.totalorder %s17, 0
    %p122 = por %p120, %p121
    %p123 = scmp.ne.s32.totalorder %s111, %s112
    %p124 = scmp.eq.s32.totalorder %s18, 3
    %p125 = por %p123, %p124
    %p127 = scmp.ne.s32.totalorder %s112, %s126
    %p128 = scmp.eq.s32.totalorder %s18, 0
    %p129 = por %p127, %p128
    %s131 = sadd.s32 %s130, 1
    %p134 = scmp.eq.s32.totalorder %s12, 3
    %p135 = scmp.ne.s32.totalorder %s130, %s132
    %p136 = scmp.eq.s32.totalorder %s12, 0
    %p137 = por %p135, %p136
    %p138 = scmp.ne.s32.totalorder %s130, %s132
    %p139 = scmp.eq.s32.totalorder %s17, 3
    %p140 = por %p138, %p139
    %p141 = scmp.ne.s32.totalorder %s132, %s133
    %p142 = scmp.eq.s32.totalorder %s17, 0
    %p143 = por %p141, %p142
    %p144 = scmp.ne.s32.totalorder %s132, %s133
    %p145 = scmp.eq.s32.totalorder %s18, 3
    %p146 = por %p144, %p145
    %p148 = scmp.ne.s32.totalorder %s133, %s147
    %p149 = scmp.eq.s32.totalorder %s18, 0
    %p150 = por %p148, %p149
    %p151 = scmp.le.s32.totalorder 1, %s12
    %p152 = scmp.lt.s32.totalorder %s12, 5
    %p153 = pnand %p151, %p152
    %p154 = pneg %p153
    // Predicated region
    $region9: #{innernet_forward.6} parent=5 // pred_check
      _
    $region10: #{innernet_forward.6} parent=5 // pred_check_branch
      %156 = sbr.rel (%p153) target = $region12
    $region11: #{innernet_forward.6} parent=5 // pred_region
      %s157 = ssub.s32 %s12, 1
      // Predicated region
      $region13: #{innernet_forward.6} parent=11 // pred_check
        %p158 = pneg %p59
      $region14: #{innernet_forward.6} parent=11 // pred_check_branch
        %160 = sbr.rel (%p158) target = $region16
      $region15: #{innernet_forward.6} parent=11 // pred_region
        _
      $region16: #{innernet_forward.6} parent=11 // pred_fallthru
        _
      // Predicated region
      $region17: #{innernet_forward.6} parent=11 // pred_check
        %p161 = pneg %p80
      $region18: #{innernet_forward.6} parent=11 // pred_check_branch
        %163 = sbr.rel (%p161) target = $region20
      $region19: #{innernet_forward.6} parent=11 // pred_region
        _
      $region20: #{innernet_forward.6} parent=11 // pred_fallthru
        _
      // Predicated region
      $region21: #{innernet_forward.6} parent=11 // pred_check
        %p164 = pneg %p101
      $region22: #{innernet_forward.6} parent=11 // pred_check_branch
        %166 = sbr.rel (%p164) target = $region24
      $region23: #{innernet_forward.6} parent=11 // pred_region
        _
      $region24: #{innernet_forward.6} parent=11 // pred_fallthru
        _
    $region12: #{innernet_forward.6} parent=5 // pred_fallthru
      _
    %p167 = scmp.lt.s32.totalorder %s12, 4
    // Predicated region
    $region25: #{innernet_forward.6} parent=5 // pred_check
      %p168 = pneg %p167
    $region26: #{innernet_forward.6} parent=5 // pred_check_branch
      %170 = sbr.rel (%p168) target = $region28
    $region27: #{innernet_forward.6} parent=5 // pred_region
      // Predicated region
      $region29: #{innernet_forward.6} parent=27 // pred_check
        %p171 = pneg %p32
      $region30: #{innernet_forward.6} parent=27 // pred_check_branch
        %173 = sbr.rel (%p171) target = $region32
      $region31: #{innernet_forward.6} parent=27 // pred_region
        %s174 = smul.u32 32, %s12
        %s175 = ssub.s32 125, %s174
        %p176 = scmp.lt.s32.totalorder %s175, 32
        %s177 = scalar_select %p176, %s175, 32
        %s178 = smul.u32 64, %s177
        %p179 = scmp.lt.s32.totalorder %s174, 124
        %s180 = scalar_select %p179, %s174, 124
        %s181 = smul.addr %s180, 4
        %s182 = scalar_lea.vmem %s0, %s181
        %s183 = smul.u32 32, %s12
        %s184 = ssub.s32 125, %s183
        %p185 = scmp.lt.s32.totalorder %s184, 32
        %s186 = scalar_select %p185, %s184, 32
        %s187 = smul.u32 64, %s186
      $region32: #{innernet_forward.6} parent=27 // pred_fallthru
        _
    $region28: #{innernet_forward.6} parent=5 // pred_fallthru
      _
    %p188 = scmp.le.s32.totalorder 1, %s12
    %p189 = scmp.lt.s32.totalorder %s12, 5
    %p190 = pnand %p188, %p189
    %p191 = pneg %p190
    // Predicated region
    $region33: #{innernet_forward.6} parent=5 // pred_check
      _
    $region34: #{innernet_forward.6} parent=5 // pred_check_branch
      %193 = sbr.rel (%p190) target = $region36
    $region35: #{innernet_forward.6} parent=5 // pred_region
      %s194 = ssub.s32 %s12, 1
      %s195 = smul.u32 32, %s17
      %s196 = ssub.s32 125, %s195
      %p197 = scmp.lt.s32.totalorder %s196, 32
      %s198 = scalar_select %p197, %s196, 32
      %s199 = smul.u32 64, %s198
      %p200 = scmp.lt.s32.totalorder %s195, 124
      %s201 = scalar_select %p200, %s195, 124
      %s202 = smul.addr %s201, 4
      %s203 = scalar_lea.vmem %s0, %s202
      %p204 = pneg %p38
      %p205 = pneg %p35
      %p206 = pneg %p59
      %p207 = pneg %p56
      %p208 = pneg %p80
      %p209 = pneg %p77
      %p210 = pneg %p101
      %p211 = pneg %p98
      %p212 = pneg %p122
      %p213 = pneg %p119
      %p214 = pneg %p143
      %p215 = pneg %p140
      %s216 = smul.u32 32, %s17
      %s217 = ssub.s32 125, %s216
      %p218 = scmp.lt.s32.totalorder %s217, 32
      %s219 = scalar_select %p218, %s217, 32
      %s220 = smul.u32 64, %s219
      %p221 = scmp.lt.s32.totalorder %s216, 124
      %s222 = scalar_select %p221, %s216, 124
      %s223 = smul.addr %s222, 4
      %s224 = scalar_lea.vmem %s0, %s223
      %s225 = smul.u32 32, %s17
      %s226 = ssub.s32 125, %s225
      %p227 = scmp.lt.s32.totalorder %s226, 32
      %s228 = scalar_select %p227, %s226, 32
      %s229 = smul.u32 64, %s228
      %p231 = scmp.eq.s32.totalorder %s17, 0
      // Predicated region
      $region37: #{innernet_forward.6} parent=35 // pred_check
        %p232 = pneg %p231
      $region38: #{innernet_forward.6} parent=35 // pred_check_branch
        %234 = sbr.rel (%p232) target = $region40
      $region39: #{innernet_forward.6} parent=35 // pred_region
        %vm235 = vcmask 516096
        %236 = vst.msk [vmem:[%s4] sm:$0x1] %vm235, 0.0
        %237 = vst.msk [vmem:[%s5] sm:$0x1] %vm235, 0.0
      $region40: #{innernet_forward.6} parent=35 // pred_fallthru
        _
      %v238 = vld [vmem:[%s224] sm:$0xf]
      %v239 = vld [vmem:[%s224 + $0x4] sm:$0xf]
      %v240 = vld [vmem:[%s224 + $0x8] sm:$0xf]
      %v241 = vld [vmem:[%s224 + $0xc] sm:$0xf]
      %v242 = vld [vmem:[%s224 + $0x10] sm:$0xf]
      %v243 = vld [vmem:[%s224 + $0x14] sm:$0xf]
      %v244 = vld [vmem:[%s224 + $0x18] sm:$0xf]
      %v245 = vld [vmem:[%s224 + $0x1c] sm:$0xf]
      %v246 = vld [vmem:[%s224 + $0x20] sm:$0xf]
      %v247 = vld [vmem:[%s224 + $0x24] sm:$0xf]
      %v248 = vld [vmem:[%s224 + $0x28] sm:$0xf]
      %v249 = vld [vmem:[%s224 + $0x2c] sm:$0xf]
      %v250 = vld [vmem:[%s224 + $0x30] sm:$0xf]
      %v251 = vld [vmem:[%s224 + $0x34] sm:$0xf]
      %v252 = vld [vmem:[%s224 + $0x38] sm:$0xf]
      %v253 = vld [vmem:[%s224 + $0x3c] sm:$0xf]
      %v254 = vld [vmem:[%s224 + $0x40] sm:$0xf]
      %v255 = vld [vmem:[%s224 + $0x44] sm:$0xf]
      %v256 = vld [vmem:[%s224 + $0x48] sm:$0xf]
      %v257 = vld [vmem:[%s224 + $0x4c] sm:$0xf]
      %v258 = vld [vmem:[%s224 + $0x50] sm:$0xf]
      %v259 = vld [vmem:[%s224 + $0x54] sm:$0xf]
      %v260 = vld [vmem:[%s224 + $0x58] sm:$0xf]
      %v261 = vld [vmem:[%s224 + $0x5c] sm:$0xf]
      %v262 = vld [vmem:[%s224 + $0x60] sm:$0xf]
      %v263 = vld [vmem:[%s224 + $0x64] sm:$0xf]
      %v264 = vld [vmem:[%s224 + $0x68] sm:$0xf]
      %v265 = vld [vmem:[%s224 + $0x6c] sm:$0xf]
      %v266 = vld [vmem:[%s224 + $0x70] sm:$0xf]
      %v267 = vld [vmem:[%s224 + $0x74] sm:$0xf]
      %v268 = vld [vmem:[%s224 + $0x78] sm:$0xf]
      %v269 = vld [vmem:[%s224 + $0x7c] sm:$0xf]
      %v270 = vunpack.c.l.bf16 %v238
      %v271 = vunpack.c.l.bf16 %v239
      %v272 = vunpack.c.l.bf16 %v240
      %v273 = vunpack.c.l.bf16 %v241
      %v274 = vunpack.c.l.bf16 %v242
      %v275 = vunpack.c.l.bf16 %v243
      %v276 = vunpack.c.l.bf16 %v244
      %v277 = vunpack.c.l.bf16 %v245
      %v278 = vunpack.c.l.bf16 %v246
      %v279 = vunpack.c.l.bf16 %v247
      %v280 = vunpack.c.l.bf16 %v248
      %v281 = vunpack.c.l.bf16 %v249
      %v282 = vunpack.c.l.bf16 %v250
      %v283 = vunpack.c.l.bf16 %v251
      %v284 = vunpack.c.l.bf16 %v252
      %v285 = vunpack.c.l.bf16 %v253
      %v286 = vunpack.c.l.bf16 %v254
      %v287 = vunpack.c.l.bf16 %v255
      %v288 = vunpack.c.l.bf16 %v256
      %v289 = vunpack.c.l.bf16 %v257
      %v290 = vunpack.c.l.bf16 %v258
      %v291 = vunpack.c.l.bf16 %v259
      %v292 = vunpack.c.l.bf16 %v260
      %v293 = vunpack.c.l.bf16 %v261
      %v294 = vunpack.c.l.bf16 %v262
      %v295 = vunpack.c.l.bf16 %v263
      %v296 = vunpack.c.l.bf16 %v264
      %v297 = vunpack.c.l.bf16 %v265
      %v298 = vunpack.c.l.bf16 %v266
      %v299 = vunpack.c.l.bf16 %v267
      %v300 = vunpack.c.l.bf16 %v268
      %v301 = vunpack.c.l.bf16 %v269
      %v302 = vld [vmem:[%s1] sm:$0x1]
      %v304 = vlaneseq
      %v305 = vshrl.u32 %v304, 7
      %v306 = vsub.s32 0, %v305
      %v307 = vrot.slane %v302, %v306
      %v309 = vmul.f32 %v270, %v307
      %v310 = vmul.f32 %v271, %v307
      %v311 = vmul.f32 %v272, %v307
      %v312 = vmul.f32 %v273, %v307
      %v313 = vmul.f32 %v274, %v307
      %v314 = vmul.f32 %v275, %v307
      %v315 = vmul.f32 %v276, %v307
      %v316 = vmul.f32 %v277, %v307
      %v317 = vmul.f32 %v278, %v307
      %v318 = vmul.f32 %v279, %v307
      %v319 = vmul.f32 %v280, %v307
      %v320 = vmul.f32 %v281, %v307
      %v321 = vmul.f32 %v282, %v307
      %v322 = vmul.f32 %v283, %v307
      %v323 = vmul.f32 %v284, %v307
      %v324 = vmul.f32 %v285, %v307
      %v325 = vmul.f32 %v286, %v307
      %v326 = vmul.f32 %v287, %v307
      %v327 = vmul.f32 %v288, %v307
      %v328 = vmul.f32 %v289, %v307
      %v329 = vmul.f32 %v290, %v307
      %v330 = vmul.f32 %v291, %v307
      %v331 = vmul.f32 %v292, %v307
      %v332 = vmul.f32 %v293, %v307
      %v333 = vmul.f32 %v294, %v307
      %v334 = vmul.f32 %v295, %v307
      %v335 = vmul.f32 %v296, %v307
      %v336 = vmul.f32 %v297, %v307
      %v337 = vmul.f32 %v298, %v307
      %v338 = vmul.f32 %v299, %v307
      %v339 = vmul.f32 %v300, %v307
      %v340 = vmul.f32 %v301, %v307
      %v341 = vld [vmem:[%s2] sm:$0x1]
      %v343 = vlaneseq
      %v344 = vshrl.u32 %v343, 7
      %v345 = vsub.s32 0, %v344
      %v346 = vrot.slane %v341, %v345
      %v348 = vadd.f32 %v309, %v346
      %v349 = vadd.f32 %v310, %v346
      %v350 = vadd.f32 %v311, %v346
      %v351 = vadd.f32 %v312, %v346
      %v352 = vadd.f32 %v313, %v346
      %v353 = vadd.f32 %v314, %v346
      %v354 = vadd.f32 %v315, %v346
      %v355 = vadd.f32 %v316, %v346
      %v356 = vadd.f32 %v317, %v346
      %v357 = vadd.f32 %v318, %v346
      %v358 = vadd.f32 %v319, %v346
      %v359 = vadd.f32 %v320, %v346
      %v360 = vadd.f32 %v321, %v346
      %v361 = vadd.f32 %v322, %v346
      %v362 = vadd.f32 %v323, %v346
      %v363 = vadd.f32 %v324, %v346
      %v364 = vadd.f32 %v325, %v346
      %v365 = vadd.f32 %v326, %v346
      %v366 = vadd.f32 %v327, %v346
      %v367 = vadd.f32 %v328, %v346
      %v368 = vadd.f32 %v329, %v346
      %v369 = vadd.f32 %v330, %v346
      %v370 = vadd.f32 %v331, %v346
      %v371 = vadd.f32 %v332, %v346
      %v372 = vadd.f32 %v333, %v346
      %v373 = vadd.f32 %v334, %v346
      %v374 = vadd.f32 %v335, %v346
      %v375 = vadd.f32 %v336, %v346
      %v376 = vadd.f32 %v337, %v346
      %v377 = vadd.f32 %v338, %v346
      %v378 = vadd.f32 %v339, %v346
      %v379 = vadd.f32 %v340, %v346
      %v380 = vmax.f32 %v348, 0.0
      %v381 = vmax.f32 %v349, 0.0
      %v382 = vmax.f32 %v350, 0.0
      %v383 = vmax.f32 %v351, 0.0
      %v384 = vmax.f32 %v352, 0.0
      %v385 = vmax.f32 %v353, 0.0
      %v386 = vmax.f32 %v354, 0.0
      %v387 = vmax.f32 %v355, 0.0
      %v388 = vmax.f32 %v356, 0.0
      %v389 = vmax.f32 %v357, 0.0
      %v390 = vmax.f32 %v358, 0.0
      %v391 = vmax.f32 %v359, 0.0
      %v392 = vmax.f32 %v360, 0.0
      %v393 = vmax.f32 %v361, 0.0
      %v394 = vmax.f32 %v362, 0.0
      %v395 = vmax.f32 %v363, 0.0
      %v396 = vmax.f32 %v364, 0.0
      %v397 = vmax.f32 %v365, 0.0
      %v398 = vmax.f32 %v366, 0.0
      %v399 = vmax.f32 %v367, 0.0
      %v400 = vmax.f32 %v368, 0.0
      %v401 = vmax.f32 %v369, 0.0
      %v402 = vmax.f32 %v370, 0.0
      %v403 = vmax.f32 %v371, 0.0
      %v404 = vmax.f32 %v372, 0.0
      %v405 = vmax.f32 %v373, 0.0
      %v406 = vmax.f32 %v374, 0.0
      %v407 = vmax.f32 %v375, 0.0
      %v408 = vmax.f32 %v376, 0.0
      %v409 = vmax.f32 %v377, 0.0
      %v410 = vmax.f32 %v378, 0.0
      %v411 = vmax.f32 %v379, 0.0
      %s412 = smul.u32 %s17, 256
      %v413 = vlaneseq
      %v414 = vshrl.u32 %v413, 7
      %v415 = vadd.s32 %v414, 8
      %v416 = vadd.s32 %v414, 16
      %v417 = vadd.s32 %v414, 24
      %v418 = vadd.s32 %v414, 32
      %v419 = vadd.s32 %v414, 40
      %v420 = vadd.s32 %v414, 48
      %v421 = vadd.s32 %v414, 56
      %v422 = vadd.s32 %v414, 64
      %v423 = vadd.s32 %v414, 72
      %v424 = vadd.s32 %v414, 80
      %v425 = vadd.s32 %v414, 88
      %v426 = vadd.s32 %v414, 96
      %v427 = vadd.s32 %v414, 104
      %v428 = vadd.s32 %v414, 112
      %v429 = vadd.s32 %v414, 120
      %v430 = vadd.s32 %v414, 128
      %v431 = vadd.s32 %v414, 136
      %v432 = vadd.s32 %v414, 144
      %v433 = vadd.s32 %v414, 152
      %v434 = vadd.s32 %v414, 160
      %v435 = vadd.s32 %v414, 168
      %v436 = vadd.s32 %v414, 176
      %v437 = vadd.s32 %v414, 184
      %v438 = vadd.s32 %v414, 192
      %v439 = vadd.s32 %v414, 200
      %v440 = vadd.s32 %v414, 208
      %v441 = vadd.s32 %v414, 216
      %v442 = vadd.s32 %v414, 224
      %v443 = vadd.s32 %v414, 232
      %v444 = vadd.s32 %v414, 240
      %v445 = vadd.s32 %v414, 248
      %v446 = vstv %s412
      %v447 = vadd.s32 %v446, %v414
      %v448 = vadd.s32 %v446, %v415
      %v449 = vadd.s32 %v446, %v416
      %v450 = vadd.s32 %v446, %v417
      %v451 = vadd.s32 %v446, %v418
      %v452 = vadd.s32 %v446, %v419
      %v453 = vadd.s32 %v446, %v420
      %v454 = vadd.s32 %v446, %v421
      %v455 = vadd.s32 %v446, %v422
      %v456 = vadd.s32 %v446, %v423
      %v457 = vadd.s32 %v446, %v424
      %v458 = vadd.s32 %v446, %v425
      %v459 = vadd.s32 %v446, %v426
      %v460 = vadd.s32 %v446, %v427
      %v461 = vadd.s32 %v446, %v428
      %v462 = vadd.s32 %v446, %v429
      %v463 = vadd.s32 %v446, %v430
      %v464 = vadd.s32 %v446, %v431
      %v465 = vadd.s32 %v446, %v432
      %v466 = vadd.s32 %v446, %v433
      %v467 = vadd.s32 %v446, %v434
      %v468 = vadd.s32 %v446, %v435
      %v469 = vadd.s32 %v446, %v436
      %v470 = vadd.s32 %v446, %v437
      %v471 = vadd.s32 %v446, %v438
      %v472 = vadd.s32 %v446, %v439
      %v473 = vadd.s32 %v446, %v440
      %v474 = vadd.s32 %v446, %v441
      %v475 = vadd.s32 %v446, %v442
      %v476 = vadd.s32 %v446, %v443
      %v477 = vadd.s32 %v446, %v444
      %v478 = vadd.s32 %v446, %v445
      %vm479 = vcmp.lt.s32.totalorder %v447, 1000
      %vm480 = vcmp.lt.s32.totalorder %v448, 1000
      %vm481 = vcmp.lt.s32.totalorder %v449, 1000
      %vm482 = vcmp.lt.s32.totalorder %v450, 1000
      %vm483 = vcmp.lt.s32.totalorder %v451, 1000
      %vm484 = vcmp.lt.s32.totalorder %v452, 1000
      %vm485 = vcmp.lt.s32.totalorder %v453, 1000
      %vm486 = vcmp.lt.s32.totalorder %v454, 1000
      %vm487 = vcmp.lt.s32.totalorder %v455, 1000
      %vm488 = vcmp.lt.s32.totalorder %v456, 1000
      %vm489 = vcmp.lt.s32.totalorder %v457, 1000
      %vm490 = vcmp.lt.s32.totalorder %v458, 1000
      %vm491 = vcmp.lt.s32.totalorder %v459, 1000
      %vm492 = vcmp.lt.s32.totalorder %v460, 1000
      %vm493 = vcmp.lt.s32.totalorder %v461, 1000
      %vm494 = vcmp.lt.s32.totalorder %v462, 1000
      %vm495 = vcmp.lt.s32.totalorder %v463, 1000
      %vm496 = vcmp.lt.s32.totalorder %v464, 1000
      %vm497 = vcmp.lt.s32.totalorder %v465, 1000
      %vm498 = vcmp.lt.s32.totalorder %v466, 1000
      %vm499 = vcmp.lt.s32.totalorder %v467, 1000
      %vm500 = vcmp.lt.s32.totalorder %v468, 1000
      %vm501 = vcmp.lt.s32.totalorder %v469, 1000
      %vm502 = vcmp.lt.s32.totalorder %v470, 1000
      %vm503 = vcmp.lt.s32.totalorder %v471, 1000
      %vm504 = vcmp.lt.s32.totalorder %v472, 1000
      %vm505 = vcmp.lt.s32.totalorder %v473, 1000
      %vm506 = vcmp.lt.s32.totalorder %v474, 1000
      %vm507 = vcmp.lt.s32.totalorder %v475, 1000
      %vm508 = vcmp.lt.s32.totalorder %v476, 1000
      %vm509 = vcmp.lt.s32.totalorder %v477, 1000
      %vm510 = vcmp.lt.s32.totalorder %v478, 1000
      %v511 = vsel %vm479, 1, 0
      %v512 = vsel %vm480, 1, 0
      %v513 = vsel %vm481, 1, 0
      %v514 = vsel %vm482, 1, 0
      %v515 = vsel %vm483, 1, 0
      %v516 = vsel %vm484, 1, 0
      %v517 = vsel %vm485, 1, 0
      %v518 = vsel %vm486, 1, 0
      %v519 = vsel %vm487, 1, 0
      %v520 = vsel %vm488, 1, 0
      %v521 = vsel %vm489, 1, 0
      %v522 = vsel %vm490, 1, 0
      %v523 = vsel %vm491, 1, 0
      %v524 = vsel %vm492, 1, 0
      %v525 = vsel %vm493, 1, 0
      %v526 = vsel %vm494, 1, 0
      %v527 = vsel %vm495, 1, 0
      %v528 = vsel %vm496, 1, 0
      %v529 = vsel %vm497, 1, 0
      %v530 = vsel %vm498, 1, 0
      %v531 = vsel %vm499, 1, 0
      %v532 = vsel %vm500, 1, 0
      %v533 = vsel %vm501, 1, 0
      %v534 = vsel %vm502, 1, 0
      %v535 = vsel %vm503, 1, 0
      %v536 = vsel %vm504, 1, 0
      %v537 = vsel %vm505, 1, 0
      %v538 = vsel %vm506, 1, 0
      %v539 = vsel %vm507, 1, 0
      %v540 = vsel %vm508, 1, 0
      %v541 = vsel %vm509, 1, 0
      %v542 = vsel %vm510, 1, 0
      %vm543 = vcmp.eq.s32.totalorder %v511, 1
      %vm544 = vcmp.eq.s32.totalorder %v512, 1
      %vm545 = vcmp.eq.s32.totalorder %v513, 1
      %vm546 = vcmp.eq.s32.totalorder %v514, 1
      %vm547 = vcmp.eq.s32.totalorder %v515, 1
      %vm548 = vcmp.eq.s32.totalorder %v516, 1
      %vm549 = vcmp.eq.s32.totalorder %v517, 1
      %vm550 = vcmp.eq.s32.totalorder %v518, 1
      %vm551 = vcmp.eq.s32.totalorder %v519, 1
      %vm552 = vcmp.eq.s32.totalorder %v520, 1
      %vm553 = vcmp.eq.s32.totalorder %v521, 1
      %vm554 = vcmp.eq.s32.totalorder %v522, 1
      %vm555 = vcmp.eq.s32.totalorder %v523, 1
      %vm556 = vcmp.eq.s32.totalorder %v524, 1
      %vm557 = vcmp.eq.s32.totalorder %v525, 1
      %vm558 = vcmp.eq.s32.totalorder %v526, 1
      %vm559 = vcmp.eq.s32.totalorder %v527, 1
      %vm560 = vcmp.eq.s32.totalorder %v528, 1
      %vm561 = vcmp.eq.s32.totalorder %v529, 1
      %vm562 = vcmp.eq.s32.totalorder %v530, 1
      %vm563 = vcmp.eq.s32.totalorder %v531, 1
      %vm564 = vcmp.eq.s32.totalorder %v532, 1
      %vm565 = vcmp.eq.s32.totalorder %v533, 1
      %vm566 = vcmp.eq.s32.totalorder %v534, 1
      %vm567 = vcmp.eq.s32.totalorder %v535, 1
      %vm568 = vcmp.eq.s32.totalorder %v536, 1
      %vm569 = vcmp.eq.s32.totalorder %v537, 1
      %vm570 = vcmp.eq.s32.totalorder %v538, 1
      %vm571 = vcmp.eq.s32.totalorder %v539, 1
      %vm572 = vcmp.eq.s32.totalorder %v540, 1
      %vm573 = vcmp.eq.s32.totalorder %v541, 1
      %vm574 = vcmp.eq.s32.totalorder %v542, 1
      %v575 = vsel %vm543, %v380, 0.0
      %v576 = vsel %vm544, %v381, 0.0
      %v577 = vsel %vm545, %v382, 0.0
      %v578 = vsel %vm546, %v383, 0.0
      %v579 = vsel %vm547, %v384, 0.0
      %v580 = vsel %vm548, %v385, 0.0
      %v581 = vsel %vm549, %v386, 0.0
      %v582 = vsel %vm550, %v387, 0.0
      %v583 = vsel %vm551, %v388, 0.0
      %v584 = vsel %vm552, %v389, 0.0
      %v585 = vsel %vm553, %v390, 0.0
      %v586 = vsel %vm554, %v391, 0.0
      %v587 = vsel %vm555, %v392, 0.0
      %v588 = vsel %vm556, %v393, 0.0
      %v589 = vsel %vm557, %v394, 0.0
      %v590 = vsel %vm558, %v395, 0.0
      %v591 = vsel %vm559, %v396, 0.0
      %v592 = vsel %vm560, %v397, 0.0
      %v593 = vsel %vm561, %v398, 0.0
      %v594 = vsel %vm562, %v399, 0.0
      %v595 = vsel %vm563, %v400, 0.0
      %v596 = vsel %vm564, %v401, 0.0
      %v597 = vsel %vm565, %v402, 0.0
      %v598 = vsel %vm566, %v403, 0.0
      %v599 = vsel %vm567, %v404, 0.0
      %v600 = vsel %vm568, %v405, 0.0
      %v601 = vsel %vm569, %v406, 0.0
      %v602 = vsel %vm570, %v407, 0.0
      %v603 = vsel %vm571, %v408, 0.0
      %v604 = vsel %vm572, %v409, 0.0
      %v605 = vsel %vm573, %v410, 0.0
      %v606 = vsel %vm574, %v411, 0.0
      %v607 = vpack.c.bf16 %v576, %v575
      %v608 = vpack.c.bf16 %v578, %v577
      %v609 = vpack.c.bf16 %v580, %v579
      %v610 = vpack.c.bf16 %v582, %v581
      %v611 = vpack.c.bf16 %v584, %v583
      %v612 = vpack.c.bf16 %v586, %v585
      %v613 = vpack.c.bf16 %v588, %v587
      %v614 = vpack.c.bf16 %v590, %v589
      %v615 = vpack.c.bf16 %v592, %v591
      %v616 = vpack.c.bf16 %v594, %v593
      %v617 = vpack.c.bf16 %v596, %v595
      %v618 = vpack.c.bf16 %v598, %v597
      %v619 = vpack.c.bf16 %v600, %v599
      %v620 = vpack.c.bf16 %v602, %v601
      %v621 = vpack.c.bf16 %v604, %v603
      %v622 = vpack.c.bf16 %v606, %v605
      %v623 = vld [vmem:[%s3] sm:$0xf]
      %v624 = vld [vmem:[%s3 + $0x4] sm:$0xf]
      %v625 = vld [vmem:[%s3 + $0x8] sm:$0xf]
      %v626 = vld [vmem:[%s3 + $0xc] sm:$0xf]
      %v627 = vld [vmem:[%s3 + $0x10] sm:$0xf]
      %v628 = vld [vmem:[%s3 + $0x14] sm:$0xf]
      %v629 = vld [vmem:[%s3 + $0x18] sm:$0xf]
      %v630 = vld [vmem:[%s3 + $0x1c] sm:$0xf]
      %v639 = vunpack.c.l.b16 %v623
      %v640 = vunpack.c.l.b16 %v624
      %v641 = vunpack.c.l.b16 %v625
      %v642 = vunpack.c.l.b16 %v626
      %v643 = vunpack.c.l.b16 %v627
      %v644 = vunpack.c.l.b16 %v628
      %v645 = vunpack.c.l.b16 %v629
      %v646 = vunpack.c.l.b16 %v630
      %v647 = vpack.c.b16 %v640, %v639
      %v648 = vpack.c.b16 %v642, %v641
      %v649 = vpack.c.b16 %v644, %v643
      %v650 = vpack.c.b16 %v646, %v645
      %vm655 = vcmask 523264
      %v657 = vsel %vm655, %v607, 0
      %v660 = vsel %vm655, %v608, 0
      %v663 = vsel %vm655, %v609, 0
      %v666 = vsel %vm655, %v610, 0
      %v669 = vsel %vm655, %v611, 0
      %v672 = vsel %vm655, %v612, 0
      %v675 = vsel %vm655, %v613, 0
      %v678 = vsel %vm655, %v614, 0
      %v681 = vsel %vm655, %v615, 0
      %v684 = vsel %vm655, %v616, 0
      %v687 = vsel %vm655, %v617, 0
      %v690 = vsel %vm655, %v618, 0
      %v693 = vsel %vm655, %v619, 0
      %v696 = vsel %vm655, %v620, 0
      %v699 = vsel %vm655, %v621, 0
      %v702 = vsel %vm655, %v622, 0
      %704 = vmatprep.subr.bf16.mxu0 0
      %705 = vmatpush1.bf16.msra.mxu0 %v647
      %706 = vmatprep.subr.bf16.mxu0 0
      %707 = vmatpush1.bf16.msra.mxu0 %v648
      %708 = vmatprep.subr.bf16.mxu0 0
      %709 = vmatpush1.bf16.msra.mxu0 %v649
      %710 = vmatprep.subr.bf16.mxu0 0
      %711 = vmatpush1.bf16.msra.mxu0 %v650
      %712 = vmatprep.subr.bf16.mxu0 0
      %713 = vmatpush1.bf16.msra.mxu0 0
      %714 = vmatprep.subr.bf16.mxu0 0
      %715 = vmatpush1.bf16.msra.mxu0 0
      %716 = vmatprep.subr.bf16.mxu0 0
      %717 = vmatpush1.bf16.msra.mxu0 0
      %718 = vmatprep.subr.bf16.mxu0 0
      %719 = vmatpush1.bf16.msra.mxu0 0
      %720 = vmatprep.subr.bf16.mxu0 0
      %721 = vmatpush1.bf16.msra.mxu0 0
      %722 = vmatprep.subr.bf16.mxu0 0
      %723 = vmatpush1.bf16.msra.mxu0 0
      %724 = vmatprep.subr.bf16.mxu0 0
      %725 = vmatpush1.bf16.msra.mxu0 0
      %726 = vmatprep.subr.bf16.mxu0 0
      %727 = vmatpush1.bf16.msra.mxu0 0
      %728 = vmatprep.subr.bf16.mxu0 0
      %729 = vmatpush1.bf16.msra.mxu0 0
      %730 = vmatprep.subr.bf16.mxu0 0
      %731 = vmatpush1.bf16.msra.mxu0 0
      %732 = vmatprep.subr.bf16.mxu0 0
      %733 = vmatpush1.bf16.msra.mxu0 0
      %734 = vmatprep.subr.bf16.mxu0 0
      %735 = vmatpush1.bf16.msra.mxu0 0
      %736 = vmatprep.mubr.bf16.mxu0 0
      %737 = vmatmul.mubr.bf16.gmra.mrb[0].mxu0 %v657
      %v738 = vpop.f32.mrb[0].mxu0
      %v739 = vadd.f32 0.0, %v738
      %v740 = vpop.f32.mrb[0].mxu0
      %v741 = vpop.f32.mrb[0].mxu0
      %v742 = vadd.f32 0.0, %v741
      %v743 = vpop.f32.mrb[0].mxu0
      %744 = vmatprep.mubr.bf16.mxu0 0
      %745 = vmatmul.mubr.bf16.gmra.mrb[0].mxu0 %v660
      %v746 = vpop.f32.mrb[0].mxu0
      %v747 = vadd.f32 0.0, %v746
      %v748 = vpop.f32.mrb[0].mxu0
      %v749 = vpop.f32.mrb[0].mxu0
      %v750 = vadd.f32 0.0, %v749
      %v751 = vpop.f32.mrb[0].mxu0
      %752 = vmatprep.mubr.bf16.mxu0 0
      %753 = vmatmul.mubr.bf16.gmra.mrb[0].mxu0 %v663
      %v754 = vpop.f32.mrb[0].mxu0
      %v755 = vadd.f32 0.0, %v754
      %v756 = vpop.f32.mrb[0].mxu0
      %v757 = vpop.f32.mrb[0].mxu0
      %v758 = vadd.f32 0.0, %v757
      %v759 = vpop.f32.mrb[0].mxu0
      %760 = vmatprep.mubr.bf16.mxu0 0
      %761 = vmatmul.mubr.bf16.gmra.mrb[0].mxu0 %v666
      %v762 = vpop.f32.mrb[0].mxu0
      %v763 = vadd.f32 0.0, %v762
      %v764 = vpop.f32.mrb[0].mxu0
      %v765 = vpop.f32.mrb[0].mxu0
      %v766 = vadd.f32 0.0, %v765
      %v767 = vpop.f32.mrb[0].mxu0
      %768 = vmatprep.mubr.bf16.mxu0 0
      %769 = vmatmul.mubr.bf16.gmra.mrb[0].mxu0 %v669
      %v770 = vpop.f32.mrb[0].mxu0
      %v771 = vadd.f32 0.0, %v770
      %v772 = vpop.f32.mrb[0].mxu0
      %v773 = vpop.f32.mrb[0].mxu0
      %v774 = vadd.f32 0.0, %v773
      %v775 = vpop.f32.mrb[0].mxu0
      %776 = vmatprep.mubr.bf16.mxu0 0
      %777 = vmatmul.mubr.bf16.gmra.mrb[0].mxu0 %v672
      %v778 = vpop.f32.mrb[0].mxu0
      %v779 = vadd.f32 0.0, %v778
      %v780 = vpop.f32.mrb[0].mxu0
      %v781 = vpop.f32.mrb[0].mxu0
      %v782 = vadd.f32 0.0, %v781
      %v783 = vpop.f32.mrb[0].mxu0
      %784 = vmatprep.mubr.bf16.mxu0 0
      %785 = vmatmul.mubr.bf16.gmra.mrb[0].mxu0 %v675
      %v786 = vpop.f32.mrb[0].mxu0
      %v787 = vadd.f32 0.0, %v786
      %v788 = vpop.f32.mrb[0].mxu0
      %v789 = vpop.f32.mrb[0].mxu0
      %v790 = vadd.f32 0.0, %v789
      %v791 = vpop.f32.mrb[0].mxu0
      %792 = vmatprep.mubr.bf16.mxu0 0
      %793 = vmatmul.mubr.bf16.gmra.mrb[0].mxu0 %v678
      %v794 = vpop.f32.mrb[0].mxu0
      %v795 = vadd.f32 0.0, %v794
      %v796 = vpop.f32.mrb[0].mxu0
      %v797 = vpop.f32.mrb[0].mxu0
      %v798 = vadd.f32 0.0, %v797
      %v799 = vpop.f32.mrb[0].mxu0
      %800 = vmatprep.mubr.bf16.mxu0 0
      %801 = vmatmul.mubr.bf16.gmra.mrb[0].mxu0 %v681
      %v802 = vpop.f32.mrb[0].mxu0
      %v803 = vadd.f32 0.0, %v802
      %v804 = vpop.f32.mrb[0].mxu0
      %v805 = vpop.f32.mrb[0].mxu0
      %v806 = vadd.f32 0.0, %v805
      %v807 = vpop.f32.mrb[0].mxu0
      %808 = vmatprep.mubr.bf16.mxu0 0
      %809 = vmatmul.mubr.bf16.gmra.mrb[0].mxu0 %v684
      %v810 = vpop.f32.mrb[0].mxu0
      %v811 = vadd.f32 0.0, %v810
      %v812 = vpop.f32.mrb[0].mxu0
      %v813 = vpop.f32.mrb[0].mxu0
      %v814 = vadd.f32 0.0, %v813
      %v815 = vpop.f32.mrb[0].mxu0
      %816 = vmatprep.mubr.bf16.mxu0 0
      %817 = vmatmul.mubr.bf16.gmra.mrb[0].mxu0 %v687
      %v818 = vpop.f32.mrb[0].mxu0
      %v819 = vadd.f32 0.0, %v818
      %v820 = vpop.f32.mrb[0].mxu0
      %v821 = vpop.f32.mrb[0].mxu0
      %v822 = vadd.f32 0.0, %v821
      %v823 = vpop.f32.mrb[0].mxu0
      %824 = vmatprep.mubr.bf16.mxu0 0
      %825 = vmatmul.mubr.bf16.gmra.mrb[0].mxu0 %v690
      %v826 = vpop.f32.mrb[0].mxu0
      %v827 = vadd.f32 0.0, %v826
      %v828 = vpop.f32.mrb[0].mxu0
      %v829 = vpop.f32.mrb[0].mxu0
      %v830 = vadd.f32 0.0, %v829
      %v831 = vpop.f32.mrb[0].mxu0
      %832 = vmatprep.mubr.bf16.mxu0 0
      %833 = vmatmul.mubr.bf16.gmra.mrb[0].mxu0 %v693
      %v834 = vpop.f32.mrb[0].mxu0
      %v835 = vadd.f32 0.0, %v834
      %v836 = vpop.f32.mrb[0].mxu0
      %v837 = vpop.f32.mrb[0].mxu0
      %v838 = vadd.f32 0.0, %v837
      %v839 = vpop.f32.mrb[0].mxu0
      %840 = vmatprep.mubr.bf16.mxu0 0
      %841 = vmatmul.mubr.bf16.gmra.mrb[0].mxu0 %v696
      %v842 = vpop.f32.mrb[0].mxu0
      %v843 = vadd.f32 0.0, %v842
      %v844 = vpop.f32.mrb[0].mxu0
      %v845 = vpop.f32.mrb[0].mxu0
      %v846 = vadd.f32 0.0, %v845
      %v847 = vpop.f32.mrb[0].mxu0
      %848 = vmatprep.mubr.bf16.mxu0 0
      %849 = vmatmul.mubr.bf16.gmra.mrb[0].mxu0 %v699
      %v850 = vpop.f32.mrb[0].mxu0
      %v851 = vadd.f32 0.0, %v850
      %v852 = vpop.f32.mrb[0].mxu0
      %v853 = vpop.f32.mrb[0].mxu0
      %v854 = vadd.f32 0.0, %v853
      %v855 = vpop.f32.mrb[0].mxu0
      %856 = vmatprep.mubr.bf16.mxu0 0
      %857 = vmatmul.mubr.bf16.gmra.mrb[0].mxu0 %v702
      %v858 = vpop.f32.mrb[0].mxu0
      %v859 = vadd.f32 0.0, %v858
      %v860 = vpop.f32.mrb[0].mxu0
      %v861 = vpop.f32.mrb[0].mxu0
      %v862 = vadd.f32 0.0, %v861
      %v863 = vpop.f32.mrb[0].mxu0
      %864 = vdwg.mxu0
      %v865 = vld [vmem:[%s4] sm:$0x1]
      %v866 = vsel %vm655, %v739, 0.0
      %v867 = vsel %vm655, %v742, 0.0
      %v868 = vadd.f32 %v866, %v867
      %v869 = vsel %vm655, %v747, 0.0
      %v870 = vadd.f32 %v868, %v869
      %v871 = vsel %vm655, %v750, 0.0
      %v872 = vadd.f32 %v870, %v871
      %v873 = vsel %vm655, %v755, 0.0
      %v874 = vadd.f32 %v872, %v873
      %v875 = vsel %vm655, %v758, 0.0
      %v876 = vadd.f32 %v874, %v875
      %v877 = vsel %vm655, %v763, 0.0
      %v878 = vadd.f32 %v876, %v877
      %v879 = vsel %vm655, %v766, 0.0
      %v880 = vadd.f32 %v878, %v879
      %v881 = vsel %vm655, %v771, 0.0
      %v882 = vadd.f32 %v880, %v881
      %v883 = vsel %vm655, %v774, 0.0
      %v884 = vadd.f32 %v882, %v883
      %v885 = vsel %vm655, %v779, 0.0
      %v886 = vadd.f32 %v884, %v885
      %v887 = vsel %vm655, %v782, 0.0
      %v888 = vadd.f32 %v886, %v887
      %v889 = vsel %vm655, %v787, 0.0
      %v890 = vadd.f32 %v888, %v889
      %v891 = vsel %vm655, %v790, 0.0
      %v892 = vadd.f32 %v890, %v891
      %v893 = vsel %vm655, %v795, 0.0
      %v894 = vadd.f32 %v892, %v893
      %v895 = vsel %vm655, %v798, 0.0
      %v896 = vadd.f32 %v894, %v895
      %v897 = vsel %vm655, %v803, 0.0
      %v898 = vadd.f32 %v896, %v897
      %v899 = vsel %vm655, %v806, 0.0
      %v900 = vadd.f32 %v898, %v899
      %v901 = vsel %vm655, %v811, 0.0
      %v902 = vadd.f32 %v900, %v901
      %v903 = vsel %vm655, %v814, 0.0
      %v904 = vadd.f32 %v902, %v903
      %v905 = vsel %vm655, %v819, 0.0
      %v906 = vadd.f32 %v904, %v905
      %v907 = vsel %vm655, %v822, 0.0
      %v908 = vadd.f32 %v906, %v907
      %v909 = vsel %vm655, %v827, 0.0
      %v910 = vadd.f32 %v908, %v909
      %v911 = vsel %vm655, %v830, 0.0
      %v912 = vadd.f32 %v910, %v911
      %v913 = vsel %vm655, %v835, 0.0
      %v914 = vadd.f32 %v912, %v913
      %v915 = vsel %vm655, %v838, 0.0
      %v916 = vadd.f32 %v914, %v915
      %v917 = vsel %vm655, %v843, 0.0
      %v918 = vadd.f32 %v916, %v917
      %v919 = vsel %vm655, %v846, 0.0
      %v920 = vadd.f32 %v918, %v919
      %v921 = vsel %vm655, %v851, 0.0
      %v922 = vadd.f32 %v920, %v921
      %v923 = vsel %vm655, %v854, 0.0
      %v924 = vadd.f32 %v922, %v923
      %v925 = vsel %vm655, %v859, 0.0
      %v926 = vadd.f32 %v924, %v925
      %v927 = vsel %vm655, %v862, 0.0
      %v928 = vadd.f32 %v926, %v927
      %v929 = vrot.slane %v928, 4
      %v930 = vadd.f32 %v928, %v929
      %v931 = vrot.slane %v930, 2
      %v932 = vadd.f32 %v930, %v931
      %v933 = vrot.slane %v932, 1
      %v934 = vadd.f32 %v932, %v933
      %v935 = vadd.f32 %v865, %v934
      %vm936 = vcmask 516096
      %937 = vst.msk [vmem:[%s4] sm:$0x1] %vm936, %v935
      %v938 = vld [vmem:[%s5] sm:$0x1]
      %v939 = vmul.f32 %v739, %v739
      %v940 = vmul.f32 %v742, %v742
      %v941 = vmul.f32 %v747, %v747
      %v942 = vmul.f32 %v750, %v750
      %v943 = vmul.f32 %v755, %v755
      %v944 = vmul.f32 %v758, %v758
      %v945 = vmul.f32 %v763, %v763
      %v946 = vmul.f32 %v766, %v766
      %v947 = vmul.f32 %v771, %v771
      %v948 = vmul.f32 %v774, %v774
      %v949 = vmul.f32 %v779, %v779
      %v950 = vmul.f32 %v782, %v782
      %v951 = vmul.f32 %v787, %v787
      %v952 = vmul.f32 %v790, %v790
      %v953 = vmul.f32 %v795, %v795
      %v954 = vmul.f32 %v798, %v798
      %v955 = vmul.f32 %v803, %v803
      %v956 = vmul.f32 %v806, %v806
      %v957 = vmul.f32 %v811, %v811
      %v958 = vmul.f32 %v814, %v814
      %v959 = vmul.f32 %v819, %v819
      %v960 = vmul.f32 %v822, %v822
      %v961 = vmul.f32 %v827, %v827
      %v962 = vmul.f32 %v830, %v830
      %v963 = vmul.f32 %v835, %v835
      %v964 = vmul.f32 %v838, %v838
      %v965 = vmul.f32 %v843, %v843
      %v966 = vmul.f32 %v846, %v846
      %v967 = vmul.f32 %v851, %v851
      %v968 = vmul.f32 %v854, %v854
      %v969 = vmul.f32 %v859, %v859
      %v970 = vmul.f32 %v862, %v862
      %v971 = vsel %vm655, %v939, 0.0
      %v972 = vsel %vm655, %v940, 0.0
      %v973 = vadd.f32 %v971, %v972
      %v974 = vsel %vm655, %v941, 0.0
      %v975 = vadd.f32 %v973, %v974
      %v976 = vsel %vm655, %v942, 0.0
      %v977 = vadd.f32 %v975, %v976
      %v978 = vsel %vm655, %v943, 0.0
      %v979 = vadd.f32 %v977, %v978
      %v980 = vsel %vm655, %v944, 0.0
      %v981 = vadd.f32 %v979, %v980
      %v982 = vsel %vm655, %v945, 0.0
      %v983 = vadd.f32 %v981, %v982
      %v984 = vsel %vm655, %v946, 0.0
      %v985 = vadd.f32 %v983, %v984
      %v986 = vsel %vm655, %v947, 0.0
      %v987 = vadd.f32 %v985, %v986
      %v988 = vsel %vm655, %v948, 0.0
      %v989 = vadd.f32 %v987, %v988
      %v990 = vsel %vm655, %v949, 0.0
      %v991 = vadd.f32 %v989, %v990
      %v992 = vsel %vm655, %v950, 0.0
      %v993 = vadd.f32 %v991, %v992
      %v994 = vsel %vm655, %v951, 0.0
      %v995 = vadd.f32 %v993, %v994
      %v996 = vsel %vm655, %v952, 0.0
      %v997 = vadd.f32 %v995, %v996
      %v998 = vsel %vm655, %v953, 0.0
      %v999 = vadd.f32 %v997, %v998
      %v1000 = vsel %vm655, %v954, 0.0
      %v1001 = vadd.f32 %v999, %v1000
      %v1002 = vsel %vm655, %v955, 0.0
      %v1003 = vadd.f32 %v1001, %v1002
      %v1004 = vsel %vm655, %v956, 0.0
      %v1005 = vadd.f32 %v1003, %v1004
      %v1006 = vsel %vm655, %v957, 0.0
      %v1007 = vadd.f32 %v1005, %v1006
      %v1008 = vsel %vm655, %v958, 0.0
      %v1009 = vadd.f32 %v1007, %v1008
      %v1010 = vsel %vm655, %v959, 0.0
      %v1011 = vadd.f32 %v1009, %v1010
      %v1012 = vsel %vm655, %v960, 0.0
      %v1013 = vadd.f32 %v1011, %v1012
      %v1014 = vsel %vm655, %v961, 0.0
      %v1015 = vadd.f32 %v1013, %v1014
      %v1016 = vsel %vm655, %v962, 0.0
      %v1017 = vadd.f32 %v1015, %v1016
      %v1018 = vsel %vm655, %v963, 0.0
      %v1019 = vadd.f32 %v1017, %v1018
      %v1020 = vsel %vm655, %v964, 0.0
      %v1021 = vadd.f32 %v1019, %v1020
      %v1022 = vsel %vm655, %v965, 0.0
      %v1023 = vadd.f32 %v1021, %v1022
      %v1024 = vsel %vm655, %v966, 0.0
      %v1025 = vadd.f32 %v1023, %v1024
      %v1026 = vsel %vm655, %v967, 0.0
      %v1027 = vadd.f32 %v1025, %v1026
      %v1028 = vsel %vm655, %v968, 0.0
      %v1029 = vadd.f32 %v1027, %v1028
      %v1030 = vsel %vm655, %v969, 0.0
      %v1031 = vadd.f32 %v1029, %v1030
      %v1032 = vsel %vm655, %v970, 0.0
      %v1033 = vadd.f32 %v1031, %v1032
      %v1034 = vrot.slane %v1033, 4
      %v1035 = vadd.f32 %v1033, %v1034
      %v1036 = vrot.slane %v1035, 2
      %v1037 = vadd.f32 %v1035, %v1036
      %v1038 = vrot.slane %v1037, 1
      %v1039 = vadd.f32 %v1037, %v1038
      %v1040 = vadd.f32 %v938, %v1039
      %1041 = vst.msk [vmem:[%s5] sm:$0x1] %vm936, %v1040
      // Predicated region
      $region41: #{innernet_forward.6} parent=35 // pred_check
        %p1042 = pneg %p119
      $region42: #{innernet_forward.6} parent=35 // pred_check_branch
        %1044 = sbr.rel (%p1042) target = $region44
      $region43: #{innernet_forward.6} parent=35 // pred_region
        _
      $region44: #{innernet_forward.6} parent=35 // pred_fallthru
        _
      // Predicated region
      $region45: #{innernet_forward.6} parent=35 // pred_check
        %p1045 = pneg %p140
      $region46: #{innernet_forward.6} parent=35 // pred_check_branch
        %1047 = sbr.rel (%p1045) target = $region48
      $region47: #{innernet_forward.6} parent=35 // pred_region
        _
      $region48: #{innernet_forward.6} parent=35 // pred_fallthru
        _
      // Predicated region
      $region49: #{innernet_forward.6} parent=35 // pred_check
        %p1048 = pneg %p119
      $region50: #{innernet_forward.6} parent=35 // pred_check_branch
        %1050 = sbr.rel (%p1048) target = $region52
      $region51: #{innernet_forward.6} parent=35 // pred_region
        _
      $region52: #{innernet_forward.6} parent=35 // pred_fallthru
        _
      // Predicated region
      $region53: #{innernet_forward.6} parent=35 // pred_check
        %p1051 = pneg %p140
      $region54: #{innernet_forward.6} parent=35 // pred_check_branch
        %1053 = sbr.rel (%p1051) target = $region56
      $region55: #{innernet_forward.6} parent=35 // pred_region
        _
      $region56: #{innernet_forward.6} parent=35 // pred_fallthru
        _
    $region36: #{innernet_forward.6} parent=5 // pred_fallthru
      _
    %p1054 = scmp.le.s32.totalorder 2, %s12
    // Predicated region
    $region57: #{innernet_forward.6} parent=5 // pred_check
      %p1055 = pneg %p1054
    $region58: #{innernet_forward.6} parent=5 // pred_check_branch
      %1057 = sbr.rel (%p1055) target = $region60
    $region59: #{innernet_forward.6} parent=5 // pred_region
      %s1058 = ssub.s32 %s12, 2
    $region60: #{innernet_forward.6} parent=5 // pred_fallthru
      _
  $region6: #{innernet_forward.6} parent=0 // loop_footer
    %s16 = sadd.s32 1, %s12
  $region7: #{innernet_forward.6} parent=0 // loop_footer_branch
    %11 = sbr.rel target = $region3
  $region8: #{innernet_forward.6} parent=0 // loop_exit
    _

// kernel: innernet_forward.5
$region0: #{innernet_forward.5}
  #allocation0 [shape = 'u32[]', space=smem, size = 0x4, offset = 0x4, fixed_abs, tag = 'smem constant byte address 0x4 - core index']
  #allocation1 [shape = 'u32[144,128]{1,0:T(1,128)}', space=vmem, size = 0x12000, scoped, tag = 'internal scratch']
  %s0 = inlined_call_operand.vmem [shape: bf16[1000,64], index: 0, kind: input, shape index: {}]
  %s1 = inlined_call_operand.vmem [shape: f32[1,64], index: 1, kind: input, shape index: {}]
  %s2 = inlined_call_operand.vmem [shape: f32[1,64], index: 2, kind: input, shape index: {}]
  %s3 = inlined_call_operand.vmem [shape: bf16[64,64], index: 3, kind: input, shape index: {}]
  %s4 = inlined_call_operand.vmem [shape: bf16[1000,64], index: 4, kind: output, shape index: {0}]
  %s5 = inlined_call_operand.vmem [shape: f32[1,64], index: 5, kind: output, shape index: {1}]
  %s6 = inlined_call_operand.vmem [shape: f32[1,64], index: 6, kind: output, shape index: {2}]
  %7 = xla_tuple %s4, %s5, %s6
  %s8 = sld [smem:[#allocation0]]
  $region113: #{innernet_forward.5} parent=0
    _
  %s10 = ssub.s32 1, %s8
  %s11 = scalar_select 0, %s10, %s8
  $region1: #{innernet_forward.5} parent=0
    #allocation2 [shape = 'u8[131072]{0}', space=vmem, size = 0x20000, scoped, tag = 'output window, operand 0']
    loop: start=0, step=1, limit=6
    $region2: #{innernet_forward.5} parent=1 // loop_pre_header
      _
    $region3: #{innernet_forward.5} parent=1 // loop_header
      %s13 = sphi 0, %s17
      %p14 = scmp.ge.s32.totalorder %s13, 6
      %s23 = sphi 0, %s25
      %s26 = sphi 0, %s23
      %s27 = sphi 0, %s26
      %s43 = sphi 0, %s27
      %s47 = sphi 0, %s47
      %s49 = sphi 0, %s47
      %s50 = sphi 0, %s49
      %s64 = sphi 0, %s50
      %s68 = sphi 0, %s68
      %s70 = sphi 0, %s68
      %s71 = sphi 0, %s70
      %s85 = sphi 0, %s71
      %s89 = sphi 0, %s89
      %s91 = sphi 0, %s89
      %s92 = sphi 0, %s91
      %s106 = sphi 0, %s92
      %s112 = sphi 0, %s114
      %s115 = sphi 0, %s112
      %s116 = sphi 0, %s115
      %s132 = sphi 0, %s116
      %s136 = sphi 0, %s136
      %s138 = sphi 0, %s136
      %s139 = sphi 0, %s138
      %s153 = sphi 0, %s139
      %s157 = sphi 0, %s157
      %s159 = sphi 0, %s157
      %s160 = sphi 0, %s159
      %s174 = sphi 0, %s160
    $region4: #{innernet_forward.5} parent=1 // loop_header_branch
      %16 = sbr.rel (%p14) target = $region8
    $region5: #{innernet_forward.5} parent=1 // loop_body
      %s18 = ssub.s32 %s13, 1
      %s19 = ssub.s32 %s13, 2
      %s20 = sadd.s32 %s13, 1
      %s21 = ssub.s32 %s13, %s20
      %p22 = scmp.eq.s32.totalorder %s21, 0
      %s24 = sadd.s32 %s23, 1
      %s25 = scalar_select %p22, %s23, %s24
      %p28 = pneg %p22
      %p29 = scmp.eq.s32.totalorder %s13, 3
      %p30 = por %p28, %p29
      %p31 = scmp.ne.s32.totalorder %s23, %s26
      %p32 = scmp.eq.s32.totalorder %s13, 0
      %p33 = por %p31, %p32
      %p34 = scmp.ne.s32.totalorder %s23, %s26
      %p35 = scmp.eq.s32.totalorder %s18, 3
      %p36 = por %p34, %p35
      %p37 = scmp.ne.s32.totalorder %s26, %s27
      %p38 = scmp.eq.s32.totalorder %s18, 0
      %p39 = por %p37, %p38
      %p40 = scmp.ne.s32.totalorder %s26, %s27
      %p41 = scmp.eq.s32.totalorder %s19, 3
      %p42 = por %p40, %p41
      %p44 = scmp.ne.s32.totalorder %s27, %s43
      %p45 = scmp.eq.s32.totalorder %s19, 0
      %p46 = por %p44, %p45
      %s48 = sadd.s32 %s47, 1
      %p51 = scmp.eq.s32.totalorder %s13, 3
      %p52 = scmp.ne.s32.totalorder %s47, %s49
      %p53 = scmp.eq.s32.totalorder %s13, 0
      %p54 = por %p52, %p53
      %p55 = scmp.ne.s32.totalorder %s47, %s49
      %p56 = scmp.eq.s32.totalorder %s18, 3
      %p57 = por %p55, %p56
      %p58 = scmp.ne.s32.totalorder %s49, %s50
      %p59 = scmp.eq.s32.totalorder %s18, 0
      %p60 = por %p58, %p59
      %p61 = scmp.ne.s32.totalorder %s49, %s50
      %p62 = scmp.eq.s32.totalorder %s19, 3
      %p63 = por %p61, %p62
      %p65 = scmp.ne.s32.totalorder %s50, %s64
      %p66 = scmp.eq.s32.totalorder %s19, 0
      %p67 = por %p65, %p66
      %s69 = sadd.s32 %s68, 1
      %p72 = scmp.eq.s32.totalorder %s13, 3
      %p73 = scmp.ne.s32.totalorder %s68, %s70
      %p74 = scmp.eq.s32.totalorder %s13, 0
      %p75 = por %p73, %p74
      %p76 = scmp.ne.s32.totalorder %s68, %s70
      %p77 = scmp.eq.s32.totalorder %s18, 3
      %p78 = por %p76, %p77
      %p79 = scmp.ne.s32.totalorder %s70, %s71
      %p80 = scmp.eq.s32.totalorder %s18, 0
      %p81 = por %p79, %p80
      %p82 = scmp.ne.s32.totalorder %s70, %s71
      %p83 = scmp.eq.s32.totalorder %s19, 3
      %p84 = por %p82, %p83
      %p86 = scmp.ne.s32.totalorder %s71, %s85
      %p87 = scmp.eq.s32.totalorder %s19, 0
      %p88 = por %p86, %p87
      %s90 = sadd.s32 %s89, 1
      %p93 = scmp.eq.s32.totalorder %s13, 3
      %p94 = scmp.ne.s32.totalorder %s89, %s91
      %p95 = scmp.eq.s32.totalorder %s13, 0
      %p96 = por %p94, %p95
      %p97 = scmp.ne.s32.totalorder %s89, %s91
      %p98 = scmp.eq.s32.totalorder %s18, 3
      %p99 = por %p97, %p98
      %p100 = scmp.ne.s32.totalorder %s91, %s92
      %p101 = scmp.eq.s32.totalorder %s18, 0
      %p102 = por %p100, %p101
      %p103 = scmp.ne.s32.totalorder %s91, %s92
      %p104 = scmp.eq.s32.totalorder %s19, 3
      %p105 = por %p103, %p104
      %p107 = scmp.ne.s32.totalorder %s92, %s106
      %p108 = scmp.eq.s32.totalorder %s19, 0
      %p109 = por %p107, %p108
      %s110 = ssub.s32 %s13, %s20
      %p111 = scmp.eq.s32.totalorder %s110, 0
      %s113 = sadd.s32 %s112, 1
      %s114 = scalar_select %p111, %s112, %s113
      %p117 = pneg %p111
      %p118 = scmp.eq.s32.totalorder %s13, 3
      %p119 = por %p117, %p118
      %p120 = scmp.ne.s32.totalorder %s112, %s115
      %p121 = scmp.eq.s32.totalorder %s13, 0
      %p122 = por %p120, %p121
      %p123 = scmp.ne.s32.totalorder %s112, %s115
      %p124 = scmp.eq.s32.totalorder %s18, 3
      %p125 = por %p123, %p124
      %p126 = scmp.ne.s32.totalorder %s115, %s116
      %p127 = scmp.eq.s32.totalorder %s18, 0
      %p128 = por %p126, %p127
      %p129 = scmp.ne.s32.totalorder %s115, %s116
      %p130 = scmp.eq.s32.totalorder %s19, 3
      %p131 = por %p129, %p130
      %p133 = scmp.ne.s32.totalorder %s116, %s132
      %p134 = scmp.eq.s32.totalorder %s19, 0
      %p135 = por %p133, %p134
      %s137 = sadd.s32 %s136, 1
      %p140 = scmp.eq.s32.totalorder %s13, 3
      %p141 = scmp.ne.s32.totalorder %s136, %s138
      %p142 = scmp.eq.s32.totalorder %s13, 0
      %p143 = por %p141, %p142
      %p144 = scmp.ne.s32.totalorder %s136, %s138
      %p145 = scmp.eq.s32.totalorder %s18, 3
      %p146 = por %p144, %p145
      %p147 = scmp.ne.s32.totalorder %s138, %s139
      %p148 = scmp.eq.s32.totalorder %s18, 0
      %p149 = por %p147, %p148
      %p150 = scmp.ne.s32.totalorder %s138, %s139
      %p151 = scmp.eq.s32.totalorder %s19, 3
      %p152 = por %p150, %p151
      %p154 = scmp.ne.s32.totalorder %s139, %s153
      %p155 = scmp.eq.s32.totalorder %s19, 0
      %p156 = por %p154, %p155
      %s158 = sadd.s32 %s157, 1
      %p161 = scmp.eq.s32.totalorder %s13, 3
      %p162 = scmp.ne.s32.totalorder %s157, %s159
      %p163 = scmp.eq.s32.totalorder %s13, 0
      %p164 = por %p162, %p163
      %p165 = scmp.ne.s32.totalorder %s157, %s159
      %p166 = scmp.eq.s32.totalorder %s18, 3
      %p167 = por %p165, %p166
      %p168 = scmp.ne.s32.totalorder %s159, %s160
      %p169 = scmp.eq.s32.totalorder %s18, 0
      %p170 = por %p168, %p169
      %p171 = scmp.ne.s32.totalorder %s159, %s160
      %p172 = scmp.eq.s32.totalorder %s19, 3
      %p173 = por %p171, %p172
      %p175 = scmp.ne.s32.totalorder %s160, %s174
      %p176 = scmp.eq.s32.totalorder %s19, 0
      %p177 = por %p175, %p176
      %p178 = scmp.le.s32.totalorder 1, %s13
      %p179 = scmp.lt.s32.totalorder %s13, 5
      %p180 = pnand %p178, %p179
      %p181 = pneg %p180
      // Predicated region
      $region9: #{innernet_forward.5} parent=5 // pred_check
        _
      $region10: #{innernet_forward.5} parent=5 // pred_check_branch
        %183 = sbr.rel (%p180) target = $region12
      $region11: #{innernet_forward.5} parent=5 // pred_region
        %s184 = ssub.s32 %s13, 1
        // Predicated region
        $region13: #{innernet_forward.5} parent=11 // pred_check
          %p185 = pneg %p60
        $region14: #{innernet_forward.5} parent=11 // pred_check_branch
          %187 = sbr.rel (%p185) target = $region16
        $region15: #{innernet_forward.5} parent=11 // pred_region
          _
        $region16: #{innernet_forward.5} parent=11 // pred_fallthru
          _
        // Predicated region
        $region17: #{innernet_forward.5} parent=11 // pred_check
          %p188 = pneg %p81
        $region18: #{innernet_forward.5} parent=11 // pred_check_branch
          %190 = sbr.rel (%p188) target = $region20
        $region19: #{innernet_forward.5} parent=11 // pred_region
          _
        $region20: #{innernet_forward.5} parent=11 // pred_fallthru
          _
        // Predicated region
        $region21: #{innernet_forward.5} parent=11 // pred_check
          %p191 = pneg %p102
        $region22: #{innernet_forward.5} parent=11 // pred_check_branch
          %193 = sbr.rel (%p191) target = $region24
        $region23: #{innernet_forward.5} parent=11 // pred_region
          _
        $region24: #{innernet_forward.5} parent=11 // pred_fallthru
          _
      $region12: #{innernet_forward.5} parent=5 // pred_fallthru
        _
      %p194 = scmp.lt.s32.totalorder %s13, 4
      // Predicated region
      $region25: #{innernet_forward.5} parent=5 // pred_check
        %p195 = pneg %p194
      $region26: #{innernet_forward.5} parent=5 // pred_check_branch
        %197 = sbr.rel (%p195) target = $region28
      $region27: #{innernet_forward.5} parent=5 // pred_region
        // Predicated region
        $region29: #{innernet_forward.5} parent=27 // pred_check
          %p198 = pneg %p33
        $region30: #{innernet_forward.5} parent=27 // pred_check_branch
          %200 = sbr.rel (%p198) target = $region32
        $region31: #{innernet_forward.5} parent=27 // pred_region
          %s201 = smul.u32 32, %s13
          %s202 = ssub.s32 125, %s201
          %p203 = scmp.lt.s32.totalorder %s202, 32
          %s204 = scalar_select %p203, %s202, 32
          %s205 = smul.u32 64, %s204
          %p206 = scmp.lt.s32.totalorder %s201, 124
          %s207 = scalar_select %p206, %s201, 124
          %s208 = smul.addr %s207, 4
          %s209 = scalar_lea.vmem %s0, %s208
          %s210 = smul.u32 32, %s13
          %s211 = ssub.s32 125, %s210
          %p212 = scmp.lt.s32.totalorder %s211, 32
          %s213 = scalar_select %p212, %s211, 32
          %s214 = smul.u32 64, %s213
        $region32: #{innernet_forward.5} parent=27 // pred_fallthru
          _
      $region28: #{innernet_forward.5} parent=5 // pred_fallthru
        _
      %p215 = scmp.le.s32.totalorder 1, %s13
      %p216 = scmp.lt.s32.totalorder %s13, 5
      %p217 = pnand %p215, %p216
      %p218 = pneg %p217
      // Predicated region
      $region33: #{innernet_forward.5} parent=5 // pred_check
        _
      $region34: #{innernet_forward.5} parent=5 // pred_check_branch
        %220 = sbr.rel (%p217) target = $region36
      $region35: #{innernet_forward.5} parent=5 // pred_region
        %s221 = ssub.s32 %s13, 1
        %s222 = smul.u32 32, %s18
        %s223 = ssub.s32 125, %s222
        %p224 = scmp.lt.s32.totalorder %s223, 32
        %s225 = scalar_select %p224, %s223, 32
        %s226 = smul.u32 64, %s225
        %p227 = scmp.lt.s32.totalorder %s222, 124
        %s228 = scalar_select %p227, %s222, 124
        %s229 = smul.addr %s228, 4
        %s230 = scalar_lea.vmem %s0, %s229
        %p231 = pneg %p39
        %p232 = pneg %p36
        %p233 = pneg %p60
        %p234 = pneg %p57
        %p235 = pneg %p81
        %p236 = pneg %p78
        %p237 = pneg %p102
        %p238 = pneg %p99
        %p239 = pneg %p128
        %p240 = pneg %p125
        %s241 = sand.u32 %s115, 1
        %s242 = sand.u32 %s115, 1
        %s243 = smul.addr %s242, 128
        %s244 = scalar_lea.vmem [#allocation2], %s243
        %p245 = pneg %p149
        %p246 = pneg %p146
        %p247 = pneg %p170
        %p248 = pneg %p167
        %s249 = smul.u32 32, %s18
        %s250 = ssub.s32 125, %s249
        %p251 = scmp.lt.s32.totalorder %s250, 32
        %s252 = scalar_select %p251, %s250, 32
        %s253 = smul.u32 64, %s252
        %p254 = scmp.lt.s32.totalorder %s249, 124
        %s255 = scalar_select %p254, %s249, 124
        %s256 = smul.addr %s255, 4
        %s257 = scalar_lea.vmem %s0, %s256
        %s258 = smul.u32 32, %s18
        %s259 = ssub.s32 125, %s258
        %p260 = scmp.lt.s32.totalorder %s259, 32
        %s261 = scalar_select %p260, %s259, 32
        %s262 = smul.u32 64, %s261
        %s263 = smul.u32 32, %s18
        %s264 = ssub.s32 125, %s263
        %p265 = scmp.lt.s32.totalorder %s264, 32
        %s266 = scalar_select %p265, %s264, 32
        %s267 = smul.u32 64, %s266
        %p269 = scmp.eq.s32.totalorder %s18, 0
        // Predicated region
        $region37: #{innernet_forward.5} parent=35 // pred_check
          %p270 = pneg %p269
        $region38: #{innernet_forward.5} parent=35 // pred_check_branch
          %272 = sbr.rel (%p270) target = $region40
        $region39: #{innernet_forward.5} parent=35 // pred_region
          %vm273 = vcmask 516096
          %274 = vst.msk [vmem:[%s5] sm:$0x1] %vm273, 0.0
          %275 = vst.msk [vmem:[%s6] sm:$0x1] %vm273, 0.0
        $region40: #{innernet_forward.5} parent=35 // pred_fallthru
          _
        %v276 = vld [vmem:[%s257] sm:$0xf]
        %v277 = vld [vmem:[%s257 + $0x4] sm:$0xf]
        %v278 = vld [vmem:[%s257 + $0x8] sm:$0xf]
        %v279 = vld [vmem:[%s257 + $0xc] sm:$0xf]
        %v280 = vld [vmem:[%s257 + $0x10] sm:$0xf]
        %v281 = vld [vmem:[%s257 + $0x14] sm:$0xf]
        %v282 = vld [vmem:[%s257 + $0x18] sm:$0xf]
        %v283 = vld [vmem:[%s257 + $0x1c] sm:$0xf]
        %v284 = vld [vmem:[%s257 + $0x20] sm:$0xf]
        %v285 = vld [vmem:[%s257 + $0x24] sm:$0xf]
        %v286 = vld [vmem:[%s257 + $0x28] sm:$0xf]
        %v287 = vld [vmem:[%s257 + $0x2c] sm:$0xf]
        %v288 = vld [vmem:[%s257 + $0x30] sm:$0xf]
        %v289 = vld [vmem:[%s257 + $0x34] sm:$0xf]
        %v290 = vld [vmem:[%s257 + $0x38] sm:$0xf]
        %v291 = vld [vmem:[%s257 + $0x3c] sm:$0xf]
        %v292 = vld [vmem:[%s257 + $0x40] sm:$0xf]
        %v293 = vld [vmem:[%s257 + $0x44] sm:$0xf]
        %v294 = vld [vmem:[%s257 + $0x48] sm:$0xf]
        %v295 = vld [vmem:[%s257 + $0x4c] sm:$0xf]
        %v296 = vld [vmem:[%s257 + $0x50] sm:$0xf]
        %v297 = vld [vmem:[%s257 + $0x54] sm:$0xf]
        %v298 = vld [vmem:[%s257 + $0x58] sm:$0xf]
        %v299 = vld [vmem:[%s257 + $0x5c] sm:$0xf]
        %v300 = vld [vmem:[%s257 + $0x60] sm:$0xf]
        %v301 = vld [vmem:[%s257 + $0x64] sm:$0xf]
        %v302 = vld [vmem:[%s257 + $0x68] sm:$0xf]
        %v303 = vld [vmem:[%s257 + $0x6c] sm:$0xf]
        %v304 = vld [vmem:[%s257 + $0x70] sm:$0xf]
        %v305 = vld [vmem:[%s257 + $0x74] sm:$0xf]
        %v306 = vld [vmem:[%s257 + $0x78] sm:$0xf]
        %v307 = vld [vmem:[%s257 + $0x7c] sm:$0xf]
        %v308 = vunpack.c.l.bf16 %v276
        %v309 = vunpack.c.l.bf16 %v277
        %v310 = vunpack.c.l.bf16 %v278
        %v311 = vunpack.c.l.bf16 %v279
        %v312 = vunpack.c.l.bf16 %v280
        %v313 = vunpack.c.l.bf16 %v281
        %v314 = vunpack.c.l.bf16 %v282
        %v315 = vunpack.c.l.bf16 %v283
        %v316 = vunpack.c.l.bf16 %v284
        %v317 = vunpack.c.l.bf16 %v285
        %v318 = vunpack.c.l.bf16 %v286
        %v319 = vunpack.c.l.bf16 %v287
        %v320 = vunpack.c.l.bf16 %v288
        %v321 = vunpack.c.l.bf16 %v289
        %v322 = vunpack.c.l.bf16 %v290
        %v323 = vunpack.c.l.bf16 %v291
        %v324 = vunpack.c.l.bf16 %v292
        %v325 = vunpack.c.l.bf16 %v293
        %v326 = vunpack.c.l.bf16 %v294
        %v327 = vunpack.c.l.bf16 %v295
        %v328 = vunpack.c.l.bf16 %v296
        %v329 = vunpack.c.l.bf16 %v297
        %v330 = vunpack.c.l.bf16 %v298
        %v331 = vunpack.c.l.bf16 %v299
        %v332 = vunpack.c.l.bf16 %v300
        %v333 = vunpack.c.l.bf16 %v301
        %v334 = vunpack.c.l.bf16 %v302
        %v335 = vunpack.c.l.bf16 %v303
        %v336 = vunpack.c.l.bf16 %v304
        %v337 = vunpack.c.l.bf16 %v305
        %v338 = vunpack.c.l.bf16 %v306
        %v339 = vunpack.c.l.bf16 %v307
        %v340 = vld [vmem:[%s1] sm:$0x1]
        %v342 = vlaneseq
        %v343 = vshrl.u32 %v342, 7
        %v344 = vsub.s32 0, %v343
        %v345 = vrot.slane %v340, %v344
        %v347 = vmul.f32 %v308, %v345
        %v348 = vmul.f32 %v309, %v345
        %v349 = vmul.f32 %v310, %v345
        %v350 = vmul.f32 %v311, %v345
        %v351 = vmul.f32 %v312, %v345
        %v352 = vmul.f32 %v313, %v345
        %v353 = vmul.f32 %v314, %v345
        %v354 = vmul.f32 %v315, %v345
        %v355 = vmul.f32 %v316, %v345
        %v356 = vmul.f32 %v317, %v345
        %v357 = vmul.f32 %v318, %v345
        %v358 = vmul.f32 %v319, %v345
        %v359 = vmul.f32 %v320, %v345
        %v360 = vmul.f32 %v321, %v345
        %v361 = vmul.f32 %v322, %v345
        %v362 = vmul.f32 %v323, %v345
        %v363 = vmul.f32 %v324, %v345
        %v364 = vmul.f32 %v325, %v345
        %v365 = vmul.f32 %v326, %v345
        %v366 = vmul.f32 %v327, %v345
        %v367 = vmul.f32 %v328, %v345
        %v368 = vmul.f32 %v329, %v345
        %v369 = vmul.f32 %v330, %v345
        %v370 = vmul.f32 %v331, %v345
        %v371 = vmul.f32 %v332, %v345
        %v372 = vmul.f32 %v333, %v345
        %v373 = vmul.f32 %v334, %v345
        %v374 = vmul.f32 %v335, %v345
        %v375 = vmul.f32 %v336, %v345
        %v376 = vmul.f32 %v337, %v345
        %v377 = vmul.f32 %v338, %v345
        %v378 = vmul.f32 %v339, %v345
        %v379 = vld [vmem:[%s2] sm:$0x1]
        %v381 = vlaneseq
        %v382 = vshrl.u32 %v381, 7
        %v383 = vsub.s32 0, %v382
        %v384 = vrot.slane %v379, %v383
        %v386 = vadd.f32 %v347, %v384
        %v387 = vadd.f32 %v348, %v384
        %v388 = vadd.f32 %v349, %v384
        %v389 = vadd.f32 %v350, %v384
        %v390 = vadd.f32 %v351, %v384
        %v391 = vadd.f32 %v352, %v384
        %v392 = vadd.f32 %v353, %v384
        %v393 = vadd.f32 %v354, %v384
        %v394 = vadd.f32 %v355, %v384
        %v395 = vadd.f32 %v356, %v384
        %v396 = vadd.f32 %v357, %v384
        %v397 = vadd.f32 %v358, %v384
        %v398 = vadd.f32 %v359, %v384
        %v399 = vadd.f32 %v360, %v384
        %v400 = vadd.f32 %v361, %v384
        %v401 = vadd.f32 %v362, %v384
        %v402 = vadd.f32 %v363, %v384
        %v403 = vadd.f32 %v364, %v384
        %v404 = vadd.f32 %v365, %v384
        %v405 = vadd.f32 %v366, %v384
        %v406 = vadd.f32 %v367, %v384
        %v407 = vadd.f32 %v368, %v384
        %v408 = vadd.f32 %v369, %v384
        %v409 = vadd.f32 %v370, %v384
        %v410 = vadd.f32 %v371, %v384
        %v411 = vadd.f32 %v372, %v384
        %v412 = vadd.f32 %v373, %v384
        %v413 = vadd.f32 %v374, %v384
        %v414 = vadd.f32 %v375, %v384
        %v415 = vadd.f32 %v376, %v384
        %v416 = vadd.f32 %v377, %v384
        %v417 = vadd.f32 %v378, %v384
        %v418 = vmax.f32 %v386, 0.0
        %v419 = vmax.f32 %v387, 0.0
        %v420 = vmax.f32 %v388, 0.0
        %v421 = vmax.f32 %v389, 0.0
        %v422 = vmax.f32 %v390, 0.0
        %v423 = vmax.f32 %v391, 0.0
        %v424 = vmax.f32 %v392, 0.0
        %v425 = vmax.f32 %v393, 0.0
        %v426 = vmax.f32 %v394, 0.0
        %v427 = vmax.f32 %v395, 0.0
        %v428 = vmax.f32 %v396, 0.0
        %v429 = vmax.f32 %v397, 0.0
        %v430 = vmax.f32 %v398, 0.0
        %v431 = vmax.f32 %v399, 0.0
        %v432 = vmax.f32 %v400, 0.0
        %v433 = vmax.f32 %v401, 0.0
        %v434 = vmax.f32 %v402, 0.0
        %v435 = vmax.f32 %v403, 0.0
        %v436 = vmax.f32 %v404, 0.0
        %v437 = vmax.f32 %v405, 0.0
        %v438 = vmax.f32 %v406, 0.0
        %v439 = vmax.f32 %v407, 0.0
        %v440 = vmax.f32 %v408, 0.0
        %v441 = vmax.f32 %v409, 0.0
        %v442 = vmax.f32 %v410, 0.0
        %v443 = vmax.f32 %v411, 0.0
        %v444 = vmax.f32 %v412, 0.0
        %v445 = vmax.f32 %v413, 0.0
        %v446 = vmax.f32 %v414, 0.0
        %v447 = vmax.f32 %v415, 0.0
        %v448 = vmax.f32 %v416, 0.0
        %v449 = vmax.f32 %v417, 0.0
        %s450 = smul.u32 %s18, 256
        %v451 = vlaneseq
        %v452 = vshrl.u32 %v451, 7
        %v453 = vadd.s32 %v452, 8
        %v454 = vadd.s32 %v452, 16
        %v455 = vadd.s32 %v452, 24
        %v456 = vadd.s32 %v452, 32
        %v457 = vadd.s32 %v452, 40
        %v458 = vadd.s32 %v452, 48
        %v459 = vadd.s32 %v452, 56
        %v460 = vadd.s32 %v452, 64
        %v461 = vadd.s32 %v452, 72
        %v462 = vadd.s32 %v452, 80
        %v463 = vadd.s32 %v452, 88
        %v464 = vadd.s32 %v452, 96
        %v465 = vadd.s32 %v452, 104
        %v466 = vadd.s32 %v452, 112
        %v467 = vadd.s32 %v452, 120
        %v468 = vadd.s32 %v452, 128
        %v469 = vadd.s32 %v452, 136
        %v470 = vadd.s32 %v452, 144
        %v471 = vadd.s32 %v452, 152
        %v472 = vadd.s32 %v452, 160
        %v473 = vadd.s32 %v452, 168
        %v474 = vadd.s32 %v452, 176
        %v475 = vadd.s32 %v452, 184
        %v476 = vadd.s32 %v452, 192
        %v477 = vadd.s32 %v452, 200
        %v478 = vadd.s32 %v452, 208
        %v479 = vadd.s32 %v452, 216
        %v480 = vadd.s32 %v452, 224
        %v481 = vadd.s32 %v452, 232
        %v482 = vadd.s32 %v452, 240
        %v483 = vadd.s32 %v452, 248
        %v484 = vstv %s450
        %v485 = vadd.s32 %v484, %v452
        %v486 = vadd.s32 %v484, %v453
        %v487 = vadd.s32 %v484, %v454
        %v488 = vadd.s32 %v484, %v455
        %v489 = vadd.s32 %v484, %v456
        %v490 = vadd.s32 %v484, %v457
        %v491 = vadd.s32 %v484, %v458
        %v492 = vadd.s32 %v484, %v459
        %v493 = vadd.s32 %v484, %v460
        %v494 = vadd.s32 %v484, %v461
        %v495 = vadd.s32 %v484, %v462
        %v496 = vadd.s32 %v484, %v463
        %v497 = vadd.s32 %v484, %v464
        %v498 = vadd.s32 %v484, %v465
        %v499 = vadd.s32 %v484, %v466
        %v500 = vadd.s32 %v484, %v467
        %v501 = vadd.s32 %v484, %v468
        %v502 = vadd.s32 %v484, %v469
        %v503 = vadd.s32 %v484, %v470
        %v504 = vadd.s32 %v484, %v471
        %v505 = vadd.s32 %v484, %v472
        %v506 = vadd.s32 %v484, %v473
        %v507 = vadd.s32 %v484, %v474
        %v508 = vadd.s32 %v484, %v475
        %v509 = vadd.s32 %v484, %v476
        %v510 = vadd.s32 %v484, %v477
        %v511 = vadd.s32 %v484, %v478
        %v512 = vadd.s32 %v484, %v479
        %v513 = vadd.s32 %v484, %v480
        %v514 = vadd.s32 %v484, %v481
        %v515 = vadd.s32 %v484, %v482
        %v516 = vadd.s32 %v484, %v483
        %vm517 = vcmp.lt.s32.totalorder %v485, 1000
        %vm518 = vcmp.lt.s32.totalorder %v486, 1000
        %vm519 = vcmp.lt.s32.totalorder %v487, 1000
        %vm520 = vcmp.lt.s32.totalorder %v488, 1000
        %vm521 = vcmp.lt.s32.totalorder %v489, 1000
        %vm522 = vcmp.lt.s32.totalorder %v490, 1000
        %vm523 = vcmp.lt.s32.totalorder %v491, 1000
        %vm524 = vcmp.lt.s32.totalorder %v492, 1000
        %vm525 = vcmp.lt.s32.totalorder %v493, 1000
        %vm526 = vcmp.lt.s32.totalorder %v494, 1000
        %vm527 = vcmp.lt.s32.totalorder %v495, 1000
        %vm528 = vcmp.lt.s32.totalorder %v496, 1000
        %vm529 = vcmp.lt.s32.totalorder %v497, 1000
        %vm530 = vcmp.lt.s32.totalorder %v498, 1000
        %vm531 = vcmp.lt.s32.totalorder %v499, 1000
        %vm532 = vcmp.lt.s32.totalorder %v500, 1000
        %vm533 = vcmp.lt.s32.totalorder %v501, 1000
        %vm534 = vcmp.lt.s32.totalorder %v502, 1000
        %vm535 = vcmp.lt.s32.totalorder %v503, 1000
        %vm536 = vcmp.lt.s32.totalorder %v504, 1000
        %vm537 = vcmp.lt.s32.totalorder %v505, 1000
        %vm538 = vcmp.lt.s32.totalorder %v506, 1000
        %vm539 = vcmp.lt.s32.totalorder %v507, 1000
        %vm540 = vcmp.lt.s32.totalorder %v508, 1000
        %vm541 = vcmp.lt.s32.totalorder %v509, 1000
        %vm542 = vcmp.lt.s32.totalorder %v510, 1000
        %vm543 = vcmp.lt.s32.totalorder %v511, 1000
        %vm544 = vcmp.lt.s32.totalorder %v512, 1000
        %vm545 = vcmp.lt.s32.totalorder %v513, 1000
        %vm546 = vcmp.lt.s32.totalorder %v514, 1000
        %vm547 = vcmp.lt.s32.totalorder %v515, 1000
        %vm548 = vcmp.lt.s32.totalorder %v516, 1000
        %v549 = vsel %vm517, 1, 0
        %v550 = vsel %vm518, 1, 0
        %v551 = vsel %vm519, 1, 0
        %v552 = vsel %vm520, 1, 0
        %v553 = vsel %vm521, 1, 0
        %v554 = vsel %vm522, 1, 0
        %v555 = vsel %vm523, 1, 0
        %v556 = vsel %vm524, 1, 0
        %v557 = vsel %vm525, 1, 0
        %v558 = vsel %vm526, 1, 0
        %v559 = vsel %vm527, 1, 0
        %v560 = vsel %vm528, 1, 0
        %v561 = vsel %vm529, 1, 0
        %v562 = vsel %vm530, 1, 0
        %v563 = vsel %vm531, 1, 0
        %v564 = vsel %vm532, 1, 0
        %v565 = vsel %vm533, 1, 0
        %v566 = vsel %vm534, 1, 0
        %v567 = vsel %vm535, 1, 0
        %v568 = vsel %vm536, 1, 0
        %v569 = vsel %vm537, 1, 0
        %v570 = vsel %vm538, 1, 0
        %v571 = vsel %vm539, 1, 0
        %v572 = vsel %vm540, 1, 0
        %v573 = vsel %vm541, 1, 0
        %v574 = vsel %vm542, 1, 0
        %v575 = vsel %vm543, 1, 0
        %v576 = vsel %vm544, 1, 0
        %v577 = vsel %vm545, 1, 0
        %v578 = vsel %vm546, 1, 0
        %v579 = vsel %vm547, 1, 0
        %v580 = vsel %vm548, 1, 0
        %vm581 = vcmp.eq.s32.totalorder %v549, 1
        %vm582 = vcmp.eq.s32.totalorder %v550, 1
        %vm583 = vcmp.eq.s32.totalorder %v551, 1
        %vm584 = vcmp.eq.s32.totalorder %v552, 1
        %vm585 = vcmp.eq.s32.totalorder %v553, 1
        %vm586 = vcmp.eq.s32.totalorder %v554, 1
        %vm587 = vcmp.eq.s32.totalorder %v555, 1
        %vm588 = vcmp.eq.s32.totalorder %v556, 1
        %vm589 = vcmp.eq.s32.totalorder %v557, 1
        %vm590 = vcmp.eq.s32.totalorder %v558, 1
        %vm591 = vcmp.eq.s32.totalorder %v559, 1
        %vm592 = vcmp.eq.s32.totalorder %v560, 1
        %vm593 = vcmp.eq.s32.totalorder %v561, 1
        %vm594 = vcmp.eq.s32.totalorder %v562, 1
        %vm595 = vcmp.eq.s32.totalorder %v563, 1
        %vm596 = vcmp.eq.s32.totalorder %v564, 1
        %vm597 = vcmp.eq.s32.totalorder %v565, 1
        %vm598 = vcmp.eq.s32.totalorder %v566, 1
        %vm599 = vcmp.eq.s32.totalorder %v567, 1
        %vm600 = vcmp.eq.s32.totalorder %v568, 1
        %vm601 = vcmp.eq.s32.totalorder %v569, 1
        %vm602 = vcmp.eq.s32.totalorder %v570, 1
        %vm603 = vcmp.eq.s32.totalorder %v571, 1
        %vm604 = vcmp.eq.s32.totalorder %v572, 1
        %vm605 = vcmp.eq.s32.totalorder %v573, 1
        %vm606 = vcmp.eq.s32.totalorder %v574, 1
        %vm607 = vcmp.eq.s32.totalorder %v575, 1
        %vm608 = vcmp.eq.s32.totalorder %v576, 1
        %vm609 = vcmp.eq.s32.totalorder %v577, 1
        %vm610 = vcmp.eq.s32.totalorder %v578, 1
        %vm611 = vcmp.eq.s32.totalorder %v579, 1
        %vm612 = vcmp.eq.s32.totalorder %v580, 1
        %v613 = vsel %vm581, %v418, 0.0
        %v614 = vsel %vm582, %v419, 0.0
        %v615 = vsel %vm583, %v420, 0.0
        %v616 = vsel %vm584, %v421, 0.0
        %v617 = vsel %vm585, %v422, 0.0
        %v618 = vsel %vm586, %v423, 0.0
        %v619 = vsel %vm587, %v424, 0.0
        %v620 = vsel %vm588, %v425, 0.0
        %v621 = vsel %vm589, %v426, 0.0
        %v622 = vsel %vm590, %v427, 0.0
        %v623 = vsel %vm591, %v428, 0.0
        %v624 = vsel %vm592, %v429, 0.0
        %v625 = vsel %vm593, %v430, 0.0
        %v626 = vsel %vm594, %v431, 0.0
        %v627 = vsel %vm595, %v432, 0.0
        %v628 = vsel %vm596, %v433, 0.0
        %v629 = vsel %vm597, %v434, 0.0
        %v630 = vsel %vm598, %v435, 0.0
        %v631 = vsel %vm599, %v436, 0.0
        %v632 = vsel %vm600, %v437, 0.0
        %v633 = vsel %vm601, %v438, 0.0
        %v634 = vsel %vm602, %v439, 0.0
        %v635 = vsel %vm603, %v440, 0.0
        %v636 = vsel %vm604, %v441, 0.0
        %v637 = vsel %vm605, %v442, 0.0
        %v638 = vsel %vm606, %v443, 0.0
        %v639 = vsel %vm607, %v444, 0.0
        %v640 = vsel %vm608, %v445, 0.0
        %v641 = vsel %vm609, %v446, 0.0
        %v642 = vsel %vm610, %v447, 0.0
        %v643 = vsel %vm611, %v448, 0.0
        %v644 = vsel %vm612, %v449, 0.0
        %v645 = vpack.c.bf16 %v614, %v613
        %v646 = vpack.c.bf16 %v616, %v615
        %v647 = vpack.c.bf16 %v618, %v617
        %v648 = vpack.c.bf16 %v620, %v619
        %v649 = vpack.c.bf16 %v622, %v621
        %v650 = vpack.c.bf16 %v624, %v623
        %v651 = vpack.c.bf16 %v626, %v625
        %v652 = vpack.c.bf16 %v628, %v627
        %v653 = vpack.c.bf16 %v630, %v629
        %v654 = vpack.c.bf16 %v632, %v631
        %v655 = vpack.c.bf16 %v634, %v633
        %v656 = vpack.c.bf16 %v636, %v635
        %v657 = vpack.c.bf16 %v638, %v637
        %v658 = vpack.c.bf16 %v640, %v639
        %v659 = vpack.c.bf16 %v642, %v641
        %v660 = vpack.c.bf16 %v644, %v643
        %v661 = vld [vmem:[%s3] sm:$0xf]
        %v662 = vld [vmem:[%s3 + $0x4] sm:$0xf]
        %v663 = vld [vmem:[%s3 + $0x8] sm:$0xf]
        %v664 = vld [vmem:[%s3 + $0xc] sm:$0xf]
        %v665 = vld [vmem:[%s3 + $0x10] sm:$0xf]
        %v666 = vld [vmem:[%s3 + $0x14] sm:$0xf]
        %v667 = vld [vmem:[%s3 + $0x18] sm:$0xf]
        %v668 = vld [vmem:[%s3 + $0x1c] sm:$0xf]
        %v677 = vunpack.c.l.b16 %v661
        %v678 = vunpack.c.l.b16 %v662
        %v679 = vunpack.c.l.b16 %v663
        %v680 = vunpack.c.l.b16 %v664
        %v681 = vunpack.c.l.b16 %v665
        %v682 = vunpack.c.l.b16 %v666
        %v683 = vunpack.c.l.b16 %v667
        %v684 = vunpack.c.l.b16 %v668
        %v685 = vpack.c.b16 %v678, %v677
        %v686 = vpack.c.b16 %v680, %v679
        %v687 = vpack.c.b16 %v682, %v681
        %v688 = vpack.c.b16 %v684, %v683
        %vm693 = vcmask 523264
        %v695 = vsel %vm693, %v645, 0
        %v698 = vsel %vm693, %v646, 0
        %v701 = vsel %vm693, %v647, 0
        %v704 = vsel %vm693, %v648, 0
        %v707 = vsel %vm693, %v649, 0
        %v710 = vsel %vm693, %v650, 0
        %v713 = vsel %vm693, %v651, 0
        %v716 = vsel %vm693, %v652, 0
        %v719 = vsel %vm693, %v653, 0
        %v722 = vsel %vm693, %v654, 0
        %v725 = vsel %vm693, %v655, 0
        %v728 = vsel %vm693, %v656, 0
        %v731 = vsel %vm693, %v657, 0
        %v734 = vsel %vm693, %v658, 0
        %v737 = vsel %vm693, %v659, 0
        %v740 = vsel %vm693, %v660, 0
        %742 = vmatprep.subr.bf16.mxu0 0
        %743 = vmatpush1.bf16.msra.mxu0 %v685
        %744 = vmatprep.subr.bf16.mxu0 0
        %745 = vmatpush1.bf16.msra.mxu0 %v686
        %746 = vmatprep.subr.bf16.mxu0 0
        %747 = vmatpush1.bf16.msra.mxu0 %v687
        %748 = vmatprep.subr.bf16.mxu0 0
        %749 = vmatpush1.bf16.msra.mxu0 %v688
        %750 = vmatprep.subr.bf16.mxu0 0
        %751 = vmatpush1.bf16.msra.mxu0 0
        %752 = vmatprep.subr.bf16.mxu0 0
        %753 = vmatpush1.bf16.msra.mxu0 0
        %754 = vmatprep.subr.bf16.mxu0 0
        %755 = vmatpush1.bf16.msra.mxu0 0
        %756 = vmatprep.subr.bf16.mxu0 0
        %757 = vmatpush1.bf16.msra.mxu0 0
        %758 = vmatprep.subr.bf16.mxu0 0
        %759 = vmatpush1.bf16.msra.mxu0 0
        %760 = vmatprep.subr.bf16.mxu0 0
        %761 = vmatpush1.bf16.msra.mxu0 0
        %762 = vmatprep.subr.bf16.mxu0 0
        %763 = vmatpush1.bf16.msra.mxu0 0
        %764 = vmatprep.subr.bf16.mxu0 0
        %765 = vmatpush1.bf16.msra.mxu0 0
        %766 = vmatprep.subr.bf16.mxu0 0
        %767 = vmatpush1.bf16.msra.mxu0 0
        %768 = vmatprep.subr.bf16.mxu0 0
        %769 = vmatpush1.bf16.msra.mxu0 0
        %770 = vmatprep.subr.bf16.mxu0 0
        %771 = vmatpush1.bf16.msra.mxu0 0
        %772 = vmatprep.subr.bf16.mxu0 0
        %773 = vmatpush1.bf16.msra.mxu0 0
        %774 = vmatprep.mubr.bf16.mxu0 0
        %775 = vmatmul.mubr.bf16.gmra.mrb[0].mxu0 %v695
        %v776 = vpop.f32.mrb[0].mxu0
        %v777 = vadd.f32 0.0, %v776
        %v778 = vpop.f32.mrb[0].mxu0
        %v779 = vpop.f32.mrb[0].mxu0
        %v780 = vadd.f32 0.0, %v779
        %v781 = vpop.f32.mrb[0].mxu0
        %782 = vmatprep.mubr.bf16.mxu0 0
        %783 = vmatmul.mubr.bf16.gmra.mrb[0].mxu0 %v698
        %v784 = vpop.f32.mrb[0].mxu0
        %v785 = vadd.f32 0.0, %v784
        %v786 = vpop.f32.mrb[0].mxu0
        %v787 = vpop.f32.mrb[0].mxu0
        %v788 = vadd.f32 0.0, %v787
        %v789 = vpop.f32.mrb[0].mxu0
        %790 = vmatprep.mubr.bf16.mxu0 0
        %791 = vmatmul.mubr.bf16.gmra.mrb[0].mxu0 %v701
        %v792 = vpop.f32.mrb[0].mxu0
        %v793 = vadd.f32 0.0, %v792
        %v794 = vpop.f32.mrb[0].mxu0
        %v795 = vpop.f32.mrb[0].mxu0
        %v796 = vadd.f32 0.0, %v795
        %v797 = vpop.f32.mrb[0].mxu0
        %798 = vmatprep.mubr.bf16.mxu0 0
        %799 = vmatmul.mubr.bf16.gmra.mrb[0].mxu0 %v704
        %v800 = vpop.f32.mrb[0].mxu0
        %v801 = vadd.f32 0.0, %v800
        %v802 = vpop.f32.mrb[0].mxu0
        %v803 = vpop.f32.mrb[0].mxu0
        %v804 = vadd.f32 0.0, %v803
        %v805 = vpop.f32.mrb[0].mxu0
        %806 = vmatprep.mubr.bf16.mxu0 0
        %807 = vmatmul.mubr.bf16.gmra.mrb[0].mxu0 %v707
        %v808 = vpop.f32.mrb[0].mxu0
        %v809 = vadd.f32 0.0, %v808
        %v810 = vpop.f32.mrb[0].mxu0
        %v811 = vpop.f32.mrb[0].mxu0
        %v812 = vadd.f32 0.0, %v811
        %v813 = vpop.f32.mrb[0].mxu0
        %814 = vmatprep.mubr.bf16.mxu0 0
        %815 = vmatmul.mubr.bf16.gmra.mrb[0].mxu0 %v710
        %v816 = vpop.f32.mrb[0].mxu0
        %v817 = vadd.f32 0.0, %v816
        %v818 = vpop.f32.mrb[0].mxu0
        %v819 = vpop.f32.mrb[0].mxu0
        %v820 = vadd.f32 0.0, %v819
        %v821 = vpop.f32.mrb[0].mxu0
        %822 = vmatprep.mubr.bf16.mxu0 0
        %823 = vmatmul.mubr.bf16.gmra.mrb[0].mxu0 %v713
        %v824 = vpop.f32.mrb[0].mxu0
        %v825 = vadd.f32 0.0, %v824
        %v826 = vpop.f32.mrb[0].mxu0
        %v827 = vpop.f32.mrb[0].mxu0
        %v828 = vadd.f32 0.0, %v827
        %v829 = vpop.f32.mrb[0].mxu0
        %830 = vmatprep.mubr.bf16.mxu0 0
        %831 = vmatmul.mubr.bf16.gmra.mrb[0].mxu0 %v716
        %v832 = vpop.f32.mrb[0].mxu0
        %v833 = vadd.f32 0.0, %v832
        %v834 = vpop.f32.mrb[0].mxu0
        %v835 = vpop.f32.mrb[0].mxu0
        %v836 = vadd.f32 0.0, %v835
        %v837 = vpop.f32.mrb[0].mxu0
        %838 = vmatprep.mubr.bf16.mxu0 0
        %839 = vmatmul.mubr.bf16.gmra.mrb[0].mxu0 %v719
        %v840 = vpop.f32.mrb[0].mxu0
        %v841 = vadd.f32 0.0, %v840
        %v842 = vpop.f32.mrb[0].mxu0
        %v843 = vpop.f32.mrb[0].mxu0
        %v844 = vadd.f32 0.0, %v843
        %v845 = vpop.f32.mrb[0].mxu0
        %846 = vmatprep.mubr.bf16.mxu0 0
        %847 = vmatmul.mubr.bf16.gmra.mrb[0].mxu0 %v722
        %v848 = vpop.f32.mrb[0].mxu0
        %v849 = vadd.f32 0.0, %v848
        %v850 = vpop.f32.mrb[0].mxu0
        %v851 = vpop.f32.mrb[0].mxu0
        %v852 = vadd.f32 0.0, %v851
        %v853 = vpop.f32.mrb[0].mxu0
        %854 = vmatprep.mubr.bf16.mxu0 0
        %855 = vmatmul.mubr.bf16.gmra.mrb[0].mxu0 %v725
        %v856 = vpop.f32.mrb[0].mxu0
        %v857 = vadd.f32 0.0, %v856
        %v858 = vpop.f32.mrb[0].mxu0
        %v859 = vpop.f32.mrb[0].mxu0
        %v860 = vadd.f32 0.0, %v859
        %v861 = vpop.f32.mrb[0].mxu0
        %862 = vmatprep.mubr.bf16.mxu0 0
        %863 = vmatmul.mubr.bf16.gmra.mrb[0].mxu0 %v728
        %v864 = vpop.f32.mrb[0].mxu0
        %v865 = vadd.f32 0.0, %v864
        %v866 = vpop.f32.mrb[0].mxu0
        %v867 = vpop.f32.mrb[0].mxu0
        %v868 = vadd.f32 0.0, %v867
        %v869 = vpop.f32.mrb[0].mxu0
        %870 = vmatprep.mubr.bf16.mxu0 0
        %871 = vmatmul.mubr.bf16.gmra.mrb[0].mxu0 %v731
        %v872 = vpop.f32.mrb[0].mxu0
        %v873 = vadd.f32 0.0, %v872
        %v874 = vpop.f32.mrb[0].mxu0
        %v875 = vpop.f32.mrb[0].mxu0
        %v876 = vadd.f32 0.0, %v875
        %v877 = vpop.f32.mrb[0].mxu0
        %878 = vmatprep.mubr.bf16.mxu0 0
        %879 = vmatmul.mubr.bf16.gmra.mrb[0].mxu0 %v734
        %v880 = vpop.f32.mrb[0].mxu0
        %v881 = vadd.f32 0.0, %v880
        %v882 = vpop.f32.mrb[0].mxu0
        %v883 = vpop.f32.mrb[0].mxu0
        %v884 = vadd.f32 0.0, %v883
        %v885 = vpop.f32.mrb[0].mxu0
        %886 = vmatprep.mubr.bf16.mxu0 0
        %887 = vmatmul.mubr.bf16.gmra.mrb[0].mxu0 %v737
        %v888 = vpop.f32.mrb[0].mxu0
        %v889 = vadd.f32 0.0, %v888
        %v890 = vpop.f32.mrb[0].mxu0
        %v891 = vpop.f32.mrb[0].mxu0
        %v892 = vadd.f32 0.0, %v891
        %v893 = vpop.f32.mrb[0].mxu0
        %894 = vmatprep.mubr.bf16.mxu0 0
        %895 = vmatmul.mubr.bf16.gmra.mrb[0].mxu0 %v740
        %v896 = vpop.f32.mrb[0].mxu0
        %v897 = vadd.f32 0.0, %v896
        %v898 = vpop.f32.mrb[0].mxu0
        %v899 = vpop.f32.mrb[0].mxu0
        %v900 = vadd.f32 0.0, %v899
        %v901 = vpop.f32.mrb[0].mxu0
        %902 = vdwg.mxu0
        %v903 = vld [vmem:[%s5] sm:$0x1]
        %v904 = vsel %vm693, %v777, 0.0
        %v905 = vsel %vm693, %v780, 0.0
        %v906 = vadd.f32 %v904, %v905
        %v907 = vsel %vm693, %v785, 0.0
        %v908 = vadd.f32 %v906, %v907
        %v909 = vsel %vm693, %v788, 0.0
        %v910 = vadd.f32 %v908, %v909
        %v911 = vsel %vm693, %v793, 0.0
        %v912 = vadd.f32 %v910, %v911
        %v913 = vsel %vm693, %v796, 0.0
        %v914 = vadd.f32 %v912, %v913
        %v915 = vsel %vm693, %v801, 0.0
        %v916 = vadd.f32 %v914, %v915
        %v917 = vsel %vm693, %v804, 0.0
        %v918 = vadd.f32 %v916, %v917
        %v919 = vsel %vm693, %v809, 0.0
        %v920 = vadd.f32 %v918, %v919
        %v921 = vsel %vm693, %v812, 0.0
        %v922 = vadd.f32 %v920, %v921
        %v923 = vsel %vm693, %v817, 0.0
        %v924 = vadd.f32 %v922, %v923
        %v925 = vsel %vm693, %v820, 0.0
        %v926 = vadd.f32 %v924, %v925
        %v927 = vsel %vm693, %v825, 0.0
        %v928 = vadd.f32 %v926, %v927
        %v929 = vsel %vm693, %v828, 0.0
        %v930 = vadd.f32 %v928, %v929
        %v931 = vsel %vm693, %v833, 0.0
        %v932 = vadd.f32 %v930, %v931
        %v933 = vsel %vm693, %v836, 0.0
        %v934 = vadd.f32 %v932, %v933
        %v935 = vsel %vm693, %v841, 0.0
        %v936 = vadd.f32 %v934, %v935
        %v937 = vsel %vm693, %v844, 0.0
        %v938 = vadd.f32 %v936, %v937
        %v939 = vsel %vm693, %v849, 0.0
        %v940 = vadd.f32 %v938, %v939
        %v941 = vsel %vm693, %v852, 0.0
        %v942 = vadd.f32 %v940, %v941
        %v943 = vsel %vm693, %v857, 0.0
        %v944 = vadd.f32 %v942, %v943
        %v945 = vsel %vm693, %v860, 0.0
        %v946 = vadd.f32 %v944, %v945
        %v947 = vsel %vm693, %v865, 0.0
        %v948 = vadd.f32 %v946, %v947
        %v949 = vsel %vm693, %v868, 0.0
        %v950 = vadd.f32 %v948, %v949
        %v951 = vsel %vm693, %v873, 0.0
        %v952 = vadd.f32 %v950, %v951
        %v953 = vsel %vm693, %v876, 0.0
        %v954 = vadd.f32 %v952, %v953
        %v955 = vsel %vm693, %v881, 0.0
        %v956 = vadd.f32 %v954, %v955
        %v957 = vsel %vm693, %v884, 0.0
        %v958 = vadd.f32 %v956, %v957
        %v959 = vsel %vm693, %v889, 0.0
        %v960 = vadd.f32 %v958, %v959
        %v961 = vsel %vm693, %v892, 0.0
        %v962 = vadd.f32 %v960, %v961
        %v963 = vsel %vm693, %v897, 0.0
        %v964 = vadd.f32 %v962, %v963
        %v965 = vsel %vm693, %v900, 0.0
        %v966 = vadd.f32 %v964, %v965
        %v967 = vrot.slane %v966, 4
        %v968 = vadd.f32 %v966, %v967
        %v969 = vrot.slane %v968, 2
        %v970 = vadd.f32 %v968, %v969
        %v971 = vrot.slane %v970, 1
        %v972 = vadd.f32 %v970, %v971
        %v973 = vadd.f32 %v903, %v972
        %vm974 = vcmask 516096
        %975 = vst.msk [vmem:[%s5] sm:$0x1] %vm974, %v973
        %v976 = vld [vmem:[%s6] sm:$0x1]
        %v977 = vmul.f32 %v777, %v777
        %v978 = vmul.f32 %v780, %v780
        %v979 = vmul.f32 %v785, %v785
        %v980 = vmul.f32 %v788, %v788
        %v981 = vmul.f32 %v793, %v793
        %v982 = vmul.f32 %v796, %v796
        %v983 = vmul.f32 %v801, %v801
        %v984 = vmul.f32 %v804, %v804
        %v985 = vmul.f32 %v809, %v809
        %v986 = vmul.f32 %v812, %v812
        %v987 = vmul.f32 %v817, %v817
        %v988 = vmul.f32 %v820, %v820
        %v989 = vmul.f32 %v825, %v825
        %v990 = vmul.f32 %v828, %v828
        %v991 = vmul.f32 %v833, %v833
        %v992 = vmul.f32 %v836, %v836
        %v993 = vmul.f32 %v841, %v841
        %v994 = vmul.f32 %v844, %v844
        %v995 = vmul.f32 %v849, %v849
        %v996 = vmul.f32 %v852, %v852
        %v997 = vmul.f32 %v857, %v857
        %v998 = vmul.f32 %v860, %v860
        %v999 = vmul.f32 %v865, %v865
        %v1000 = vmul.f32 %v868, %v868
        %v1001 = vmul.f32 %v873, %v873
        %v1002 = vmul.f32 %v876, %v876
        %v1003 = vmul.f32 %v881, %v881
        %v1004 = vmul.f32 %v884, %v884
        %v1005 = vmul.f32 %v889, %v889
        %v1006 = vmul.f32 %v892, %v892
        %v1007 = vmul.f32 %v897, %v897
        %v1008 = vmul.f32 %v900, %v900
        %v1009 = vsel %vm693, %v977, 0.0
        %v1010 = vsel %vm693, %v978, 0.0
        %v1011 = vadd.f32 %v1009, %v1010
        %v1012 = vsel %vm693, %v979, 0.0
        %v1013 = vadd.f32 %v1011, %v1012
        %v1014 = vsel %vm693, %v980, 0.0
        %v1015 = vadd.f32 %v1013, %v1014
        %v1016 = vsel %vm693, %v981, 0.0
        %v1017 = vadd.f32 %v1015, %v1016
        %v1018 = vsel %vm693, %v982, 0.0
        %v1019 = vadd.f32 %v1017, %v1018
        %v1020 = vsel %vm693, %v983, 0.0
        %v1021 = vadd.f32 %v1019, %v1020
        %v1022 = vsel %vm693, %v984, 0.0
        %v1023 = vadd.f32 %v1021, %v1022
        %v1024 = vsel %vm693, %v985, 0.0
        %v1025 = vadd.f32 %v1023, %v1024
        %v1026 = vsel %vm693, %v986, 0.0
        %v1027 = vadd.f32 %v1025, %v1026
        %v1028 = vsel %vm693, %v987, 0.0
        %v1029 = vadd.f32 %v1027, %v1028
        %v1030 = vsel %vm693, %v988, 0.0
        %v1031 = vadd.f32 %v1029, %v1030
        %v1032 = vsel %vm693, %v989, 0.0
        %v1033 = vadd.f32 %v1031, %v1032
        %v1034 = vsel %vm693, %v990, 0.0
        %v1035 = vadd.f32 %v1033, %v1034
        %v1036 = vsel %vm693, %v991, 0.0
        %v1037 = vadd.f32 %v1035, %v1036
        %v1038 = vsel %vm693, %v992, 0.0
        %v1039 = vadd.f32 %v1037, %v1038
        %v1040 = vsel %vm693, %v993, 0.0
        %v1041 = vadd.f32 %v1039, %v1040
        %v1042 = vsel %vm693, %v994, 0.0
        %v1043 = vadd.f32 %v1041, %v1042
        %v1044 = vsel %vm693, %v995, 0.0
        %v1045 = vadd.f32 %v1043, %v1044
        %v1046 = vsel %vm693, %v996, 0.0
        %v1047 = vadd.f32 %v1045, %v1046
        %v1048 = vsel %vm693, %v997, 0.0
        %v1049 = vadd.f32 %v1047, %v1048
        %v1050 = vsel %vm693, %v998, 0.0
        %v1051 = vadd.f32 %v1049, %v1050
        %v1052 = vsel %vm693, %v999, 0.0
        %v1053 = vadd.f32 %v1051, %v1052
        %v1054 = vsel %vm693, %v1000, 0.0
        %v1055 = vadd.f32 %v1053, %v1054
        %v1056 = vsel %vm693, %v1001, 0.0
        %v1057 = vadd.f32 %v1055, %v1056
        %v1058 = vsel %vm693, %v1002, 0.0
        %v1059 = vadd.f32 %v1057, %v1058
        %v1060 = vsel %vm693, %v1003, 0.0
        %v1061 = vadd.f32 %v1059, %v1060
        %v1062 = vsel %vm693, %v1004, 0.0
        %v1063 = vadd.f32 %v1061, %v1062
        %v1064 = vsel %vm693, %v1005, 0.0
        %v1065 = vadd.f32 %v1063, %v1064
        %v1066 = vsel %vm693, %v1006, 0.0
        %v1067 = vadd.f32 %v1065, %v1066
        %v1068 = vsel %vm693, %v1007, 0.0
        %v1069 = vadd.f32 %v1067, %v1068
        %v1070 = vsel %vm693, %v1008, 0.0
        %v1071 = vadd.f32 %v1069, %v1070
        %v1072 = vrot.slane %v1071, 4
        %v1073 = vadd.f32 %v1071, %v1072
        %v1074 = vrot.slane %v1073, 2
        %v1075 = vadd.f32 %v1073, %v1074
        %v1076 = vrot.slane %v1075, 1
        %v1077 = vadd.f32 %v1075, %v1076
        %v1078 = vadd.f32 %v976, %v1077
        %1079 = vst.msk [vmem:[%s6] sm:$0x1] %vm974, %v1078
        %v1080 = vpack.c.bf16 %v780, %v777
        %v1081 = vpack.c.bf16 %v788, %v785
        %v1082 = vpack.c.bf16 %v796, %v793
        %v1083 = vpack.c.bf16 %v804, %v801
        %v1084 = vpack.c.bf16 %v812, %v809
        %v1085 = vpack.c.bf16 %v820, %v817
        %v1086 = vpack.c.bf16 %v828, %v825
        %v1087 = vpack.c.bf16 %v836, %v833
        %v1088 = vpack.c.bf16 %v844, %v841
        %v1089 = vpack.c.bf16 %v852, %v849
        %v1090 = vpack.c.bf16 %v860, %v857
        %v1091 = vpack.c.bf16 %v868, %v865
        %v1092 = vpack.c.bf16 %v876, %v873
        %v1093 = vpack.c.bf16 %v884, %v881
        %v1094 = vpack.c.bf16 %v892, %v889
        %v1095 = vpack.c.bf16 %v900, %v897
        %v1112 = vunpack.c.l.b16 %v1080
        %v1113 = vunpack.c.h.b16 %v1080
        %v1114 = vunpack.c.l.b16 %v1081
        %v1115 = vunpack.c.h.b16 %v1081
        %v1116 = vunpack.c.l.b16 %v1082
        %v1117 = vunpack.c.h.b16 %v1082
        %v1118 = vunpack.c.l.b16 %v1083
        %v1119 = vunpack.c.h.b16 %v1083
        %v1120 = vunpack.c.l.b16 %v1084
        %v1121 = vunpack.c.h.b16 %v1084
        %v1122 = vunpack.c.l.b16 %v1085
        %v1123 = vunpack.c.h.b16 %v1085
        %v1124 = vunpack.c.l.b16 %v1086
        %v1125 = vunpack.c.h.b16 %v1086
        %v1126 = vunpack.c.l.b16 %v1087
        %v1127 = vunpack.c.h.b16 %v1087
        %v1128 = vunpack.c.l.b16 %v1088
        %v1129 = vunpack.c.h.b16 %v1088
        %v1130 = vunpack.c.l.b16 %v1089
        %v1131 = vunpack.c.h.b16 %v1089
        %v1132 = vunpack.c.l.b16 %v1090
        %v1133 = vunpack.c.h.b16 %v1090
        %v1134 = vunpack.c.l.b16 %v1091
        %v1135 = vunpack.c.h.b16 %v1091
        %v1136 = vunpack.c.l.b16 %v1092
        %v1137 = vunpack.c.h.b16 %v1092
        %v1138 = vunpack.c.l.b16 %v1093
        %v1139 = vunpack.c.h.b16 %v1093
        %v1140 = vunpack.c.l.b16 %v1094
        %v1141 = vunpack.c.h.b16 %v1094
        %v1142 = vunpack.c.l.b16 %v1095
        %v1143 = vunpack.c.h.b16 %v1095
        %v1144 = vpack.c.b16 %v1112, %v1112
        %v1145 = vpack.c.b16 %v1113, %v1113
        %v1146 = vpack.c.b16 %v1114, %v1114
        %v1147 = vpack.c.b16 %v1115, %v1115
        %v1148 = vpack.c.b16 %v1116, %v1116
        %v1149 = vpack.c.b16 %v1117, %v1117
        %v1150 = vpack.c.b16 %v1118, %v1118
        %v1151 = vpack.c.b16 %v1119, %v1119
        %v1152 = vpack.c.b16 %v1120, %v1120
        %v1153 = vpack.c.b16 %v1121, %v1121
        %v1154 = vpack.c.b16 %v1122, %v1122
        %v1155 = vpack.c.b16 %v1123, %v1123
        %v1156 = vpack.c.b16 %v1124, %v1124
        %v1157 = vpack.c.b16 %v1125, %v1125
        %v1158 = vpack.c.b16 %v1126, %v1126
        %v1159 = vpack.c.b16 %v1127, %v1127
        %v1160 = vpack.c.b16 %v1128, %v1128
        %v1161 = vpack.c.b16 %v1129, %v1129
        %v1162 = vpack.c.b16 %v1130, %v1130
        %v1163 = vpack.c.b16 %v1131, %v1131
        %v1164 = vpack.c.b16 %v1132, %v1132
        %v1165 = vpack.c.b16 %v1133, %v1133
        %v1166 = vpack.c.b16 %v1134, %v1134
        %v1167 = vpack.c.b16 %v1135, %v1135
        %v1168 = vpack.c.b16 %v1136, %v1136
        %v1169 = vpack.c.b16 %v1137, %v1137
        %v1170 = vpack.c.b16 %v1138, %v1138
        %v1171 = vpack.c.b16 %v1139, %v1139
        %v1172 = vpack.c.b16 %v1140, %v1140
        %v1173 = vpack.c.b16 %v1141, %v1141
        %v1174 = vpack.c.b16 %v1142, %v1142
        %v1175 = vpack.c.b16 %v1143, %v1143
        %vm1208 = vcmask 519168
        %1209 = vst.msk [vmem:[%s244] sm:$0xf] %vm1208, %v1144
        %1210 = vst.msk [vmem:[%s244 + $0x4] sm:$0xf] %vm1208, %v1145
        %1211 = vst.msk [vmem:[%s244 + $0x8] sm:$0xf] %vm1208, %v1146
        %1212 = vst.msk [vmem:[%s244 + $0xc] sm:$0xf] %vm1208, %v1147
        %1213 = vst.msk [vmem:[%s244 + $0x10] sm:$0xf] %vm1208, %v1148
        %1214 = vst.msk [vmem:[%s244 + $0x14] sm:$0xf] %vm1208, %v1149
        %1215 = vst.msk [vmem:[%s244 + $0x18] sm:$0xf] %vm1208, %v1150
        %1216 = vst.msk [vmem:[%s244 + $0x1c] sm:$0xf] %vm1208, %v1151
        %1217 = vst.msk [vmem:[%s244 + $0x20] sm:$0xf] %vm1208, %v1152
        %1218 = vst.msk [vmem:[%s244 + $0x24] sm:$0xf] %vm1208, %v1153
        %1219 = vst.msk [vmem:[%s244 + $0x28] sm:$0xf] %vm1208, %v1154
        %1220 = vst.msk [vmem:[%s244 + $0x2c] sm:$0xf] %vm1208, %v1155
        %1221 = vst.msk [vmem:[%s244 + $0x30] sm:$0xf] %vm1208, %v1156
        %1222 = vst.msk [vmem:[%s244 + $0x34] sm:$0xf] %vm1208, %v1157
        %1223 = vst.msk [vmem:[%s244 + $0x38] sm:$0xf] %vm1208, %v1158
        %1224 = vst.msk [vmem:[%s244 + $0x3c] sm:$0xf] %vm1208, %v1159
        %1225 = vst.msk [vmem:[%s244 + $0x40] sm:$0xf] %vm1208, %v1160
        %1226 = vst.msk [vmem:[%s244 + $0x44] sm:$0xf] %vm1208, %v1161
        %1227 = vst.msk [vmem:[%s244 + $0x48] sm:$0xf] %vm1208, %v1162
        %1228 = vst.msk [vmem:[%s244 + $0x4c] sm:$0xf] %vm1208, %v1163
        %1229 = vst.msk [vmem:[%s244 + $0x50] sm:$0xf] %vm1208, %v1164
        %1230 = vst.msk [vmem:[%s244 + $0x54] sm:$0xf] %vm1208, %v1165
        %1231 = vst.msk [vmem:[%s244 + $0x58] sm:$0xf] %vm1208, %v1166
        %1232 = vst.msk [vmem:[%s244 + $0x5c] sm:$0xf] %vm1208, %v1167
        %1233 = vst.msk [vmem:[%s244 + $0x60] sm:$0xf] %vm1208, %v1168
        %1234 = vst.msk [vmem:[%s244 + $0x64] sm:$0xf] %vm1208, %v1169
        %1235 = vst.msk [vmem:[%s244 + $0x68] sm:$0xf] %vm1208, %v1170
        %1236 = vst.msk [vmem:[%s244 + $0x6c] sm:$0xf] %vm1208, %v1171
        %1237 = vst.msk [vmem:[%s244 + $0x70] sm:$0xf] %vm1208, %v1172
        %1238 = vst.msk [vmem:[%s244 + $0x74] sm:$0xf] %vm1208, %v1173
        %1239 = vst.msk [vmem:[%s244 + $0x78] sm:$0xf] %vm1208, %v1174
        %1240 = vst.msk [vmem:[%s244 + $0x7c] sm:$0xf] %vm1208, %v1175
        %s1241 = sand.u32 %s115, 1
        %s1242 = sand.u32 %s115, 1
        %s1243 = smul.addr %s1242, 128
        %s1244 = scalar_lea.vmem [#allocation2], %s1243
        // Predicated region
        $region41: #{innernet_forward.5} parent=35 // pred_check
          %p1245 = pneg %p125
        $region42: #{innernet_forward.5} parent=35 // pred_check_branch
          %1247 = sbr.rel (%p1245) target = $region44
        $region43: #{innernet_forward.5} parent=35 // pred_region
          %s1248 = smul.u32 32, %s18
          %s1249 = ssub.s32 125, %s1248
          %p1250 = scmp.lt.s32.totalorder %s1249, 32
          %s1251 = scalar_select %p1250, %s1249, 32
          %s1252 = smul.u32 64, %s1251
          %p1253 = scmp.ne.s32.totalorder 0, %s1252
          %s1254 = smul.addr %s1248, 4
          %s1255 = scalar_lea.vmem %s4, %s1254
          // Predicated region
          $region45: #{innernet_forward.5} parent=43 // pred_check
            %p1256 = pneg %p1253
          $region46: #{innernet_forward.5} parent=43 // pred_check_branch
            %1258 = sbr.rel (%p1256) target = $region48
          $region47: #{innernet_forward.5} parent=43 // pred_region
            // Predicated region
            $region49: #{innernet_forward.5} parent=47 // pred_check
              _
            $region50: #{innernet_forward.5} parent=47 // pred_check_branch
              %1260 = sbr.rel target = $region52
            $region51: #{innernet_forward.5} parent=47 // pred_region
              // Predicated region
              $region71: #{innernet_forward.5} parent=51 // pred_check
                _
              $region72: #{innernet_forward.5} parent=51 // pred_check_branch
                %1371 = sbr.rel (0) target = $region74
              $region73: #{innernet_forward.5} parent=51 // pred_region
                %s1373 = sshrl.u32 %s1251, 5
                // While loop
                $region75: #{innernet_forward.5} parent=73 // loop_pre_header
                  _
                $region76: #{innernet_forward.5} parent=73 // loop_header
                  %s1375 = sphi 0, %s1377
                  %p1376 = scmp.ge.s32.totalorder %s1375, %s1373
                  %s1380 = sphi 0, %s1449
                  %s1381 = sphi %s1244, %s1452
                  %s1382 = sphi %s1255, %s1453
                $region77: #{innernet_forward.5} parent=73 // loop_header_branch
                  %1379 = sbr.rel (%p1376) target = $region81
                $region78: #{innernet_forward.5} parent=73 // loop_body
                  %v1383 = vld [vmem:[%s1381] sm:$0xf]
                  %1384 = vst [vmem:[%s1382] sm:$0xf] %v1383
                  %v1385 = vld [vmem:[%s1381 + $0x4] sm:$0xf]
                  %1386 = vst [vmem:[%s1382 + $0x4] sm:$0xf] %v1385
                  %v1387 = vld [vmem:[%s1381 + $0x8] sm:$0xf]
                  %1388 = vst [vmem:[%s1382 + $0x8] sm:$0xf] %v1387
                  %v1389 = vld [vmem:[%s1381 + $0xc] sm:$0xf]
                  %1390 = vst [vmem:[%s1382 + $0xc] sm:$0xf] %v1389
                  %v1391 = vld [vmem:[%s1381 + $0x10] sm:$0xf]
                  %1392 = vst [vmem:[%s1382 + $0x10] sm:$0xf] %v1391
                  %v1393 = vld [vmem:[%s1381 + $0x14] sm:$0xf]
                  %1394 = vst [vmem:[%s1382 + $0x14] sm:$0xf] %v1393
                  %v1395 = vld [vmem:[%s1381 + $0x18] sm:$0xf]
                  %1396 = vst [vmem:[%s1382 + $0x18] sm:$0xf] %v1395
                  %v1397 = vld [vmem:[%s1381 + $0x1c] sm:$0xf]
                  %1398 = vst [vmem:[%s1382 + $0x1c] sm:$0xf] %v1397
                  %v1399 = vld [vmem:[%s1381 + $0x20] sm:$0xf]
                  %1400 = vst [vmem:[%s1382 + $0x20] sm:$0xf] %v1399
                  %v1401 = vld [vmem:[%s1381 + $0x24] sm:$0xf]
                  %1402 = vst [vmem:[%s1382 + $0x24] sm:$0xf] %v1401
                  %v1403 = vld [vmem:[%s1381 + $0x28] sm:$0xf]
                  %1404 = vst [vmem:[%s1382 + $0x28] sm:$0xf] %v1403
                  %v1405 = vld [vmem:[%s1381 + $0x2c] sm:$0xf]
                  %1406 = vst [vmem:[%s1382 + $0x2c] sm:$0xf] %v1405
                  %v1407 = vld [vmem:[%s1381 + $0x30] sm:$0xf]
                  %1408 = vst [vmem:[%s1382 + $0x30] sm:$0xf] %v1407
                  %v1409 = vld [vmem:[%s1381 + $0x34] sm:$0xf]
                  %1410 = vst [vmem:[%s1382 + $0x34] sm:$0xf] %v1409
                  %v1411 = vld [vmem:[%s1381 + $0x38] sm:$0xf]
                  %1412 = vst [vmem:[%s1382 + $0x38] sm:$0xf] %v1411
                  %v1413 = vld [vmem:[%s1381 + $0x3c] sm:$0xf]
                  %1414 = vst [vmem:[%s1382 + $0x3c] sm:$0xf] %v1413
                  %v1415 = vld [vmem:[%s1381 + $0x40] sm:$0xf]
                  %1416 = vst [vmem:[%s1382 + $0x40] sm:$0xf] %v1415
                  %v1417 = vld [vmem:[%s1381 + $0x44] sm:$0xf]
                  %1418 = vst [vmem:[%s1382 + $0x44] sm:$0xf] %v1417
                  %v1419 = vld [vmem:[%s1381 + $0x48] sm:$0xf]
                  %1420 = vst [vmem:[%s1382 + $0x48] sm:$0xf] %v1419
                  %v1421 = vld [vmem:[%s1381 + $0x4c] sm:$0xf]
                  %1422 = vst [vmem:[%s1382 + $0x4c] sm:$0xf] %v1421
                  %v1423 = vld [vmem:[%s1381 + $0x50] sm:$0xf]
                  %1424 = vst [vmem:[%s1382 + $0x50] sm:$0xf] %v1423
                  %v1425 = vld [vmem:[%s1381 + $0x54] sm:$0xf]
                  %1426 = vst [vmem:[%s1382 + $0x54] sm:$0xf] %v1425
                  %v1427 = vld [vmem:[%s1381 + $0x58] sm:$0xf]
                  %1428 = vst [vmem:[%s1382 + $0x58] sm:$0xf] %v1427
                  %v1429 = vld [vmem:[%s1381 + $0x5c] sm:$0xf]
                  %1430 = vst [vmem:[%s1382 + $0x5c] sm:$0xf] %v1429
                  %v1431 = vld [vmem:[%s1381 + $0x60] sm:$0xf]
                  %1432 = vst [vmem:[%s1382 + $0x60] sm:$0xf] %v1431
                  %v1433 = vld [vmem:[%s1381 + $0x64] sm:$0xf]
                  %1434 = vst [vmem:[%s1382 + $0x64] sm:$0xf] %v1433
                  %v1435 = vld [vmem:[%s1381 + $0x68] sm:$0xf]
                  %1436 = vst [vmem:[%s1382 + $0x68] sm:$0xf] %v1435
                  %v1437 = vld [vmem:[%s1381 + $0x6c] sm:$0xf]
                  %1438 = vst [vmem:[%s1382 + $0x6c] sm:$0xf] %v1437
                  %v1439 = vld [vmem:[%s1381 + $0x70] sm:$0xf]
                  %1440 = vst [vmem:[%s1382 + $0x70] sm:$0xf] %v1439
                  %v1441 = vld [vmem:[%s1381 + $0x74] sm:$0xf]
                  %1442 = vst [vmem:[%s1382 + $0x74] sm:$0xf] %v1441
                  %v1443 = vld [vmem:[%s1381 + $0x78] sm:$0xf]
                  %1444 = vst [vmem:[%s1382 + $0x78] sm:$0xf] %v1443
                  %v1445 = vld [vmem:[%s1381 + $0x7c] sm:$0xf]
                  %1446 = vst [vmem:[%s1382 + $0x7c] sm:$0xf] %v1445
                  %s1447 = sadd.s32 1, %s1380
                  %p1448 = scmp.ge.s32.totalorder %s1447, %s1373
                  %s1449 = scalar_select %p1448, 0, %s1447
                  %s1450 = smul.u32 %s1449, 128
                  %s1451 = smul.u32 %s1449, 128
                  %s1452 = scalar_lea.vmem %s1244, %s1450 [#allocation2]
                  %s1453 = scalar_lea.vmem %s1255, %s1451
                $region79: #{innernet_forward.5} parent=73 // loop_footer
                  %s1377 = sadd.s32 %s1375, 1
                $region80: #{innernet_forward.5} parent=73 // loop_footer_branch
                  %1374 = sbr.rel target = $region76
                $region81: #{innernet_forward.5} parent=73 // loop_exit
                  _
                %s1454 = sshrl.u32 %s1251, 5
                %s1455 = sand.u32 %s1251, 31
                %s1456 = smul.u32 %s1454, 32
                %s1457 = smul.u32 4, %s1456
                %s1458 = scalar_lea.vmem %s1244, %s1457 [#allocation2]
                %s1459 = smul.u32 4, %s1456
                %s1460 = scalar_lea.vmem %s1255, %s1459
                // While loop
                $region82: #{innernet_forward.5} parent=73 // loop_pre_header
                  _
                $region83: #{innernet_forward.5} parent=73 // loop_header
                  %s1462 = sphi 0, %s1464
                  %p1463 = scmp.ge.s32.totalorder %s1462, %s1455
                  %s1467 = sphi 0, %s1474
                  %s1468 = sphi %s1458, %s1477
                  %s1469 = sphi %s1460, %s1478
                $region84: #{innernet_forward.5} parent=73 // loop_header_branch
                  %1466 = sbr.rel (%p1463) target = $region88
                $region85: #{innernet_forward.5} parent=73 // loop_body
                  %v1470 = vld [vmem:[%s1468] sm:$0xf]
                  %1471 = vst [vmem:[%s1469] sm:$0xf] %v1470
                  %s1472 = sadd.s32 1, %s1467
                  %p1473 = scmp.ge.s32.totalorder %s1472, %s1455
                  %s1474 = scalar_select %p1473, 0, %s1472
                  %s1475 = smul.u32 %s1474, 4
                  %s1476 = smul.u32 %s1474, 4
                  %s1477 = scalar_lea.vmem %s1458, %s1475 [#allocation2]
                  %s1478 = scalar_lea.vmem %s1460, %s1476
                $region86: #{innernet_forward.5} parent=73 // loop_footer
                  %s1464 = sadd.s32 %s1462, 1
                $region87: #{innernet_forward.5} parent=73 // loop_footer_branch
                  %1461 = sbr.rel target = $region83
                $region88: #{innernet_forward.5} parent=73 // loop_exit
                  _
              $region74: #{innernet_forward.5} parent=51 // pred_fallthru
                _
            $region52: #{innernet_forward.5} parent=47 // pred_fallthru
              _
            // Predicated region
            $region53: #{innernet_forward.5} parent=47 // pred_check
              _
            $region54: #{innernet_forward.5} parent=47 // pred_check_branch
              %1262 = sbr.rel (0) target = $region56
            $region55: #{innernet_forward.5} parent=47 // pred_region
              %s1264 = sshrl.u32 %s1251, 5
              // While loop
              $region57: #{innernet_forward.5} parent=55 // loop_pre_header
                _
              $region58: #{innernet_forward.5} parent=55 // loop_header
                %s1266 = sphi 0, %s1268
                %p1267 = scmp.ge.s32.totalorder %s1266, %s1264
                %s1271 = sphi 0, %s1340
                %s1272 = sphi %s1244, %s1343
                %s1273 = sphi %s1255, %s1344
              $region59: #{innernet_forward.5} parent=55 // loop_header_branch
                %1270 = sbr.rel (%p1267) target = $region63
              $region60: #{innernet_forward.5} parent=55 // loop_body
                %v1274 = vld [vmem:[%s1272] sm:$0xf]
                %1275 = vst [vmem:[%s1273] sm:$0xf] %v1274
                %v1276 = vld [vmem:[%s1272 + $0x4] sm:$0xf]
                %1277 = vst [vmem:[%s1273 + $0x4] sm:$0xf] %v1276
                %v1278 = vld [vmem:[%s1272 + $0x8] sm:$0xf]
                %1279 = vst [vmem:[%s1273 + $0x8] sm:$0xf] %v1278
                %v1280 = vld [vmem:[%s1272 + $0xc] sm:$0xf]
                %1281 = vst [vmem:[%s1273 + $0xc] sm:$0xf] %v1280
                %v1282 = vld [vmem:[%s1272 + $0x10] sm:$0xf]
                %1283 = vst [vmem:[%s1273 + $0x10] sm:$0xf] %v1282
                %v1284 = vld [vmem:[%s1272 + $0x14] sm:$0xf]
                %1285 = vst [vmem:[%s1273 + $0x14] sm:$0xf] %v1284
                %v1286 = vld [vmem:[%s1272 + $0x18] sm:$0xf]
                %1287 = vst [vmem:[%s1273 + $0x18] sm:$0xf] %v1286
                %v1288 = vld [vmem:[%s1272 + $0x1c] sm:$0xf]
                %1289 = vst [vmem:[%s1273 + $0x1c] sm:$0xf] %v1288
                %v1290 = vld [vmem:[%s1272 + $0x20] sm:$0xf]
                %1291 = vst [vmem:[%s1273 + $0x20] sm:$0xf] %v1290
                %v1292 = vld [vmem:[%s1272 + $0x24] sm:$0xf]
                %1293 = vst [vmem:[%s1273 + $0x24] sm:$0xf] %v1292
                %v1294 = vld [vmem:[%s1272 + $0x28] sm:$0xf]
                %1295 = vst [vmem:[%s1273 + $0x28] sm:$0xf] %v1294
                %v1296 = vld [vmem:[%s1272 + $0x2c] sm:$0xf]
                %1297 = vst [vmem:[%s1273 + $0x2c] sm:$0xf] %v1296
                %v1298 = vld [vmem:[%s1272 + $0x30] sm:$0xf]
                %1299 = vst [vmem:[%s1273 + $0x30] sm:$0xf] %v1298
                %v1300 = vld [vmem:[%s1272 + $0x34] sm:$0xf]
                %1301 = vst [vmem:[%s1273 + $0x34] sm:$0xf] %v1300
                %v1302 = vld [vmem:[%s1272 + $0x38] sm:$0xf]
                %1303 = vst [vmem:[%s1273 + $0x38] sm:$0xf] %v1302
                %v1304 = vld [vmem:[%s1272 + $0x3c] sm:$0xf]
                %1305 = vst [vmem:[%s1273 + $0x3c] sm:$0xf] %v1304
                %v1306 = vld [vmem:[%s1272 + $0x40] sm:$0xf]
                %1307 = vst [vmem:[%s1273 + $0x40] sm:$0xf] %v1306
                %v1308 = vld [vmem:[%s1272 + $0x44] sm:$0xf]
                %1309 = vst [vmem:[%s1273 + $0x44] sm:$0xf] %v1308
                %v1310 = vld [vmem:[%s1272 + $0x48] sm:$0xf]
                %1311 = vst [vmem:[%s1273 + $0x48] sm:$0xf] %v1310
                %v1312 = vld [vmem:[%s1272 + $0x4c] sm:$0xf]
                %1313 = vst [vmem:[%s1273 + $0x4c] sm:$0xf] %v1312
                %v1314 = vld [vmem:[%s1272 + $0x50] sm:$0xf]
                %1315 = vst [vmem:[%s1273 + $0x50] sm:$0xf] %v1314
                %v1316 = vld [vmem:[%s1272 + $0x54] sm:$0xf]
                %1317 = vst [vmem:[%s1273 + $0x54] sm:$0xf] %v1316
                %v1318 = vld [vmem:[%s1272 + $0x58] sm:$0xf]
                %1319 = vst [vmem:[%s1273 + $0x58] sm:$0xf] %v1318
                %v1320 = vld [vmem:[%s1272 + $0x5c] sm:$0xf]
                %1321 = vst [vmem:[%s1273 + $0x5c] sm:$0xf] %v1320
                %v1322 = vld [vmem:[%s1272 + $0x60] sm:$0xf]
                %1323 = vst [vmem:[%s1273 + $0x60] sm:$0xf] %v1322
                %v1324 = vld [vmem:[%s1272 + $0x64] sm:$0xf]
                %1325 = vst [vmem:[%s1273 + $0x64] sm:$0xf] %v1324
                %v1326 = vld [vmem:[%s1272 + $0x68] sm:$0xf]
                %1327 = vst [vmem:[%s1273 + $0x68] sm:$0xf] %v1326
                %v1328 = vld [vmem:[%s1272 + $0x6c] sm:$0xf]
                %1329 = vst [vmem:[%s1273 + $0x6c] sm:$0xf] %v1328
                %v1330 = vld [vmem:[%s1272 + $0x70] sm:$0xf]
                %1331 = vst [vmem:[%s1273 + $0x70] sm:$0xf] %v1330
                %v1332 = vld [vmem:[%s1272 + $0x74] sm:$0xf]
                %1333 = vst [vmem:[%s1273 + $0x74] sm:$0xf] %v1332
                %v1334 = vld [vmem:[%s1272 + $0x78] sm:$0xf]
                %1335 = vst [vmem:[%s1273 + $0x78] sm:$0xf] %v1334
                %v1336 = vld [vmem:[%s1272 + $0x7c] sm:$0xf]
                %1337 = vst [vmem:[%s1273 + $0x7c] sm:$0xf] %v1336
                %s1338 = sadd.s32 1, %s1271
                %p1339 = scmp.ge.s32.totalorder %s1338, %s1264
                %s1340 = scalar_select %p1339, 0, %s1338
                %s1341 = smul.u32 %s1340, 128
                %s1342 = smul.u32 %s1340, 128
                %s1343 = scalar_lea.vmem %s1244, %s1341 [#allocation2]
                %s1344 = scalar_lea.vmem %s1255, %s1342
              $region61: #{innernet_forward.5} parent=55 // loop_footer
                %s1268 = sadd.s32 %s1266, 1
              $region62: #{innernet_forward.5} parent=55 // loop_footer_branch
                %1265 = sbr.rel target = $region58
              $region63: #{innernet_forward.5} parent=55 // loop_exit
                _
              %s1345 = sshrl.u32 %s1251, 5
              %s1346 = sand.u32 %s1251, 31
              %s1347 = smul.u32 %s1345, 32
              %s1348 = smul.u32 4, %s1347
              %s1349 = scalar_lea.vmem %s1244, %s1348 [#allocation2]
              %s1350 = smul.u32 4, %s1347
              %s1351 = scalar_lea.vmem %s1255, %s1350
              // While loop
              $region64: #{innernet_forward.5} parent=55 // loop_pre_header
                _
              $region65: #{innernet_forward.5} parent=55 // loop_header
                %s1353 = sphi 0, %s1355
                %p1354 = scmp.ge.s32.totalorder %s1353, %s1346
                %s1358 = sphi 0, %s1365
                %s1359 = sphi %s1349, %s1368
                %s1360 = sphi %s1351, %s1369
              $region66: #{innernet_forward.5} parent=55 // loop_header_branch
                %1357 = sbr.rel (%p1354) target = $region70
              $region67: #{innernet_forward.5} parent=55 // loop_body
                %v1361 = vld [vmem:[%s1359] sm:$0xf]
                %1362 = vst [vmem:[%s1360] sm:$0xf] %v1361
                %s1363 = sadd.s32 1, %s1358
                %p1364 = scmp.ge.s32.totalorder %s1363, %s1346
                %s1365 = scalar_select %p1364, 0, %s1363
                %s1366 = smul.u32 %s1365, 4
                %s1367 = smul.u32 %s1365, 4
                %s1368 = scalar_lea.vmem %s1349, %s1366 [#allocation2]
                %s1369 = scalar_lea.vmem %s1351, %s1367
              $region68: #{innernet_forward.5} parent=55 // loop_footer
                %s1355 = sadd.s32 %s1353, 1
              $region69: #{innernet_forward.5} parent=55 // loop_footer_branch
                %1352 = sbr.rel target = $region65
              $region70: #{innernet_forward.5} parent=55 // loop_exit
                _
            $region56: #{innernet_forward.5} parent=47 // pred_fallthru
              _
          $region48: #{innernet_forward.5} parent=43 // pred_fallthru
            _
          %1479 = vnop
        $region44: #{innernet_forward.5} parent=35 // pred_fallthru
          _
        // Predicated region
        $region89: #{innernet_forward.5} parent=35 // pred_check
          %p1480 = pneg %p146
        $region90: #{innernet_forward.5} parent=35 // pred_check_branch
          %1482 = sbr.rel (%p1480) target = $region92
        $region91: #{innernet_forward.5} parent=35 // pred_region
          _
        $region92: #{innernet_forward.5} parent=35 // pred_fallthru
          _
        // Predicated region
        $region93: #{innernet_forward.5} parent=35 // pred_check
          %p1483 = pneg %p167
        $region94: #{innernet_forward.5} parent=35 // pred_check_branch
          %1485 = sbr.rel (%p1483) target = $region96
        $region95: #{innernet_forward.5} parent=35 // pred_region
          _
        $region96: #{innernet_forward.5} parent=35 // pred_fallthru
          _
        // Predicated region
        $region97: #{innernet_forward.5} parent=35 // pred_check
          %p1486 = pneg %p146
        $region98: #{innernet_forward.5} parent=35 // pred_check_branch
          %1488 = sbr.rel (%p1486) target = $region100
        $region99: #{innernet_forward.5} parent=35 // pred_region
          _
        $region100: #{innernet_forward.5} parent=35 // pred_fallthru
          _
        // Predicated region
        $region101: #{innernet_forward.5} parent=35 // pred_check
          %p1489 = pneg %p167
        $region102: #{innernet_forward.5} parent=35 // pred_check_branch
          %1491 = sbr.rel (%p1489) target = $region104
        $region103: #{innernet_forward.5} parent=35 // pred_region
          _
        $region104: #{innernet_forward.5} parent=35 // pred_fallthru
          _
      $region36: #{innernet_forward.5} parent=5 // pred_fallthru
        _
      %p1492 = scmp.le.s32.totalorder 2, %s13
      // Predicated region
      $region105: #{innernet_forward.5} parent=5 // pred_check
        %p1493 = pneg %p1492
      $region106: #{innernet_forward.5} parent=5 // pred_check_branch
        %1495 = sbr.rel (%p1493) target = $region108
      $region107: #{innernet_forward.5} parent=5 // pred_region
        %s1496 = ssub.s32 %s13, 2
        // Predicated region
        $region109: #{innernet_forward.5} parent=107 // pred_check
          %p1497 = pneg %p131
        $region110: #{innernet_forward.5} parent=107 // pred_check_branch
          %1499 = sbr.rel (%p1497) target = $region112
        $region111: #{innernet_forward.5} parent=107 // pred_region
          %s1500 = sand.u32 %s116, 1
          %s1501 = sand.u32 %s116, 1
          %s1502 = smul.addr %s1501, 128
          %s1503 = scalar_lea.vmem [#allocation2], %s1502
        $region112: #{innernet_forward.5} parent=107 // pred_fallthru
          _
      $region108: #{innernet_forward.5} parent=5 // pred_fallthru
        _
    $region6: #{innernet_forward.5} parent=1 // loop_footer
      %s17 = sadd.s32 1, %s13
    $region7: #{innernet_forward.5} parent=1 // loop_footer_branch
      %12 = sbr.rel target = $region3
    $region8: #{innernet_forward.5} parent=1 // loop_exit
      _

</llo_original>
